<compile_context>
chip_gen: v6e
topology: v6e:2x2x1
jax: 0.10.0
libtpu: 0.0.40
codegen_flags: <defaults>
</compile_context>

<pallas_src>
import functools

import numpy as np

import jax
import jax.numpy as jnp
from jax.experimental import pallas as pl
from jax.experimental.pallas import tpu as pltpu

LANE = 128


def _round_up(x, m):
    return (x + m - 1) // m * m


# ---------------------------------------------------------------------------
# Wrapper-side layout helpers (plain JAX / numpy glue, zero data expansion)
# ---------------------------------------------------------------------------
def _space_to_depth_flat(x):
    """(N,H,W,C) -> (N, ceil(H/2)*ceil(W/2), 4*C) with
    z[n, r*Wh + c, ph*2C + pw*C + ci] == x[n, 2r+ph, 2c+pw, ci].
    Turns the stride-2 3x3 conv into four stride-1 taps (no strided slices
    and no 9x im2col expansion)."""
    N, H, W, C = x.shape
    He, We = _round_up(H, 2), _round_up(W, 2)
    xp = jnp.pad(x, ((0, 0), (0, He - H), (0, We - W), (0, 0)))
    Hh, Wh = He // 2, We // 2
    z = xp.reshape(N, Hh, 2, Wh, 2, C).transpose(0, 1, 3, 2, 4, 5)
    return z.reshape(N, Hh * Wh, 4 * C), Wh


def _interior_mask(OH, OW):
    """f32 (L, 1) mask over the kernel's computed flat range: 1 on true
    spatial positions, 0 on the zero border of the (OH+2)x(OW+2) grid."""
    OWp = OW + 2
    Pb = (OH + 2) * OWp
    s0 = OW + 3
    L = Pb - 2 * s0
    idx = np.arange(s0, s0 + L)
    row, col = idx // OWp, idx % OWp
    m = ((row >= 1) & (row <= OH) & (col >= 1) & (col <= OW)).astype(np.float32)
    return jnp.asarray(m).reshape(L, 1)


def _pack_main_weight(w, cin_p, cout_p):
    """(3,3,Cin,Cout) -> (4, 4*cin_p, cout_p) grouped-tap weights matching the
    space-to-depth channel layout (tap = dh*2+dw, channel = ph*2Cp+pw*Cp+ci)."""
    KH, KW, Cin, Cout = w.shape
    wq = jnp.zeros((2, 2, 2, 2, cin_p, cout_p), jnp.float32)
    for dh in range(2):
        for dw in range(2):
            for ph in range(2):
                for pw in range(2):
                    kh, kw = 2 * dh + ph, 2 * dw + pw
                    if kh < KH and kw < KW:
                        wq = wq.at[dh, dw, ph, pw, :Cin, :Cout].set(w[kh, kw])
    return wq.reshape(4, 4 * cin_p, cout_p)


def _pack_conv1_weight(w, c_p):
    """(3,3,C,C) -> (9, c_p, c_p), tap = kh*3+kw, zero-padded channels."""
    KH, KW, C, _ = w.shape
    wp = jnp.zeros((KH * KW, c_p, c_p), jnp.float32)
    for kh in range(KH):
        for kw in range(KW):
            wp = wp.at[kh * KW + kw, :C, :C].set(w[kh, kw])
    return wp


# ---------------------------------------------------------------------------
# Fused per-layer kernel: stride-2 conv + ReLU + full BasicBlock
# ---------------------------------------------------------------------------
def _make_layer_kernel(*, Wh, OH, OW, OWp, s0, L, Lm):
    bf16, f32 = jnp.bfloat16, jnp.float32

    def kernel(z_ref, wm_ref, w1_ref, wsc_ref, scale_ref, shift_ref, mask_ref,
               o_ref, ypad_ref, tpad_ref):
        coutp = wsc_ref.shape[-1]

        # --- stage 1: 3x3 / stride-2 "main" conv + ReLU --------------------
        # Space-to-depth input => four stride-1 taps, each a lane-dense
        # (Lm, 4*Cin_p) @ (4*Cin_p, Cout_p) bf16 MXU matmul with f32 accum.
        acc = jnp.zeros((Lm, coutp), f32)
        for dh in range(2):
            for dw in range(2):
                d = dh * Wh + dw
                acc = acc + jnp.dot(z_ref[d:d + Lm, :].astype(bf16),
                                    wm_ref[dh * 2 + dw],
                                    preferred_element_type=f32)
        y = jnp.maximum(acc, 0.0)

        # Scatter valid rows of y into a zero-bordered flattened (OH+2)*(OW+2)
        # scratch; the zero border realises the BasicBlock's padding=1.
        ypad_ref[...] = jnp.zeros(ypad_ref.shape, ypad_ref.dtype)
        for oh in range(OH):
            dst = (oh + 1) * OWp + 1
            ypad_ref[dst:dst + OW, :] = y[oh * Wh:oh * Wh + OW, :]

        scale = scale_ref[...]
        shift = shift_ref[...]
        mask = mask_ref[...]

        # --- stage 2: BasicBlock (conv1/bn1 applied twice + 1x1 shortcut) ---
        acc1 = jnp.zeros((L, coutp), f32)
        for kh in range(3):
            for kw in range(3):
                d = (kh - 1) * OWp + (kw - 1)
                acc1 = acc1 + jnp.dot(ypad_ref[s0 + d:s0 + d + L, :].astype(bf16),
                                      w1_ref[kh * 3 + kw],
                                      preferred_element_type=f32)
        t = jnp.maximum(acc1 * scale + shift, 0.0) * mask      # f32 epilogue
        tpad_ref[...] = jnp.zeros(tpad_ref.shape, tpad_ref.dtype)
        tpad_ref[s0:s0 + L, :] = t

        acc2 = jnp.zeros((L, coutp), f32)
        for kh in range(3):
            for kw in range(3):
                d = (kh - 1) * OWp + (kw - 1)
                acc2 = acc2 + jnp.dot(tpad_ref[s0 + d:s0 + d + L, :].astype(bf16),
                                      w1_ref[kh * 3 + kw],
                                      preferred_element_type=f32)
        u = acc2 * scale + shift
        sc = jnp.dot(ypad_ref[s0:s0 + L, :].astype(bf16), wsc_ref[...],
                     preferred_element_type=f32)
        out = jnp.maximum(u + sc, 0.0) * mask

        o_ref[...] = jnp.zeros(o_ref.shape, o_ref.dtype)
        o_ref[s0:s0 + L, :] = out.astype(o_ref.dtype)

    return kernel


def fused_layer(z, Wh, OH, OW, layer):
    """z: (N, Hh*Wh, 4*Cin_p) f32 space-to-depth input.  Returns the layer
    output in zero-bordered padded-flat form (N, (OH+2)*(OW+2), Cout_p) f32."""
    N, Q, Cz = z.shape
    coutp = layer["wm_p"].shape[-1]
    OWp = OW + 2
    Pb = (OH + 2) * OWp
    s0 = OW + 3
    L = Pb - 2 * s0
    Lm = (OH - 1) * Wh + OW
    mask = _interior_mask(OH, OW)

    kernel = _make_layer_kernel(Wh=Wh, OH=OH, OW=OW, OWp=OWp,
                                s0=s0, L=L, Lm=Lm)
    return pl.pallas_call(
        kernel,
        out_shape=jax.ShapeDtypeStruct((N, Pb, coutp), jnp.float32),
        grid=(N,),
        in_specs=[
            pl.BlockSpec((None, Q, Cz), lambda n: (n, 0, 0)),       # per-sample
            pl.BlockSpec(layer["wm_p"].shape, lambda n: (0, 0, 0)),  # resident
            pl.BlockSpec(layer["w1_p"].shape, lambda n: (0, 0, 0)),
            pl.BlockSpec(layer["wsc_p"].shape, lambda n: (0, 0)),
            pl.BlockSpec(layer["scale_p"].shape, lambda n: (0, 0)),
            pl.BlockSpec(layer["shift_p"].shape, lambda n: (0, 0)),
            pl.BlockSpec(mask.shape, lambda n: (0, 0)),
        ],
        out_specs=pl.BlockSpec((None, Pb, coutp), lambda n: (n, 0, 0)),
        scratch_shapes=[pltpu.VMEM((Pb, coutp), jnp.float32),
                        pltpu.VMEM((Pb, coutp), jnp.float32)],
        compiler_params=pltpu.CompilerParams(
            dimension_semantics=("parallel",),          # megacore over batch
            vmem_limit_bytes=48 * 1024 * 1024),          # headroom on v7x 64MiB
    )(z, layer["wm_p"], layer["w1_p"], layer["wsc_p"],
      layer["scale_p"], layer["shift_p"], mask)


# ---------------------------------------------------------------------------
# Fused head kernel: global avg pool + linear_label * (1/||W||) + linear_closs
# ---------------------------------------------------------------------------
def _head_kernel(a_ref, wl_ref, wc_ref, invn_ref, closs_ref, label_ref, *,
                 inv_count):
    feat = jnp.sum(a_ref[...].astype(jnp.float32), axis=0,
                   keepdims=True) * inv_count            # (1, Cp) avg-pool, f32
    featb = feat.astype(jnp.bfloat16)
    label = jnp.dot(featb, wl_ref[...], preferred_element_type=jnp.float32)
    label_ref[...] = (label * invn_ref[...]).astype(label_ref.dtype)
    closs = jnp.dot(featb, wc_ref[...], preferred_element_type=jnp.float32)
    closs_ref[...] = jnp.maximum(closs, 0.0).astype(closs_ref.dtype)


def head_pallas(feat_in, wl_p, wc_p, inv_norm):
    N, S, Cp = feat_in.shape
    nlp = wl_p.shape[1]
    nfp = wc_p.shape[1]
    kernel = functools.partial(_head_kernel, inv_count=1.0 / S)
    closs, label = pl.pallas_call(
        kernel,
        out_shape=(jax.ShapeDtypeStruct((N, 1, nfp), jnp.float32),
                   jax.ShapeDtypeStruct((N, 1, nlp), jnp.float32)),
        grid=(N,),
        in_specs=[pl.BlockSpec((None, S, Cp), lambda n: (n, 0, 0)),
                  pl.BlockSpec(wl_p.shape, lambda n: (0, 0)),
                  pl.BlockSpec(wc_p.shape, lambda n: (0, 0)),
                  pl.BlockSpec(inv_norm.shape, lambda n: (0, 0))],
        out_specs=(pl.BlockSpec((None, 1, nfp), lambda n: (n, 0, 0)),
                   pl.BlockSpec((None, 1, nlp), lambda n: (n, 0, 0))),
        compiler_params=pltpu.CompilerParams(
            dimension_semantics=("parallel",)),
    )(feat_in, wl_p, wc_p, inv_norm)
    return closs[:, 0, :], label[:, 0, :]


# ---------------------------------------------------------------------------
# Network forward (matches the PyTorch module structure)
# ---------------------------------------------------------------------------
def network_forward(x_nchw, params):
    x = jnp.transpose(x_nchw, (0, 2, 3, 1)).astype(jnp.float32)   # NCHW -> NHWC
    N, H, W, Cin = x.shape
    # Pad channels to the 128-lane width once; activations stay lane-dense and
    # the padded channels remain exactly zero through every layer.
    a = jnp.pad(x, ((0, 0), (0, 0), (0, 0), (0, params["cin_p"] - Cin)))
    for layer in params["stack"]:
        OH, OW = (H - 3) // 2 + 1, (W - 3) // 2 + 1     # main conv k=3, s=2, p=0
        z, Wh = _space_to_depth_flat(a)
        out = fused_layer(z, Wh, OH, OW, layer)          # (N,(OH+2)*(OW+2),Cp)
        coutp = out.shape[-1]
        a = out.reshape(N, OH + 2, OW + 2, coutp)[:, 1:OH + 1, 1:OW + 1, :]
        H, W = OH, OW
    closs, label = head_pallas(a.reshape(N, H * W, a.shape[-1]),
                               params["wl_p"], params["wc_p"],
                               params["inv_norm"])
    return closs[:, :params["feat_dim"]], label[:, :params["num_classes"]]


# ---------------------------------------------------------------------------
# Deterministic parameter initialization (shapes mirror the nn.Module),
# packed / channel-padded / bf16-cast once for the kernels.
# ---------------------------------------------------------------------------
def init_params(key, num_feats, hidden_sizes, num_classes, feat_dim):
    hs = [num_feats] + hidden_sizes + [num_classes]
    eps = 1e-5
    params = {"stack": [],
              "cin_p": _round_up(num_feats, LANE),
              "num_classes": num_classes, "feat_dim": feat_dim}
    for idx, ch in enumerate(hidden_sizes):
        key, k1, k2, k3, k4, k5, k6, k7 = jax.random.split(key, 8)
        cin, cout = hs[idx], hs[idx + 1]                 # cout == ch
        cin_p, cout_p = _round_up(cin, LANE), _round_up(cout, LANE)
        w_main = 0.2 * jax.random.normal(k1, (3, 3, cin, cout), jnp.float32)
        w_conv1 = 0.2 * jax.random.normal(k2, (3, 3, ch, ch), jnp.float32)
        w_short = 0.2 * jax.random.normal(k3, (1, 1, ch, ch), jnp.float32)
        gamma = 1.0 + 0.1 * jax.random.normal(k4, (ch,), jnp.float32)
        beta = 0.1 * jax.random.normal(k5, (ch,), jnp.float32)
        rmean = 0.1 * jax.random.normal(k6, (ch,), jnp.float32)
        rvar = 0.5 + jax.random.uniform(k7, (ch,), jnp.float32)
        bn_scale = gamma / jnp.sqrt(rvar + eps)
        bn_shift = beta - rmean * bn_scale
        params["stack"].append(dict(
            wm_p=_pack_main_weight(w_main, cin_p, cout_p).astype(jnp.bfloat16),
            w1_p=_pack_conv1_weight(w_conv1, cout_p).astype(jnp.bfloat16),
            wsc_p=jnp.zeros((cout_p, cout_p), jnp.float32)
                    .at[:ch, :ch].set(w_short[0, 0]).astype(jnp.bfloat16),
            scale_p=jnp.zeros((1, cout_p), jnp.float32).at[0, :ch].set(bn_scale),
            shift_p=jnp.zeros((1, cout_p), jnp.float32).at[0, :ch].set(bn_shift),
        ))
    key, kl, kc = jax.random.split(key, 3)
    c_last = hidden_sizes[-1]
    c_last_p = _round_up(c_last, LANE)
    ncls_p = _round_up(num_classes, LANE)
    nfeat_p = _round_up(feat_dim, LANE)
    # PyTorch nn.Linear weight layout is (out, in); store transposed for matmul.
    w_label = 0.2 * jax.random.normal(kl, (num_classes, c_last), jnp.float32)
    w_closs = 0.2 * jax.random.normal(kc, (feat_dim, c_last), jnp.float32)
    wl_p = jnp.zeros((c_last_p, ncls_p), jnp.float32) \
              .at[:c_last, :num_classes].set(w_label.T)
    wc_p = jnp.zeros((c_last_p, nfeat_p), jnp.float32) \
              .at[:c_last, :feat_dim].set(w_closs.T)
    # torch.norm(weight, dim=1) == column-wise norm of the transposed weight;
    # precompute 1/norm once (with epsilon to avoid div-by-zero / NaN).
    inv_norm = 1.0 / jnp.sqrt(jnp.sum(wl_p * wl_p, axis=0, keepdims=True) + 1e-12)
    params.update(wl_p=wl_p.astype(jnp.bfloat16),
                  wc_p=wc_p.astype(jnp.bfloat16),
                  inv_norm=inv_norm)
    return params


if __name__ == "__main__":
    num_feats, hidden_sizes, num_classes, feat_dim = 4, [8, 16], 10, 10

    key = jax.random.PRNGKey(0)
    kx, kp = jax.random.split(key)
    x = jax.random.normal(kx, (2, num_feats, 16, 16), jnp.float32)   # NCHW input
    params = init_params(kp, num_feats, hidden_sizes, num_classes, feat_dim)

    closs_out, label_out = network_forward(x, params)
    jax.block_until_ready((closs_out, label_out))

    assert closs_out.shape == (2, feat_dim)
    assert label_out.shape == (2, num_classes)
    assert bool(jnp.all(closs_out >= 0.0))          # relu_closs
    print("KERNEL_OK")
</pallas_src>

<mosaic_0001>
module attributes {stable_mosaic.version = 11 : i64} {
  func.func @kernel(%arg0: i32, %arg1: memref<1x64x512xf32, #tpu.memory_space<vmem>>, %arg2: memref<4x512x128xbf16, #tpu.memory_space<vmem>>, %arg3: memref<9x128x128xbf16, #tpu.memory_space<vmem>>, %arg4: memref<128x128xbf16, #tpu.memory_space<vmem>>, %arg5: memref<1x128xf32, #tpu.memory_space<vmem>>, %arg6: memref<1x128xf32, #tpu.memory_space<vmem>>, %arg7: memref<61x1xf32, #tpu.memory_space<vmem>>, %arg8: memref<1x81x128xf32, #tpu.memory_space<vmem>>, %arg9: memref<81x128xf32, #tpu.memory_space<vmem>>, %arg10: memref<81x128xf32, #tpu.memory_space<vmem>>) attributes {dimension_semantics = [#tpu.dimension_semantics<parallel>], iteration_bounds = array<i64: 2>, scalar_prefetch = 0 : i64, scratch_operands = 2 : i64, tpu.core_type = #tpu.core_type<tc>, window_params = [{transform_indices = @transform_0, window_bounds = array<i64: 1, 64, 512>}, {pipeline_mode = #tpu.pipeline_mode<synchronous>, transform_indices = @transform_1, window_bounds = array<i64: 4, 512, 128>}, {pipeline_mode = #tpu.pipeline_mode<synchronous>, transform_indices = @transform_2, window_bounds = array<i64: 9, 128, 128>}, {pipeline_mode = #tpu.pipeline_mode<synchronous>, transform_indices = @transform_3, window_bounds = array<i64: 128, 128>}, {pipeline_mode = #tpu.pipeline_mode<synchronous>, transform_indices = @transform_4, window_bounds = array<i64: 1, 128>}, {pipeline_mode = #tpu.pipeline_mode<synchronous>, transform_indices = @transform_5, window_bounds = array<i64: 1, 128>}, {pipeline_mode = #tpu.pipeline_mode<synchronous>, transform_indices = @transform_6, window_bounds = array<i64: 61, 1>}, {transform_indices = @transform_7, window_bounds = array<i64: 1, 81, 128>}]} {
    %cst = arith.constant 0.000000e+00 : f32
    %0 = vector.broadcast %cst : f32 to vector<55x128xf32>
    %c0 = arith.constant 0 : index
    %c0_0 = arith.constant 0 : index
    %c0_1 = arith.constant 0 : index
    %1 = vector.load %arg1[%c0, %c0_0, %c0_1] : memref<1x64x512xf32, #tpu.memory_space<vmem>>, vector<1x55x512xf32>
    %2 = vector.shape_cast %1 : vector<1x55x512xf32> to vector<55x512xf32>
    %3 = arith.truncf %2 : vector<55x512xf32> to vector<55x512xbf16>
    %c0_2 = arith.constant 0 : index
    %c0_3 = arith.constant 0 : index
    %c0_4 = arith.constant 0 : index
    %4 = vector.load %arg2[%c0_2, %c0_3, %c0_4] : memref<4x512x128xbf16, #tpu.memory_space<vmem>>, vector<1x512x128xbf16>
    %5 = vector.shape_cast %4 : vector<1x512x128xbf16> to vector<512x128xbf16>
    %cst_5 = arith.constant dense<0.000000e+00> : vector<55x128xf32>
    %6 = tpu.matmul %3, %5, %cst_5 {dimension_numbers = #tpu.dot_dimension_numbers<[1], [0], [0], [1], [0, 0, 1, 1], [], []>} : vector<55x512xbf16>, vector<512x128xbf16>, vector<55x128xf32> -> vector<55x128xf32>
    %7 = arith.addf %0, %6 : vector<55x128xf32>
    %c0_6 = arith.constant 0 : index
    %c1 = arith.constant 1 : index
    %c0_7 = arith.constant 0 : index
    %8 = vector.load %arg1[%c0_6, %c1, %c0_7] : memref<1x64x512xf32, #tpu.memory_space<vmem>>, vector<1x55x512xf32>
    %9 = vector.shape_cast %8 : vector<1x55x512xf32> to vector<55x512xf32>
    %10 = arith.truncf %9 : vector<55x512xf32> to vector<55x512xbf16>
    %c1_8 = arith.constant 1 : index
    %c0_9 = arith.constant 0 : index
    %c0_10 = arith.constant 0 : index
    %11 = vector.load %arg2[%c1_8, %c0_9, %c0_10] : memref<4x512x128xbf16, #tpu.memory_space<vmem>>, vector<1x512x128xbf16>
    %12 = vector.shape_cast %11 : vector<1x512x128xbf16> to vector<512x128xbf16>
    %cst_11 = arith.constant dense<0.000000e+00> : vector<55x128xf32>
    %13 = tpu.matmul %10, %12, %cst_11 {dimension_numbers = #tpu.dot_dimension_numbers<[1], [0], [0], [1], [0, 0, 1, 1], [], []>} : vector<55x512xbf16>, vector<512x128xbf16>, vector<55x128xf32> -> vector<55x128xf32>
    %14 = arith.addf %7, %13 : vector<55x128xf32>
    %c0_12 = arith.constant 0 : index
    %c8 = arith.constant 8 : index
    %c0_13 = arith.constant 0 : index
    %15 = vector.load %arg1[%c0_12, %c8, %c0_13] : memref<1x64x512xf32, #tpu.memory_space<vmem>>, vector<1x55x512xf32>
    %16 = vector.shape_cast %15 : vector<1x55x512xf32> to vector<55x512xf32>
    %17 = arith.truncf %16 : vector<55x512xf32> to vector<55x512xbf16>
    %c2 = arith.constant 2 : index
    %c0_14 = arith.constant 0 : index
    %c0_15 = arith.constant 0 : index
    %18 = vector.load %arg2[%c2, %c0_14, %c0_15] : memref<4x512x128xbf16, #tpu.memory_space<vmem>>, vector<1x512x128xbf16>
    %19 = vector.shape_cast %18 : vector<1x512x128xbf16> to vector<512x128xbf16>
    %cst_16 = arith.constant dense<0.000000e+00> : vector<55x128xf32>
    %20 = tpu.matmul %17, %19, %cst_16 {dimension_numbers = #tpu.dot_dimension_numbers<[1], [0], [0], [1], [0, 0, 1, 1], [], []>} : vector<55x512xbf16>, vector<512x128xbf16>, vector<55x128xf32> -> vector<55x128xf32>
    %21 = arith.addf %14, %20 : vector<55x128xf32>
    %c0_17 = arith.constant 0 : index
    %c9 = arith.constant 9 : index
    %c0_18 = arith.constant 0 : index
    %22 = vector.load %arg1[%c0_17, %c9, %c0_18] : memref<1x64x512xf32, #tpu.memory_space<vmem>>, vector<1x55x512xf32>
    %23 = vector.shape_cast %22 : vector<1x55x512xf32> to vector<55x512xf32>
    %24 = arith.truncf %23 : vector<55x512xf32> to vector<55x512xbf16>
    %c3 = arith.constant 3 : index
    %c0_19 = arith.constant 0 : index
    %c0_20 = arith.constant 0 : index
    %25 = vector.load %arg2[%c3, %c0_19, %c0_20] : memref<4x512x128xbf16, #tpu.memory_space<vmem>>, vector<1x512x128xbf16>
    %26 = vector.shape_cast %25 : vector<1x512x128xbf16> to vector<512x128xbf16>
    %cst_21 = arith.constant dense<0.000000e+00> : vector<55x128xf32>
    %27 = tpu.matmul %24, %26, %cst_21 {dimension_numbers = #tpu.dot_dimension_numbers<[1], [0], [0], [1], [0, 0, 1, 1], [], []>} : vector<55x512xbf16>, vector<512x128xbf16>, vector<55x128xf32> -> vector<55x128xf32>
    %28 = arith.addf %21, %27 : vector<55x128xf32>
    %cst_22 = arith.constant 0.000000e+00 : f32
    %29 = vector.broadcast %cst_22 : f32 to vector<55x128xf32>
    %30 = arith.maximumf %28, %29 : vector<55x128xf32>
    %cst_23 = arith.constant 0.000000e+00 : f32
    %31 = vector.broadcast %cst_23 : f32 to vector<81x128xf32>
    %c0_24 = arith.constant 0 : index
    %c0_25 = arith.constant 0 : index
    %32 = vector.load %arg9[%c0_24, %c0_25] : memref<81x128xf32, #tpu.memory_space<vmem>>, vector<81x128xf32>
    tpu.vector_store %arg9[%c0_24, %c0_25], %31 {strides = array<i32>} : memref<81x128xf32, #tpu.memory_space<vmem>>, vector<81x128xf32>,
    %33 = vector.extract_strided_slice %30 {offsets = [0, 0], sizes = [7, 128], strides = [1, 1]} : vector<55x128xf32> to vector<7x128xf32>
    %c10 = arith.constant 10 : index
    %c0_26 = arith.constant 0 : index
    %34 = vector.load %arg9[%c10, %c0_26] : memref<81x128xf32, #tpu.memory_space<vmem>>, vector<7x128xf32>
    tpu.vector_store %arg9[%c10, %c0_26], %33 {strides = array<i32>} : memref<81x128xf32, #tpu.memory_space<vmem>>, vector<7x128xf32>,
    %35 = vector.extract_strided_slice %30 {offsets = [8, 0], sizes = [7, 128], strides = [1, 1]} : vector<55x128xf32> to vector<7x128xf32>
    %c19 = arith.constant 19 : index
    %c0_27 = arith.constant 0 : index
    %36 = vector.load %arg9[%c19, %c0_27] : memref<81x128xf32, #tpu.memory_space<vmem>>, vector<7x128xf32>
    tpu.vector_store %arg9[%c19, %c0_27], %35 {strides = array<i32>} : memref<81x128xf32, #tpu.memory_space<vmem>>, vector<7x128xf32>,
    %37 = vector.extract_strided_slice %30 {offsets = [16, 0], sizes = [7, 128], strides = [1, 1]} : vector<55x128xf32> to vector<7x128xf32>
    %c28 = arith.constant 28 : index
    %c0_28 = arith.constant 0 : index
    %38 = vector.load %arg9[%c28, %c0_28] : memref<81x128xf32, #tpu.memory_space<vmem>>, vector<7x128xf32>
    tpu.vector_store %arg9[%c28, %c0_28], %37 {strides = array<i32>} : memref<81x128xf32, #tpu.memory_space<vmem>>, vector<7x128xf32>,
    %39 = vector.extract_strided_slice %30 {offsets = [24, 0], sizes = [7, 128], strides = [1, 1]} : vector<55x128xf32> to vector<7x128xf32>
    %c37 = arith.constant 37 : index
    %c0_29 = arith.constant 0 : index
    %40 = vector.load %arg9[%c37, %c0_29] : memref<81x128xf32, #tpu.memory_space<vmem>>, vector<7x128xf32>
    tpu.vector_store %arg9[%c37, %c0_29], %39 {strides = array<i32>} : memref<81x128xf32, #tpu.memory_space<vmem>>, vector<7x128xf32>,
    %41 = vector.extract_strided_slice %30 {offsets = [32, 0], sizes = [7, 128], strides = [1, 1]} : vector<55x128xf32> to vector<7x128xf32>
    %c46 = arith.constant 46 : index
    %c0_30 = arith.constant 0 : index
    %42 = vector.load %arg9[%c46, %c0_30] : memref<81x128xf32, #tpu.memory_space<vmem>>, vector<7x128xf32>
    tpu.vector_store %arg9[%c46, %c0_30], %41 {strides = array<i32>} : memref<81x128xf32, #tpu.memory_space<vmem>>, vector<7x128xf32>,
    %43 = vector.extract_strided_slice %30 {offsets = [40, 0], sizes = [7, 128], strides = [1, 1]} : vector<55x128xf32> to vector<7x128xf32>
    %c55 = arith.constant 55 : index
    %c0_31 = arith.constant 0 : index
    %44 = vector.load %arg9[%c55, %c0_31] : memref<81x128xf32, #tpu.memory_space<vmem>>, vector<7x128xf32>
    tpu.vector_store %arg9[%c55, %c0_31], %43 {strides = array<i32>} : memref<81x128xf32, #tpu.memory_space<vmem>>, vector<7x128xf32>,
    %45 = vector.extract_strided_slice %30 {offsets = [48, 0], sizes = [7, 128], strides = [1, 1]} : vector<55x128xf32> to vector<7x128xf32>
    %c64 = arith.constant 64 : index
    %c0_32 = arith.constant 0 : index
    %46 = vector.load %arg9[%c64, %c0_32] : memref<81x128xf32, #tpu.memory_space<vmem>>, vector<7x128xf32>
    tpu.vector_store %arg9[%c64, %c0_32], %45 {strides = array<i32>} : memref<81x128xf32, #tpu.memory_space<vmem>>, vector<7x128xf32>,
    %c0_33 = arith.constant 0 : index
    %c0_34 = arith.constant 0 : index
    %47 = vector.load %arg5[%c0_33, %c0_34] : memref<1x128xf32, #tpu.memory_space<vmem>>, vector<1x128xf32>
    %c0_35 = arith.constant 0 : index
    %c0_36 = arith.constant 0 : index
    %48 = vector.load %arg6[%c0_35, %c0_36] : memref<1x128xf32, #tpu.memory_space<vmem>>, vector<1x128xf32>
    %c0_37 = arith.constant 0 : index
    %c0_38 = arith.constant 0 : index
    %49 = vector.load %arg7[%c0_37, %c0_38] : memref<61x1xf32, #tpu.memory_space<vmem>>, vector<61x1xf32>
    %cst_39 = arith.constant 0.000000e+00 : f32
    %50 = vector.broadcast %cst_39 : f32 to vector<61x128xf32>
    %c0_40 = arith.constant 0 : index
    %c0_41 = arith.constant 0 : index
    %51 = vector.load %arg9[%c0_40, %c0_41] : memref<81x128xf32, #tpu.memory_space<vmem>>, vector<61x128xf32>
    %52 = arith.truncf %51 : vector<61x128xf32> to vector<61x128xbf16>
    %c0_42 = arith.constant 0 : index
    %c0_43 = arith.constant 0 : index
    %c0_44 = arith.constant 0 : index
    %53 = vector.load %arg3[%c0_42, %c0_43, %c0_44] : memref<9x128x128xbf16, #tpu.memory_space<vmem>>, vector<1x128x128xbf16>
    %54 = vector.shape_cast %53 : vector<1x128x128xbf16> to vector<128x128xbf16>
    %cst_45 = arith.constant dense<0.000000e+00> : vector<61x128xf32>
    %55 = tpu.matmul %52, %54, %cst_45 {dimension_numbers = #tpu.dot_dimension_numbers<[1], [0], [0], [1], [0, 0, 1, 1], [], []>} : vector<61x128xbf16>, vector<128x128xbf16>, vector<61x128xf32> -> vector<61x128xf32>
    %56 = arith.addf %50, %55 : vector<61x128xf32>
    %c1_46 = arith.constant 1 : index
    %c0_47 = arith.constant 0 : index
    %57 = vector.load %arg9[%c1_46, %c0_47] : memref<81x128xf32, #tpu.memory_space<vmem>>, vector<61x128xf32>
    %58 = arith.truncf %57 : vector<61x128xf32> to vector<61x128xbf16>
    %c1_48 = arith.constant 1 : index
    %c0_49 = arith.constant 0 : index
    %c0_50 = arith.constant 0 : index
    %59 = vector.load %arg3[%c1_48, %c0_49, %c0_50] : memref<9x128x128xbf16, #tpu.memory_space<vmem>>, vector<1x128x128xbf16>
    %60 = vector.shape_cast %59 : vector<1x128x128xbf16> to vector<128x128xbf16>
    %cst_51 = arith.constant dense<0.000000e+00> : vector<61x128xf32>
    %61 = tpu.matmul %58, %60, %cst_51 {dimension_numbers = #tpu.dot_dimension_numbers<[1], [0], [0], [1], [0, 0, 1, 1], [], []>} : vector<61x128xbf16>, vector<128x128xbf16>, vector<61x128xf32> -> vector<61x128xf32>
    %62 = arith.addf %56, %61 : vector<61x128xf32>
    %c2_52 = arith.constant 2 : index
    %c0_53 = arith.constant 0 : index
    %63 = vector.load %arg9[%c2_52, %c0_53] : memref<81x128xf32, #tpu.memory_space<vmem>>, vector<61x128xf32>
    %64 = arith.truncf %63 : vector<61x128xf32> to vector<61x128xbf16>
    %c2_54 = arith.constant 2 : index
    %c0_55 = arith.constant 0 : index
    %c0_56 = arith.constant 0 : index
    %65 = vector.load %arg3[%c2_54, %c0_55, %c0_56] : memref<9x128x128xbf16, #tpu.memory_space<vmem>>, vector<1x128x128xbf16>
    %66 = vector.shape_cast %65 : vector<1x128x128xbf16> to vector<128x128xbf16>
    %cst_57 = arith.constant dense<0.000000e+00> : vector<61x128xf32>
    %67 = tpu.matmul %64, %66, %cst_57 {dimension_numbers = #tpu.dot_dimension_numbers<[1], [0], [0], [1], [0, 0, 1, 1], [], []>} : vector<61x128xbf16>, vector<128x128xbf16>, vector<61x128xf32> -> vector<61x128xf32>
    %68 = arith.addf %62, %67 : vector<61x128xf32>
    %c9_58 = arith.constant 9 : index
    %c0_59 = arith.constant 0 : index
    %69 = vector.load %arg9[%c9_58, %c0_59] : memref<81x128xf32, #tpu.memory_space<vmem>>, vector<61x128xf32>
    %70 = arith.truncf %69 : vector<61x128xf32> to vector<61x128xbf16>
    %c3_60 = arith.constant 3 : index
    %c0_61 = arith.constant 0 : index
    %c0_62 = arith.constant 0 : index
    %71 = vector.load %arg3[%c3_60, %c0_61, %c0_62] : memref<9x128x128xbf16, #tpu.memory_space<vmem>>, vector<1x128x128xbf16>
    %72 = vector.shape_cast %71 : vector<1x128x128xbf16> to vector<128x128xbf16>
    %cst_63 = arith.constant dense<0.000000e+00> : vector<61x128xf32>
    %73 = tpu.matmul %70, %72, %cst_63 {dimension_numbers = #tpu.dot_dimension_numbers<[1], [0], [0], [1], [0, 0, 1, 1], [], []>} : vector<61x128xbf16>, vector<128x128xbf16>, vector<61x128xf32> -> vector<61x128xf32>
    %74 = arith.addf %68, %73 : vector<61x128xf32>
    %c10_64 = arith.constant 10 : index
    %c0_65 = arith.constant 0 : index
    %75 = vector.load %arg9[%c10_64, %c0_65] : memref<81x128xf32, #tpu.memory_space<vmem>>, vector<61x128xf32>
    %76 = arith.truncf %75 : vector<61x128xf32> to vector<61x128xbf16>
    %c4 = arith.constant 4 : index
    %c0_66 = arith.constant 0 : index
    %c0_67 = arith.constant 0 : index
    %77 = vector.load %arg3[%c4, %c0_66, %c0_67] : memref<9x128x128xbf16, #tpu.memory_space<vmem>>, vector<1x128x128xbf16>
    %78 = vector.shape_cast %77 : vector<1x128x128xbf16> to vector<128x128xbf16>
    %cst_68 = arith.constant dense<0.000000e+00> : vector<61x128xf32>
    %79 = tpu.matmul %76, %78, %cst_68 {dimension_numbers = #tpu.dot_dimension_numbers<[1], [0], [0], [1], [0, 0, 1, 1], [], []>} : vector<61x128xbf16>, vector<128x128xbf16>, vector<61x128xf32> -> vector<61x128xf32>
    %80 = arith.addf %74, %79 : vector<61x128xf32>
    %c11 = arith.constant 11 : index
    %c0_69 = arith.constant 0 : index
    %81 = vector.load %arg9[%c11, %c0_69] : memref<81x128xf32, #tpu.memory_space<vmem>>, vector<61x128xf32>
    %82 = arith.truncf %81 : vector<61x128xf32> to vector<61x128xbf16>
    %c5 = arith.constant 5 : index
    %c0_70 = arith.constant 0 : index
    %c0_71 = arith.constant 0 : index
    %83 = vector.load %arg3[%c5, %c0_70, %c0_71] : memref<9x128x128xbf16, #tpu.memory_space<vmem>>, vector<1x128x128xbf16>
    %84 = vector.shape_cast %83 : vector<1x128x128xbf16> to vector<128x128xbf16>
    %cst_72 = arith.constant dense<0.000000e+00> : vector<61x128xf32>
    %85 = tpu.matmul %82, %84, %cst_72 {dimension_numbers = #tpu.dot_dimension_numbers<[1], [0], [0], [1], [0, 0, 1, 1], [], []>} : vector<61x128xbf16>, vector<128x128xbf16>, vector<61x128xf32> -> vector<61x128xf32>
    %86 = arith.addf %80, %85 : vector<61x128xf32>
    %c18 = arith.constant 18 : index
    %c0_73 = arith.constant 0 : index
    %87 = vector.load %arg9[%c18, %c0_73] : memref<81x128xf32, #tpu.memory_space<vmem>>, vector<61x128xf32>
    %88 = arith.truncf %87 : vector<61x128xf32> to vector<61x128xbf16>
    %c6 = arith.constant 6 : index
    %c0_74 = arith.constant 0 : index
    %c0_75 = arith.constant 0 : index
    %89 = vector.load %arg3[%c6, %c0_74, %c0_75] : memref<9x128x128xbf16, #tpu.memory_space<vmem>>, vector<1x128x128xbf16>
    %90 = vector.shape_cast %89 : vector<1x128x128xbf16> to vector<128x128xbf16>
    %cst_76 = arith.constant dense<0.000000e+00> : vector<61x128xf32>
    %91 = tpu.matmul %88, %90, %cst_76 {dimension_numbers = #tpu.dot_dimension_numbers<[1], [0], [0], [1], [0, 0, 1, 1], [], []>} : vector<61x128xbf16>, vector<128x128xbf16>, vector<61x128xf32> -> vector<61x128xf32>
    %92 = arith.addf %86, %91 : vector<61x128xf32>
    %c19_77 = arith.constant 19 : index
    %c0_78 = arith.constant 0 : index
    %93 = vector.load %arg9[%c19_77, %c0_78] : memref<81x128xf32, #tpu.memory_space<vmem>>, vector<61x128xf32>
    %94 = arith.truncf %93 : vector<61x128xf32> to vector<61x128xbf16>
    %c7 = arith.constant 7 : index
    %c0_79 = arith.constant 0 : index
    %c0_80 = arith.constant 0 : index
    %95 = vector.load %arg3[%c7, %c0_79, %c0_80] : memref<9x128x128xbf16, #tpu.memory_space<vmem>>, vector<1x128x128xbf16>
    %96 = vector.shape_cast %95 : vector<1x128x128xbf16> to vector<128x128xbf16>
    %cst_81 = arith.constant dense<0.000000e+00> : vector<61x128xf32>
    %97 = tpu.matmul %94, %96, %cst_81 {dimension_numbers = #tpu.dot_dimension_numbers<[1], [0], [0], [1], [0, 0, 1, 1], [], []>} : vector<61x128xbf16>, vector<128x128xbf16>, vector<61x128xf32> -> vector<61x128xf32>
    %98 = arith.addf %92, %97 : vector<61x128xf32>
    %c20 = arith.constant 20 : index
    %c0_82 = arith.constant 0 : index
    %99 = vector.load %arg9[%c20, %c0_82] : memref<81x128xf32, #tpu.memory_space<vmem>>, vector<61x128xf32>
    %100 = arith.truncf %99 : vector<61x128xf32> to vector<61x128xbf16>
    %c8_83 = arith.constant 8 : index
    %c0_84 = arith.constant 0 : index
    %c0_85 = arith.constant 0 : index
    %101 = vector.load %arg3[%c8_83, %c0_84, %c0_85] : memref<9x128x128xbf16, #tpu.memory_space<vmem>>, vector<1x128x128xbf16>
    %102 = vector.shape_cast %101 : vector<1x128x128xbf16> to vector<128x128xbf16>
    %cst_86 = arith.constant dense<0.000000e+00> : vector<61x128xf32>
    %103 = tpu.matmul %100, %102, %cst_86 {dimension_numbers = #tpu.dot_dimension_numbers<[1], [0], [0], [1], [0, 0, 1, 1], [], []>} : vector<61x128xbf16>, vector<128x128xbf16>, vector<61x128xf32> -> vector<61x128xf32>
    %104 = arith.addf %98, %103 : vector<61x128xf32>
    %105 = vector.broadcast %47 : vector<1x128xf32> to vector<61x128xf32>
    %106 = arith.mulf %104, %105 : vector<61x128xf32>
    %107 = vector.broadcast %48 : vector<1x128xf32> to vector<61x128xf32>
    %108 = arith.addf %106, %107 : vector<61x128xf32>
    %cst_87 = arith.constant 0.000000e+00 : f32
    %109 = vector.broadcast %cst_87 : f32 to vector<61x128xf32>
    %110 = arith.maximumf %108, %109 : vector<61x128xf32>
    %111 = vector.broadcast %49 : vector<61x1xf32> to vector<61x128xf32>
    %112 = arith.mulf %110, %111 : vector<61x128xf32>
    %cst_88 = arith.constant 0.000000e+00 : f32
    %113 = vector.broadcast %cst_88 : f32 to vector<81x128xf32>
    %c0_89 = arith.constant 0 : index
    %c0_90 = arith.constant 0 : index
    %114 = vector.load %arg10[%c0_89, %c0_90] : memref<81x128xf32, #tpu.memory_space<vmem>>, vector<81x128xf32>
    tpu.vector_store %arg10[%c0_89, %c0_90], %113 {strides = array<i32>} : memref<81x128xf32, #tpu.memory_space<vmem>>, vector<81x128xf32>,
    %c10_91 = arith.constant 10 : index
    %c0_92 = arith.constant 0 : index
    %115 = vector.load %arg10[%c10_91, %c0_92] : memref<81x128xf32, #tpu.memory_space<vmem>>, vector<61x128xf32>
    tpu.vector_store %arg10[%c10_91, %c0_92], %112 {strides = array<i32>} : memref<81x128xf32, #tpu.memory_space<vmem>>, vector<61x128xf32>,
    %cst_93 = arith.constant 0.000000e+00 : f32
    %116 = vector.broadcast %cst_93 : f32 to vector<61x128xf32>
    %c0_94 = arith.constant 0 : index
    %c0_95 = arith.constant 0 : index
    %117 = vector.load %arg10[%c0_94, %c0_95] : memref<81x128xf32, #tpu.memory_space<vmem>>, vector<61x128xf32>
    %118 = arith.truncf %117 : vector<61x128xf32> to vector<61x128xbf16>
    %c0_96 = arith.constant 0 : index
    %c0_97 = arith.constant 0 : index
    %c0_98 = arith.constant 0 : index
    %119 = vector.load %arg3[%c0_96, %c0_97, %c0_98] : memref<9x128x128xbf16, #tpu.memory_space<vmem>>, vector<1x128x128xbf16>
    %120 = vector.shape_cast %119 : vector<1x128x128xbf16> to vector<128x128xbf16>
    %cst_99 = arith.constant dense<0.000000e+00> : vector<61x128xf32>
    %121 = tpu.matmul %118, %120, %cst_99 {dimension_numbers = #tpu.dot_dimension_numbers<[1], [0], [0], [1], [0, 0, 1, 1], [], []>} : vector<61x128xbf16>, vector<128x128xbf16>, vector<61x128xf32> -> vector<61x128xf32>
    %122 = arith.addf %116, %121 : vector<61x128xf32>
    %c1_100 = arith.constant 1 : index
    %c0_101 = arith.constant 0 : index
    %123 = vector.load %arg10[%c1_100, %c0_101] : memref<81x128xf32, #tpu.memory_space<vmem>>, vector<61x128xf32>
    %124 = arith.truncf %123 : vector<61x128xf32> to vector<61x128xbf16>
    %c1_102 = arith.constant 1 : index
    %c0_103 = arith.constant 0 : index
    %c0_104 = arith.constant 0 : index
    %125 = vector.load %arg3[%c1_102, %c0_103, %c0_104] : memref<9x128x128xbf16, #tpu.memory_space<vmem>>, vector<1x128x128xbf16>
    %126 = vector.shape_cast %125 : vector<1x128x128xbf16> to vector<128x128xbf16>
    %cst_105 = arith.constant dense<0.000000e+00> : vector<61x128xf32>
    %127 = tpu.matmul %124, %126, %cst_105 {dimension_numbers = #tpu.dot_dimension_numbers<[1], [0], [0], [1], [0, 0, 1, 1], [], []>} : vector<61x128xbf16>, vector<128x128xbf16>, vector<61x128xf32> -> vector<61x128xf32>
    %128 = arith.addf %122, %127 : vector<61x128xf32>
    %c2_106 = arith.constant 2 : index
    %c0_107 = arith.constant 0 : index
    %129 = vector.load %arg10[%c2_106, %c0_107] : memref<81x128xf32, #tpu.memory_space<vmem>>, vector<61x128xf32>
    %130 = arith.truncf %129 : vector<61x128xf32> to vector<61x128xbf16>
    %c2_108 = arith.constant 2 : index
    %c0_109 = arith.constant 0 : index
    %c0_110 = arith.constant 0 : index
    %131 = vector.load %arg3[%c2_108, %c0_109, %c0_110] : memref<9x128x128xbf16, #tpu.memory_space<vmem>>, vector<1x128x128xbf16>
    %132 = vector.shape_cast %131 : vector<1x128x128xbf16> to vector<128x128xbf16>
    %cst_111 = arith.constant dense<0.000000e+00> : vector<61x128xf32>
    %133 = tpu.matmul %130, %132, %cst_111 {dimension_numbers = #tpu.dot_dimension_numbers<[1], [0], [0], [1], [0, 0, 1, 1], [], []>} : vector<61x128xbf16>, vector<128x128xbf16>, vector<61x128xf32> -> vector<61x128xf32>
    %134 = arith.addf %128, %133 : vector<61x128xf32>
    %c9_112 = arith.constant 9 : index
    %c0_113 = arith.constant 0 : index
    %135 = vector.load %arg10[%c9_112, %c0_113] : memref<81x128xf32, #tpu.memory_space<vmem>>, vector<61x128xf32>
    %136 = arith.truncf %135 : vector<61x128xf32> to vector<61x128xbf16>
    %c3_114 = arith.constant 3 : index
    %c0_115 = arith.constant 0 : index
    %c0_116 = arith.constant 0 : index
    %137 = vector.load %arg3[%c3_114, %c0_115, %c0_116] : memref<9x128x128xbf16, #tpu.memory_space<vmem>>, vector<1x128x128xbf16>
    %138 = vector.shape_cast %137 : vector<1x128x128xbf16> to vector<128x128xbf16>
    %cst_117 = arith.constant dense<0.000000e+00> : vector<61x128xf32>
    %139 = tpu.matmul %136, %138, %cst_117 {dimension_numbers = #tpu.dot_dimension_numbers<[1], [0], [0], [1], [0, 0, 1, 1], [], []>} : vector<61x128xbf16>, vector<128x128xbf16>, vector<61x128xf32> -> vector<61x128xf32>
    %140 = arith.addf %134, %139 : vector<61x128xf32>
    %c10_118 = arith.constant 10 : index
    %c0_119 = arith.constant 0 : index
    %141 = vector.load %arg10[%c10_118, %c0_119] : memref<81x128xf32, #tpu.memory_space<vmem>>, vector<61x128xf32>
    %142 = arith.truncf %141 : vector<61x128xf32> to vector<61x128xbf16>
    %c4_120 = arith.constant 4 : index
    %c0_121 = arith.constant 0 : index
    %c0_122 = arith.constant 0 : index
    %143 = vector.load %arg3[%c4_120, %c0_121, %c0_122] : memref<9x128x128xbf16, #tpu.memory_space<vmem>>, vector<1x128x128xbf16>
    %144 = vector.shape_cast %143 : vector<1x128x128xbf16> to vector<128x128xbf16>
    %cst_123 = arith.constant dense<0.000000e+00> : vector<61x128xf32>
    %145 = tpu.matmul %142, %144, %cst_123 {dimension_numbers = #tpu.dot_dimension_numbers<[1], [0], [0], [1], [0, 0, 1, 1], [], []>} : vector<61x128xbf16>, vector<128x128xbf16>, vector<61x128xf32> -> vector<61x128xf32>
    %146 = arith.addf %140, %145 : vector<61x128xf32>
    %c11_124 = arith.constant 11 : index
    %c0_125 = arith.constant 0 : index
    %147 = vector.load %arg10[%c11_124, %c0_125] : memref<81x128xf32, #tpu.memory_space<vmem>>, vector<61x128xf32>
    %148 = arith.truncf %147 : vector<61x128xf32> to vector<61x128xbf16>
    %c5_126 = arith.constant 5 : index
    %c0_127 = arith.constant 0 : index
    %c0_128 = arith.constant 0 : index
    %149 = vector.load %arg3[%c5_126, %c0_127, %c0_128] : memref<9x128x128xbf16, #tpu.memory_space<vmem>>, vector<1x128x128xbf16>
    %150 = vector.shape_cast %149 : vector<1x128x128xbf16> to vector<128x128xbf16>
    %cst_129 = arith.constant dense<0.000000e+00> : vector<61x128xf32>
    %151 = tpu.matmul %148, %150, %cst_129 {dimension_numbers = #tpu.dot_dimension_numbers<[1], [0], [0], [1], [0, 0, 1, 1], [], []>} : vector<61x128xbf16>, vector<128x128xbf16>, vector<61x128xf32> -> vector<61x128xf32>
    %152 = arith.addf %146, %151 : vector<61x128xf32>
    %c18_130 = arith.constant 18 : index
    %c0_131 = arith.constant 0 : index
    %153 = vector.load %arg10[%c18_130, %c0_131] : memref<81x128xf32, #tpu.memory_space<vmem>>, vector<61x128xf32>
    %154 = arith.truncf %153 : vector<61x128xf32> to vector<61x128xbf16>
    %c6_132 = arith.constant 6 : index
    %c0_133 = arith.constant 0 : index
    %c0_134 = arith.constant 0 : index
    %155 = vector.load %arg3[%c6_132, %c0_133, %c0_134] : memref<9x128x128xbf16, #tpu.memory_space<vmem>>, vector<1x128x128xbf16>
    %156 = vector.shape_cast %155 : vector<1x128x128xbf16> to vector<128x128xbf16>
    %cst_135 = arith.constant dense<0.000000e+00> : vector<61x128xf32>
    %157 = tpu.matmul %154, %156, %cst_135 {dimension_numbers = #tpu.dot_dimension_numbers<[1], [0], [0], [1], [0, 0, 1, 1], [], []>} : vector<61x128xbf16>, vector<128x128xbf16>, vector<61x128xf32> -> vector<61x128xf32>
    %158 = arith.addf %152, %157 : vector<61x128xf32>
    %c19_136 = arith.constant 19 : index
    %c0_137 = arith.constant 0 : index
    %159 = vector.load %arg10[%c19_136, %c0_137] : memref<81x128xf32, #tpu.memory_space<vmem>>, vector<61x128xf32>
    %160 = arith.truncf %159 : vector<61x128xf32> to vector<61x128xbf16>
    %c7_138 = arith.constant 7 : index
    %c0_139 = arith.constant 0 : index
    %c0_140 = arith.constant 0 : index
    %161 = vector.load %arg3[%c7_138, %c0_139, %c0_140] : memref<9x128x128xbf16, #tpu.memory_space<vmem>>, vector<1x128x128xbf16>
    %162 = vector.shape_cast %161 : vector<1x128x128xbf16> to vector<128x128xbf16>
    %cst_141 = arith.constant dense<0.000000e+00> : vector<61x128xf32>
    %163 = tpu.matmul %160, %162, %cst_141 {dimension_numbers = #tpu.dot_dimension_numbers<[1], [0], [0], [1], [0, 0, 1, 1], [], []>} : vector<61x128xbf16>, vector<128x128xbf16>, vector<61x128xf32> -> vector<61x128xf32>
    %164 = arith.addf %158, %163 : vector<61x128xf32>
    %c20_142 = arith.constant 20 : index
    %c0_143 = arith.constant 0 : index
    %165 = vector.load %arg10[%c20_142, %c0_143] : memref<81x128xf32, #tpu.memory_space<vmem>>, vector<61x128xf32>
    %166 = arith.truncf %165 : vector<61x128xf32> to vector<61x128xbf16>
    %c8_144 = arith.constant 8 : index
    %c0_145 = arith.constant 0 : index
    %c0_146 = arith.constant 0 : index
    %167 = vector.load %arg3[%c8_144, %c0_145, %c0_146] : memref<9x128x128xbf16, #tpu.memory_space<vmem>>, vector<1x128x128xbf16>
    %168 = vector.shape_cast %167 : vector<1x128x128xbf16> to vector<128x128xbf16>
    %cst_147 = arith.constant dense<0.000000e+00> : vector<61x128xf32>
    %169 = tpu.matmul %166, %168, %cst_147 {dimension_numbers = #tpu.dot_dimension_numbers<[1], [0], [0], [1], [0, 0, 1, 1], [], []>} : vector<61x128xbf16>, vector<128x128xbf16>, vector<61x128xf32> -> vector<61x128xf32>
    %170 = arith.addf %164, %169 : vector<61x128xf32>
    %171 = vector.broadcast %47 : vector<1x128xf32> to vector<61x128xf32>
    %172 = arith.mulf %170, %171 : vector<61x128xf32>
    %173 = vector.broadcast %48 : vector<1x128xf32> to vector<61x128xf32>
    %174 = arith.addf %172, %173 : vector<61x128xf32>
    %c10_148 = arith.constant 10 : index
    %c0_149 = arith.constant 0 : index
    %175 = vector.load %arg9[%c10_148, %c0_149] : memref<81x128xf32, #tpu.memory_space<vmem>>, vector<61x128xf32>
    %176 = arith.truncf %175 : vector<61x128xf32> to vector<61x128xbf16>
    %c0_150 = arith.constant 0 : index
    %c0_151 = arith.constant 0 : index
    %177 = vector.load %arg4[%c0_150, %c0_151] : memref<128x128xbf16, #tpu.memory_space<vmem>>, vector<128x128xbf16>
    %cst_152 = arith.constant dense<0.000000e+00> : vector<61x128xf32>
    %178 = tpu.matmul %176, %177, %cst_152 {dimension_numbers = #tpu.dot_dimension_numbers<[1], [0], [0], [1], [0, 0, 1, 1], [], []>} : vector<61x128xbf16>, vector<128x128xbf16>, vector<61x128xf32> -> vector<61x128xf32>
    %179 = arith.addf %174, %178 : vector<61x128xf32>
    %cst_153 = arith.constant 0.000000e+00 : f32
    %180 = vector.broadcast %cst_153 : f32 to vector<61x128xf32>
    %181 = arith.maximumf %179, %180 : vector<61x128xf32>
    %182 = vector.broadcast %49 : vector<61x1xf32> to vector<61x128xf32>
    %183 = arith.mulf %181, %182 : vector<61x128xf32>
    %cst_154 = arith.constant 0.000000e+00 : f32
    %184 = vector.broadcast %cst_154 : f32 to vector<81x128xf32>
    %c0_155 = arith.constant 0 : index
    %c0_156 = arith.constant 0 : index
    %c0_157 = arith.constant 0 : index
    %185 = vector.load %arg8[%c0_155, %c0_156, %c0_157] : memref<1x81x128xf32, #tpu.memory_space<vmem>>, vector<1x81x128xf32>
    %186 = vector.shape_cast %185 : vector<1x81x128xf32> to vector<81x128xf32>
    %187 = vector.shape_cast %184 : vector<81x128xf32> to vector<1x81x128xf32>
    tpu.vector_store %arg8[%c0_155, %c0_156, %c0_157], %187 {strides = array<i32>} : memref<1x81x128xf32, #tpu.memory_space<vmem>>, vector<1x81x128xf32>,
    %c0_158 = arith.constant 0 : index
    %c10_159 = arith.constant 10 : index
    %c0_160 = arith.constant 0 : index
    %188 = vector.load %arg8[%c0_158, %c10_159, %c0_160] : memref<1x81x128xf32, #tpu.memory_space<vmem>>, vector<1x61x128xf32>
    %189 = vector.shape_cast %188 : vector<1x61x128xf32> to vector<61x128xf32>
    %190 = vector.shape_cast %183 : vector<61x128xf32> to vector<1x61x128xf32>
    tpu.vector_store %arg8[%c0_158, %c10_159, %c0_160], %190 {strides = array<i32>} : memref<1x81x128xf32, #tpu.memory_space<vmem>>, vector<1x61x128xf32>,
    return
  }
  func.func @transform_0(%arg0: i32) -> (i32, i32, i32) {
    %c0_i32 = arith.constant 0 : i32
    %c0_i32_0 = arith.constant 0 : i32
    %c0_i32_1 = arith.constant 0 : i32
    return %arg0, %c0_i32, %c0_i32_0 : i32, i32, i32
  }
  func.func @transform_1(%arg0: i32) -> (i32, i32, i32) {
    %c0_i32 = arith.constant 0 : i32
    %c0_i32_0 = arith.constant 0 : i32
    %c0_i32_1 = arith.constant 0 : i32
    %c0_i32_2 = arith.constant 0 : i32
    return %c0_i32, %c0_i32_0, %c0_i32_1 : i32, i32, i32
  }
  func.func @transform_2(%arg0: i32) -> (i32, i32, i32) {
    %c0_i32 = arith.constant 0 : i32
    %c0_i32_0 = arith.constant 0 : i32
    %c0_i32_1 = arith.constant 0 : i32
    %c0_i32_2 = arith.constant 0 : i32
    return %c0_i32, %c0_i32_0, %c0_i32_1 : i32, i32, i32
  }
  func.func @transform_3(%arg0: i32) -> (i32, i32) {
    %c0_i32 = arith.constant 0 : i32
    %c0_i32_0 = arith.constant 0 : i32
    %c0_i32_1 = arith.constant 0 : i32
    return %c0_i32, %c0_i32_0 : i32, i32
  }
  func.func @transform_4(%arg0: i32) -> (i32, i32) {
    %c0_i32 = arith.constant 0 : i32
    %c0_i32_0 = arith.constant 0 : i32
    %c0_i32_1 = arith.constant 0 : i32
    return %c0_i32, %c0_i32_0 : i32, i32
  }
  func.func @transform_5(%arg0: i32) -> (i32, i32) {
    %c0_i32 = arith.constant 0 : i32
    %c0_i32_0 = arith.constant 0 : i32
    %c0_i32_1 = arith.constant 0 : i32
    return %c0_i32, %c0_i32_0 : i32, i32
  }
  func.func @transform_6(%arg0: i32) -> (i32, i32) {
    %c0_i32 = arith.constant 0 : i32
    %c0_i32_0 = arith.constant 0 : i32
    %c0_i32_1 = arith.constant 0 : i32
    return %c0_i32, %c0_i32_0 : i32, i32
  }
  func.func @transform_7(%arg0: i32) -> (i32, i32, i32) {
    %c0_i32 = arith.constant 0 : i32
    %c0_i32_0 = arith.constant 0 : i32
    %c0_i32_1 = arith.constant 0 : i32
    return %arg0, %c0_i32, %c0_i32_0 : i32, i32, i32
  }
}

</mosaic_0001>

<llo_original>
// kernel: tpu_custom_call.1
$region0: #{tpu_custom_call.1}
  #allocation0 [shape = 'u32[]', space=smem, size = 0x4, offset = 0x4, fixed_abs, tag = 'smem constant byte address 0x4 - core index']
  #allocation1 [shape = 'u32[144,128]{1,0:T(1,128)}', space=vmem, size = 0x12000, scoped, tag = 'internal scratch']
  #allocation2 [shape = 'f32[81,128]{1,0:T(8,128)}', space=vmem, size = 0xb000, scoped, tag = 'scratch operand']
  #allocation3 [shape = 'f32[81,128]{1,0:T(8,128)}', space=vmem, size = 0xb000, scoped, tag = 'scratch operand']
  %s0 = inlined_call_operand.hbm [shape: f32[2,64,512], index: 0, kind: input, shape index: {}]
  %s1 = inlined_call_operand.hbm [shape: bf16[4,512,128], index: 1, kind: input, shape index: {}]
  %s2 = inlined_call_operand.hbm [shape: bf16[9,128,128], index: 2, kind: input, shape index: {}]
  %s3 = inlined_call_operand.vmem [shape: bf16[128,128], index: 3, kind: input, shape index: {}]
  %s4 = inlined_call_operand.vmem [shape: f32[1,128], index: 4, kind: input, shape index: {}]
  %s5 = inlined_call_operand.vmem [shape: f32[1,128], index: 5, kind: input, shape index: {}]
  %s6 = inlined_call_operand.vmem [shape: f32[61,1], index: 6, kind: input, shape index: {}]
  %s7 = inlined_call_operand.vmem [shape: f32[2,81,128], index: 7, kind: output, shape index: {}]
  %s8 = sld [smem:[#allocation0]]
  $region73: #{tpu_custom_call.1} parent=0
    _
  %s10 = ssub.s32 1, %s8
  %s11 = scalar_select 0, %s10, %s8
  $region1: #{tpu_custom_call.1} parent=0
    #allocation4 [shape = 'u8[262144]{0}', space=vmem, size = 0x40000, scoped, tag = 'input window, operand 0']
    #allocation5 [shape = 's32[2]{0}', space=sflag, size = 0x8, scoped, tag = 'scoped memory for tpu_custom_call.1']
    #allocation6 [shape = 'u8[524288]{0}', space=vmem, size = 0x80000, scoped, tag = 'input window, operand 1, single buffered']
    #allocation7 [shape = 's32[1]{0}', space=sflag, size = 0x4, scoped, tag = 'scoped memory for tpu_custom_call.1']
    #allocation8 [shape = 'u8[294912]{0}', space=vmem, size = 0x48000, scoped, tag = 'input window, operand 2, single buffered']
    %12 = vsyncpa [#allocation5], 0
    %s13 = scalar_lea.sflag [#allocation5], 1
    %14 = vsyncpa %s13, 0
    %15 = vsyncpa [#allocation7], 0
    loop: start=0, step=1, limit=4
    $region2: #{tpu_custom_call.1} parent=1 // loop_pre_header
      _
    $region3: #{tpu_custom_call.1} parent=1 // loop_header
      %s17 = sphi 0, %s21
      %p18 = scmp.ge.s32.totalorder %s17, 4
      %s27 = sphi 0, %s29
      %s30 = sphi 0, %s27
      %s31 = sphi 0, %s30
      %s47 = sphi 0, %s31
      %s51 = sphi 0, %s51
      %s53 = sphi 0, %s51
      %s54 = sphi 0, %s53
      %s68 = sphi 0, %s54
      %s72 = sphi 0, %s72
      %s74 = sphi 0, %s72
      %s75 = sphi 0, %s74
      %s89 = sphi 0, %s75
      %s93 = sphi 0, %s93
      %s95 = sphi 0, %s93
      %s96 = sphi 0, %s95
      %s110 = sphi 0, %s96
      %s114 = sphi 0, %s114
      %s116 = sphi 0, %s114
      %s117 = sphi 0, %s116
      %s131 = sphi 0, %s117
      %s135 = sphi 0, %s135
      %s137 = sphi 0, %s135
      %s138 = sphi 0, %s137
      %s152 = sphi 0, %s138
      %s156 = sphi 0, %s156
      %s158 = sphi 0, %s156
      %s159 = sphi 0, %s158
      %s173 = sphi 0, %s159
      %s179 = sphi 0, %s181
      %s182 = sphi 0, %s179
      %s183 = sphi 0, %s182
      %s199 = sphi 0, %s183
    $region4: #{tpu_custom_call.1} parent=1 // loop_header_branch
      %20 = sbr.rel (%p18) target = $region8
    $region5: #{tpu_custom_call.1} parent=1 // loop_body
      %s22 = ssub.s32 %s17, 1
      %s23 = ssub.s32 %s17, 2
      %s24 = sadd.s32 %s17, 1
      %s25 = ssub.s32 %s17, %s24
      %p26 = scmp.eq.s32.totalorder %s25, 0
      %s28 = sadd.s32 %s27, 1
      %s29 = scalar_select %p26, %s27, %s28
      %p32 = pneg %p26
      %p33 = scmp.eq.s32.totalorder %s17, 1
      %p34 = por %p32, %p33
      %p35 = scmp.ne.s32.totalorder %s27, %s30
      %p36 = scmp.eq.s32.totalorder %s17, 0
      %p37 = por %p35, %p36
      %p38 = scmp.ne.s32.totalorder %s27, %s30
      %p39 = scmp.eq.s32.totalorder %s22, 1
      %p40 = por %p38, %p39
      %p41 = scmp.ne.s32.totalorder %s30, %s31
      %p42 = scmp.eq.s32.totalorder %s22, 0
      %p43 = por %p41, %p42
      %p44 = scmp.ne.s32.totalorder %s30, %s31
      %p45 = scmp.eq.s32.totalorder %s23, 1
      %p46 = por %p44, %p45
      %p48 = scmp.ne.s32.totalorder %s31, %s47
      %p49 = scmp.eq.s32.totalorder %s23, 0
      %p50 = por %p48, %p49
      %s52 = sadd.s32 %s51, 1
      %p55 = scmp.eq.s32.totalorder %s17, 1
      %p56 = scmp.ne.s32.totalorder %s51, %s53
      %p57 = scmp.eq.s32.totalorder %s17, 0
      %p58 = por %p56, %p57
      %p59 = scmp.ne.s32.totalorder %s51, %s53
      %p60 = scmp.eq.s32.totalorder %s22, 1
      %p61 = por %p59, %p60
      %p62 = scmp.ne.s32.totalorder %s53, %s54
      %p63 = scmp.eq.s32.totalorder %s22, 0
      %p64 = por %p62, %p63
      %p65 = scmp.ne.s32.totalorder %s53, %s54
      %p66 = scmp.eq.s32.totalorder %s23, 1
      %p67 = por %p65, %p66
      %p69 = scmp.ne.s32.totalorder %s54, %s68
      %p70 = scmp.eq.s32.totalorder %s23, 0
      %p71 = por %p69, %p70
      %s73 = sadd.s32 %s72, 1
      %p76 = scmp.eq.s32.totalorder %s17, 1
      %p77 = scmp.ne.s32.totalorder %s72, %s74
      %p78 = scmp.eq.s32.totalorder %s17, 0
      %p79 = por %p77, %p78
      %p80 = scmp.ne.s32.totalorder %s72, %s74
      %p81 = scmp.eq.s32.totalorder %s22, 1
      %p82 = por %p80, %p81
      %p83 = scmp.ne.s32.totalorder %s74, %s75
      %p84 = scmp.eq.s32.totalorder %s22, 0
      %p85 = por %p83, %p84
      %p86 = scmp.ne.s32.totalorder %s74, %s75
      %p87 = scmp.eq.s32.totalorder %s23, 1
      %p88 = por %p86, %p87
      %p90 = scmp.ne.s32.totalorder %s75, %s89
      %p91 = scmp.eq.s32.totalorder %s23, 0
      %p92 = por %p90, %p91
      %s94 = sadd.s32 %s93, 1
      %p97 = scmp.eq.s32.totalorder %s17, 1
      %p98 = scmp.ne.s32.totalorder %s93, %s95
      %p99 = scmp.eq.s32.totalorder %s17, 0
      %p100 = por %p98, %p99
      %p101 = scmp.ne.s32.totalorder %s93, %s95
      %p102 = scmp.eq.s32.totalorder %s22, 1
      %p103 = por %p101, %p102
      %p104 = scmp.ne.s32.totalorder %s95, %s96
      %p105 = scmp.eq.s32.totalorder %s22, 0
      %p106 = por %p104, %p105
      %p107 = scmp.ne.s32.totalorder %s95, %s96
      %p108 = scmp.eq.s32.totalorder %s23, 1
      %p109 = por %p107, %p108
      %p111 = scmp.ne.s32.totalorder %s96, %s110
      %p112 = scmp.eq.s32.totalorder %s23, 0
      %p113 = por %p111, %p112
      %s115 = sadd.s32 %s114, 1
      %p118 = scmp.eq.s32.totalorder %s17, 1
      %p119 = scmp.ne.s32.totalorder %s114, %s116
      %p120 = scmp.eq.s32.totalorder %s17, 0
      %p121 = por %p119, %p120
      %p122 = scmp.ne.s32.totalorder %s114, %s116
      %p123 = scmp.eq.s32.totalorder %s22, 1
      %p124 = por %p122, %p123
      %p125 = scmp.ne.s32.totalorder %s116, %s117
      %p126 = scmp.eq.s32.totalorder %s22, 0
      %p127 = por %p125, %p126
      %p128 = scmp.ne.s32.totalorder %s116, %s117
      %p129 = scmp.eq.s32.totalorder %s23, 1
      %p130 = por %p128, %p129
      %p132 = scmp.ne.s32.totalorder %s117, %s131
      %p133 = scmp.eq.s32.totalorder %s23, 0
      %p134 = por %p132, %p133
      %s136 = sadd.s32 %s135, 1
      %p139 = scmp.eq.s32.totalorder %s17, 1
      %p140 = scmp.ne.s32.totalorder %s135, %s137
      %p141 = scmp.eq.s32.totalorder %s17, 0
      %p142 = por %p140, %p141
      %p143 = scmp.ne.s32.totalorder %s135, %s137
      %p144 = scmp.eq.s32.totalorder %s22, 1
      %p145 = por %p143, %p144
      %p146 = scmp.ne.s32.totalorder %s137, %s138
      %p147 = scmp.eq.s32.totalorder %s22, 0
      %p148 = por %p146, %p147
      %p149 = scmp.ne.s32.totalorder %s137, %s138
      %p150 = scmp.eq.s32.totalorder %s23, 1
      %p151 = por %p149, %p150
      %p153 = scmp.ne.s32.totalorder %s138, %s152
      %p154 = scmp.eq.s32.totalorder %s23, 0
      %p155 = por %p153, %p154
      %s157 = sadd.s32 %s156, 1
      %p160 = scmp.eq.s32.totalorder %s17, 1
      %p161 = scmp.ne.s32.totalorder %s156, %s158
      %p162 = scmp.eq.s32.totalorder %s17, 0
      %p163 = por %p161, %p162
      %p164 = scmp.ne.s32.totalorder %s156, %s158
      %p165 = scmp.eq.s32.totalorder %s22, 1
      %p166 = por %p164, %p165
      %p167 = scmp.ne.s32.totalorder %s158, %s159
      %p168 = scmp.eq.s32.totalorder %s22, 0
      %p169 = por %p167, %p168
      %p170 = scmp.ne.s32.totalorder %s158, %s159
      %p171 = scmp.eq.s32.totalorder %s23, 1
      %p172 = por %p170, %p171
      %p174 = scmp.ne.s32.totalorder %s159, %s173
      %p175 = scmp.eq.s32.totalorder %s23, 0
      %p176 = por %p174, %p175
      %s177 = ssub.s32 %s17, %s24
      %p178 = scmp.eq.s32.totalorder %s177, 0
      %s180 = sadd.s32 %s179, 1
      %s181 = scalar_select %p178, %s179, %s180
      %p184 = pneg %p178
      %p185 = scmp.eq.s32.totalorder %s17, 1
      %p186 = por %p184, %p185
      %p187 = scmp.ne.s32.totalorder %s179, %s182
      %p188 = scmp.eq.s32.totalorder %s17, 0
      %p189 = por %p187, %p188
      %p190 = scmp.ne.s32.totalorder %s179, %s182
      %p191 = scmp.eq.s32.totalorder %s22, 1
      %p192 = por %p190, %p191
      %p193 = scmp.ne.s32.totalorder %s182, %s183
      %p194 = scmp.eq.s32.totalorder %s22, 0
      %p195 = por %p193, %p194
      %p196 = scmp.ne.s32.totalorder %s182, %s183
      %p197 = scmp.eq.s32.totalorder %s23, 1
      %p198 = por %p196, %p197
      %p200 = scmp.ne.s32.totalorder %s183, %s199
      %p201 = scmp.eq.s32.totalorder %s23, 0
      %p202 = por %p200, %p201
      %p203 = scmp.le.s32.totalorder 1, %s17
      %p204 = scmp.lt.s32.totalorder %s17, 3
      %p205 = pnand %p203, %p204
      %p206 = pneg %p205
      // Predicated region
      $region9: #{tpu_custom_call.1} parent=5 // pred_check
        _
      $region10: #{tpu_custom_call.1} parent=5 // pred_check_branch
        %208 = sbr.rel (%p205) target = $region12
      $region11: #{tpu_custom_call.1} parent=5 // pred_region
        %s209 = ssub.s32 %s17, 1
        // Predicated region
        $region13: #{tpu_custom_call.1} parent=11 // pred_check
          %p210 = pneg %p64
        $region14: #{tpu_custom_call.1} parent=11 // pred_check_branch
          %212 = sbr.rel (%p210) target = $region16
        $region15: #{tpu_custom_call.1} parent=11 // pred_region
          %s214 = ssub.s32 16384, 16384
          %215 = vsyncadd [#allocation7], %s214
          %s216 = sshll.u32 [#allocation6], 4
          %s217 = int_to_ptr.vmem [resolvable:$true] %s216
          %222 = dma.hbm_to_vmem [thread:$0]  %s1, 16384, %s217, [#allocation7], 64, 64, 4
        $region16: #{tpu_custom_call.1} parent=11 // pred_fallthru
          _
        // Predicated region
        $region17: #{tpu_custom_call.1} parent=11 // pred_check
          %p223 = pneg %p85
        $region18: #{tpu_custom_call.1} parent=11 // pred_check_branch
          %225 = sbr.rel (%p223) target = $region20
        $region19: #{tpu_custom_call.1} parent=11 // pred_region
          %s227 = ssub.s32 9216, 9216
          %228 = vsyncadd [#allocation7], %s227
          %s229 = sshll.u32 [#allocation8], 4
          %s230 = int_to_ptr.vmem [resolvable:$true] %s229
          %235 = dma.hbm_to_vmem [thread:$0]  %s2, 9216, %s230, [#allocation7], 64, 64, 4
        $region20: #{tpu_custom_call.1} parent=11 // pred_fallthru
          _
        // Predicated region
        $region21: #{tpu_custom_call.1} parent=11 // pred_check
          %p236 = pneg %p106
        $region22: #{tpu_custom_call.1} parent=11 // pred_check_branch
          %238 = sbr.rel (%p236) target = $region24
        $region23: #{tpu_custom_call.1} parent=11 // pred_region
          _
        $region24: #{tpu_custom_call.1} parent=11 // pred_fallthru
          _
        // Predicated region
        $region25: #{tpu_custom_call.1} parent=11 // pred_check
          %p239 = pneg %p127
        $region26: #{tpu_custom_call.1} parent=11 // pred_check_branch
          %241 = sbr.rel (%p239) target = $region28
        $region27: #{tpu_custom_call.1} parent=11 // pred_region
          _
        $region28: #{tpu_custom_call.1} parent=11 // pred_fallthru
          _
        // Predicated region
        $region29: #{tpu_custom_call.1} parent=11 // pred_check
          %p242 = pneg %p148
        $region30: #{tpu_custom_call.1} parent=11 // pred_check_branch
          %244 = sbr.rel (%p242) target = $region32
        $region31: #{tpu_custom_call.1} parent=11 // pred_region
          _
        $region32: #{tpu_custom_call.1} parent=11 // pred_fallthru
          _
        // Predicated region
        $region33: #{tpu_custom_call.1} parent=11 // pred_check
          %p245 = pneg %p169
        $region34: #{tpu_custom_call.1} parent=11 // pred_check_branch
          %247 = sbr.rel (%p245) target = $region36
        $region35: #{tpu_custom_call.1} parent=11 // pred_region
          _
        $region36: #{tpu_custom_call.1} parent=11 // pred_fallthru
          _
      $region12: #{tpu_custom_call.1} parent=5 // pred_fallthru
        _
      %p248 = scmp.lt.s32.totalorder %s17, 2
      // Predicated region
      $region37: #{tpu_custom_call.1} parent=5 // pred_check
        %p249 = pneg %p248
      $region38: #{tpu_custom_call.1} parent=5 // pred_check_branch
        %251 = sbr.rel (%p249) target = $region40
      $region39: #{tpu_custom_call.1} parent=5 // pred_region
        // Predicated region
        $region41: #{tpu_custom_call.1} parent=39 // pred_check
          %p252 = pneg %p37
        $region42: #{tpu_custom_call.1} parent=39 // pred_check_branch
          %254 = sbr.rel (%p252) target = $region44
        $region43: #{tpu_custom_call.1} parent=39 // pred_region
          %s255 = sand.u32 %s27, 1
          %s256 = scalar_lea.sflag [#allocation5], %s255
          %s257 = sand.u32 %s27, 1
          %s258 = smul.addr %s257, 256
          %s259 = scalar_lea.vmem [#allocation4], %s258
          %s261 = ssub.s32 4096, 4096
          %262 = vsyncadd %s256, %s261
          %s263 = smul.addr %s17, 32
          %s264 = smul.addr %s263, 128
          %s265 = scalar_lea.hbm %s0, %s264
          %s266 = sshll.u32 %s259, 4
          %s267 = int_to_ptr.vmem [resolvable:$true] %s266
          %272 = dma.hbm_to_vmem [thread:$0]  %s265, 4096, %s267, %s256, 512, 512, 32
        $region44: #{tpu_custom_call.1} parent=39 // pred_fallthru
          _
      $region40: #{tpu_custom_call.1} parent=5 // pred_fallthru
        _
      %p273 = scmp.le.s32.totalorder 1, %s17
      %p274 = scmp.lt.s32.totalorder %s17, 3
      %p275 = pnand %p273, %p274
      %p276 = pneg %p275
      // Predicated region
      $region45: #{tpu_custom_call.1} parent=5 // pred_check
        _
      $region46: #{tpu_custom_call.1} parent=5 // pred_check_branch
        %278 = sbr.rel (%p275) target = $region48
      $region47: #{tpu_custom_call.1} parent=5 // pred_region
        %s279 = ssub.s32 %s17, 1
        %s280 = sand.u32 %s30, 1
        %s281 = scalar_lea.sflag [#allocation5], %s280
        %s282 = sand.u32 %s30, 1
        %s283 = smul.addr %s282, 256
        %s284 = scalar_lea.vmem [#allocation4], %s283
        // Predicated region
        $region49: #{tpu_custom_call.1} parent=47 // pred_check
          %p285 = pneg %p43
        $region50: #{tpu_custom_call.1} parent=47 // pred_check_branch
          %287 = sbr.rel (%p285) target = $region52
        $region51: #{tpu_custom_call.1} parent=47 // pred_region
          %288 = dma.done %s281, 4096
        $region52: #{tpu_custom_call.1} parent=47 // pred_fallthru
          _
        // Predicated region
        $region53: #{tpu_custom_call.1} parent=47 // pred_check
          %p289 = pneg %p64
        $region54: #{tpu_custom_call.1} parent=47 // pred_check_branch
          %291 = sbr.rel (%p289) target = $region56
        $region55: #{tpu_custom_call.1} parent=47 // pred_region
          %292 = dma.done [#allocation7], 16384
        $region56: #{tpu_custom_call.1} parent=47 // pred_fallthru
          _
        // Predicated region
        $region57: #{tpu_custom_call.1} parent=47 // pred_check
          %p293 = pneg %p85
        $region58: #{tpu_custom_call.1} parent=47 // pred_check_branch
          %295 = sbr.rel (%p293) target = $region60
        $region59: #{tpu_custom_call.1} parent=47 // pred_region
          %296 = dma.done [#allocation7], 9216
        $region60: #{tpu_custom_call.1} parent=47 // pred_fallthru
          _
        %s297 = sand.u32 %s30, 1
        %s298 = scalar_lea.sflag [#allocation5], %s297
        %s299 = sand.u32 %s30, 1
        %s300 = smul.addr %s299, 256
        %s301 = scalar_lea.vmem [#allocation4], %s300
        %p302 = pneg %p43
        %p303 = pneg %p40
        %p304 = pneg %p64
        %p305 = pneg %p61
        %p306 = pneg %p85
        %p307 = pneg %p82
        %p308 = pneg %p106
        %p309 = pneg %p103
        %p310 = pneg %p127
        %p311 = pneg %p124
        %p312 = pneg %p148
        %p313 = pneg %p145
        %p314 = pneg %p169
        %p315 = pneg %p166
        %p316 = pneg %p195
        %p317 = pneg %p192
        %p318 = scmp.lt.s32.totalorder %s22, 1
        %s319 = scalar_select %p318, %s22, 1
        %s320 = smul.addr %s319, 11
        %s321 = smul.addr %s320, 8
        %s322 = scalar_lea.vmem %s7, %s321
        %p323 = scmp.lt.s32.totalorder %s22, 1
        %s324 = scalar_select %p323, %s22, 1
        %s325 = smul.addr %s324, 11
        %s326 = smul.addr %s325, 8
        %s327 = scalar_lea.vmem %s7, %s326
        %v329 = vld [vmem:[%s284] sm:$0xff]
        %v330 = vld [vmem:[%s284 + $0x8] sm:$0xff]
        %v331 = vld [vmem:[%s284 + $0x10] sm:$0xff]
        %v332 = vld [vmem:[%s284 + $0x18] sm:$0xff]
        %v333 = vld [vmem:[%s284 + $0x20] sm:$0xff]
        %v334 = vld [vmem:[%s284 + $0x28] sm:$0xff]
        %v335 = vld [vmem:[%s284 + $0x30] sm:$0xff]
        %v336 = vld [vmem:[%s284 + $0x38] sm:$0xff]
        %v337 = vld [vmem:[%s284 + $0x40] sm:$0xff]
        %v338 = vld [vmem:[%s284 + $0x48] sm:$0xff]
        %v339 = vld [vmem:[%s284 + $0x50] sm:$0xff]
        %v340 = vld [vmem:[%s284 + $0x58] sm:$0xff]
        %v341 = vld [vmem:[%s284 + $0x60] sm:$0xff]
        %v342 = vld [vmem:[%s284 + $0x68] sm:$0xff]
        %v343 = vld [vmem:[%s284 + $0x70] sm:$0xff]
        %v344 = vld [vmem:[%s284 + $0x78] sm:$0xff]
        %v345 = vld [vmem:[%s284 + $0x80] sm:$0xff]
        %v346 = vld [vmem:[%s284 + $0x88] sm:$0xff]
        %v347 = vld [vmem:[%s284 + $0x90] sm:$0xff]
        %v348 = vld [vmem:[%s284 + $0x98] sm:$0xff]
        %v349 = vld [vmem:[%s284 + $0xa0] sm:$0xff]
        %v350 = vld [vmem:[%s284 + $0xa8] sm:$0xff]
        %v351 = vld [vmem:[%s284 + $0xb0] sm:$0xff]
        %v352 = vld [vmem:[%s284 + $0xb8] sm:$0xff]
        %v353 = vld [vmem:[%s284 + $0xc0] sm:$0x7f]
        %v354 = vld [vmem:[%s284 + $0xc8] sm:$0x7f]
        %v355 = vld [vmem:[%s284 + $0xd0] sm:$0x7f]
        %v356 = vld [vmem:[%s284 + $0xd8] sm:$0x7f]
        %v357 = vpack.c.bf16 %v333, %v329
        %v358 = vpack.c.bf16 %v334, %v330
        %v359 = vpack.c.bf16 %v335, %v331
        %v360 = vpack.c.bf16 %v336, %v332
        %v361 = vpack.c.bf16 %v341, %v337
        %v362 = vpack.c.bf16 %v342, %v338
        %v363 = vpack.c.bf16 %v343, %v339
        %v364 = vpack.c.bf16 %v344, %v340
        %v365 = vpack.c.bf16 %v349, %v345
        %v366 = vpack.c.bf16 %v350, %v346
        %v367 = vpack.c.bf16 %v351, %v347
        %v368 = vpack.c.bf16 %v352, %v348
        %v369 = vpack.c.bf16 %v353, %v353
        %v370 = vpack.c.bf16 %v354, %v354
        %v371 = vpack.c.bf16 %v355, %v355
        %v372 = vpack.c.bf16 %v356, %v356
        %v373 = vld [vmem:[#allocation6] sm:$0xf]
        %v374 = vld [vmem:[#allocation6 + $0x4] sm:$0xf]
        %v375 = vld [vmem:[#allocation6 + $0x8] sm:$0xf]
        %v376 = vld [vmem:[#allocation6 + $0xc] sm:$0xf]
        %v377 = vld [vmem:[#allocation6 + $0x10] sm:$0xf]
        %v378 = vld [vmem:[#allocation6 + $0x14] sm:$0xf]
        %v379 = vld [vmem:[#allocation6 + $0x18] sm:$0xf]
        %v380 = vld [vmem:[#allocation6 + $0x1c] sm:$0xf]
        %v381 = vld [vmem:[#allocation6 + $0x20] sm:$0xf]
        %v382 = vld [vmem:[#allocation6 + $0x24] sm:$0xf]
        %v383 = vld [vmem:[#allocation6 + $0x28] sm:$0xf]
        %v384 = vld [vmem:[#allocation6 + $0x2c] sm:$0xf]
        %v385 = vld [vmem:[#allocation6 + $0x30] sm:$0xf]
        %v386 = vld [vmem:[#allocation6 + $0x34] sm:$0xf]
        %v387 = vld [vmem:[#allocation6 + $0x38] sm:$0xf]
        %v388 = vld [vmem:[#allocation6 + $0x3c] sm:$0xf]
        %v389 = vld [vmem:[#allocation6 + $0x40] sm:$0xf]
        %v390 = vld [vmem:[#allocation6 + $0x44] sm:$0xf]
        %v391 = vld [vmem:[#allocation6 + $0x48] sm:$0xf]
        %v392 = vld [vmem:[#allocation6 + $0x4c] sm:$0xf]
        %v393 = vld [vmem:[#allocation6 + $0x50] sm:$0xf]
        %v394 = vld [vmem:[#allocation6 + $0x54] sm:$0xf]
        %v395 = vld [vmem:[#allocation6 + $0x58] sm:$0xf]
        %v396 = vld [vmem:[#allocation6 + $0x5c] sm:$0xf]
        %v397 = vld [vmem:[#allocation6 + $0x60] sm:$0xf]
        %v398 = vld [vmem:[#allocation6 + $0x64] sm:$0xf]
        %v399 = vld [vmem:[#allocation6 + $0x68] sm:$0xf]
        %v400 = vld [vmem:[#allocation6 + $0x6c] sm:$0xf]
        %v401 = vld [vmem:[#allocation6 + $0x70] sm:$0xf]
        %v402 = vld [vmem:[#allocation6 + $0x74] sm:$0xf]
        %v403 = vld [vmem:[#allocation6 + $0x78] sm:$0xf]
        %v404 = vld [vmem:[#allocation6 + $0x7c] sm:$0xf]
        %v405 = vld [vmem:[#allocation6 + $0x80] sm:$0xf]
        %v406 = vld [vmem:[#allocation6 + $0x84] sm:$0xf]
        %v407 = vld [vmem:[#allocation6 + $0x88] sm:$0xf]
        %v408 = vld [vmem:[#allocation6 + $0x8c] sm:$0xf]
        %v409 = vld [vmem:[#allocation6 + $0x90] sm:$0xf]
        %v410 = vld [vmem:[#allocation6 + $0x94] sm:$0xf]
        %v411 = vld [vmem:[#allocation6 + $0x98] sm:$0xf]
        %v412 = vld [vmem:[#allocation6 + $0x9c] sm:$0xf]
        %v413 = vld [vmem:[#allocation6 + $0xa0] sm:$0xf]
        %v414 = vld [vmem:[#allocation6 + $0xa4] sm:$0xf]
        %v415 = vld [vmem:[#allocation6 + $0xa8] sm:$0xf]
        %v416 = vld [vmem:[#allocation6 + $0xac] sm:$0xf]
        %v417 = vld [vmem:[#allocation6 + $0xb0] sm:$0xf]
        %v418 = vld [vmem:[#allocation6 + $0xb4] sm:$0xf]
        %v419 = vld [vmem:[#allocation6 + $0xb8] sm:$0xf]
        %v420 = vld [vmem:[#allocation6 + $0xbc] sm:$0xf]
        %v421 = vld [vmem:[#allocation6 + $0xc0] sm:$0xf]
        %v422 = vld [vmem:[#allocation6 + $0xc4] sm:$0xf]
        %v423 = vld [vmem:[#allocation6 + $0xc8] sm:$0xf]
        %v424 = vld [vmem:[#allocation6 + $0xcc] sm:$0xf]
        %v425 = vld [vmem:[#allocation6 + $0xd0] sm:$0xf]
        %v426 = vld [vmem:[#allocation6 + $0xd4] sm:$0xf]
        %v427 = vld [vmem:[#allocation6 + $0xd8] sm:$0xf]
        %v428 = vld [vmem:[#allocation6 + $0xdc] sm:$0xf]
        %v429 = vld [vmem:[#allocation6 + $0xe0] sm:$0xf]
        %v430 = vld [vmem:[#allocation6 + $0xe4] sm:$0xf]
        %v431 = vld [vmem:[#allocation6 + $0xe8] sm:$0xf]
        %v432 = vld [vmem:[#allocation6 + $0xec] sm:$0xf]
        %v433 = vld [vmem:[#allocation6 + $0xf0] sm:$0xf]
        %v434 = vld [vmem:[#allocation6 + $0xf4] sm:$0xf]
        %v435 = vld [vmem:[#allocation6 + $0xf8] sm:$0xf]
        %v436 = vld [vmem:[#allocation6 + $0xfc] sm:$0xf]
        %v437 = vld [vmem:[%s284] sm:$0xfe]
        %v438 = vld [vmem:[%s284 + $0x8] sm:$0xfe]
        %v439 = vld [vmem:[%s284 + $0x10] sm:$0xfe]
        %v440 = vld [vmem:[%s284 + $0x18] sm:$0xfe]
        %v441 = vld [vmem:[%s284 + $0xc0] sm:$0xff]
        %v442 = vld [vmem:[%s284 + $0xc8] sm:$0xff]
        %v443 = vld [vmem:[%s284 + $0xd0] sm:$0xff]
        %v444 = vld [vmem:[%s284 + $0xd8] sm:$0xff]
        %v445 = vpack.c.bf16 %v333, %v437
        %v446 = vpack.c.bf16 %v334, %v438
        %v447 = vpack.c.bf16 %v335, %v439
        %v448 = vpack.c.bf16 %v336, %v440
        %v449 = vpack.c.bf16 %v441, %v441
        %v450 = vpack.c.bf16 %v442, %v442
        %v451 = vpack.c.bf16 %v443, %v443
        %v452 = vpack.c.bf16 %v444, %v444
        %s453 = scalar_lea.vmem [#allocation6], 256
        %v454 = vld [vmem:[%s453] sm:$0xf]
        %v455 = vld [vmem:[%s453 + $0x4] sm:$0xf]
        %v456 = vld [vmem:[%s453 + $0x8] sm:$0xf]
        %v457 = vld [vmem:[%s453 + $0xc] sm:$0xf]
        %v458 = vld [vmem:[%s453 + $0x10] sm:$0xf]
        %v459 = vld [vmem:[%s453 + $0x14] sm:$0xf]
        %v460 = vld [vmem:[%s453 + $0x18] sm:$0xf]
        %v461 = vld [vmem:[%s453 + $0x1c] sm:$0xf]
        %v462 = vld [vmem:[%s453 + $0x20] sm:$0xf]
        %v463 = vld [vmem:[%s453 + $0x24] sm:$0xf]
        %v464 = vld [vmem:[%s453 + $0x28] sm:$0xf]
        %v465 = vld [vmem:[%s453 + $0x2c] sm:$0xf]
        %v466 = vld [vmem:[%s453 + $0x30] sm:$0xf]
        %v467 = vld [vmem:[%s453 + $0x34] sm:$0xf]
        %v468 = vld [vmem:[%s453 + $0x38] sm:$0xf]
        %v469 = vld [vmem:[%s453 + $0x3c] sm:$0xf]
        %v470 = vld [vmem:[%s453 + $0x40] sm:$0xf]
        %v471 = vld [vmem:[%s453 + $0x44] sm:$0xf]
        %v472 = vld [vmem:[%s453 + $0x48] sm:$0xf]
        %v473 = vld [vmem:[%s453 + $0x4c] sm:$0xf]
        %v474 = vld [vmem:[%s453 + $0x50] sm:$0xf]
        %v475 = vld [vmem:[%s453 + $0x54] sm:$0xf]
        %v476 = vld [vmem:[%s453 + $0x58] sm:$0xf]
        %v477 = vld [vmem:[%s453 + $0x5c] sm:$0xf]
        %v478 = vld [vmem:[%s453 + $0x60] sm:$0xf]
        %v479 = vld [vmem:[%s453 + $0x64] sm:$0xf]
        %v480 = vld [vmem:[%s453 + $0x68] sm:$0xf]
        %v481 = vld [vmem:[%s453 + $0x6c] sm:$0xf]
        %v482 = vld [vmem:[%s453 + $0x70] sm:$0xf]
        %v483 = vld [vmem:[%s453 + $0x74] sm:$0xf]
        %v484 = vld [vmem:[%s453 + $0x78] sm:$0xf]
        %v485 = vld [vmem:[%s453 + $0x7c] sm:$0xf]
        %v486 = vld [vmem:[%s453 + $0x80] sm:$0xf]
        %v487 = vld [vmem:[%s453 + $0x84] sm:$0xf]
        %v488 = vld [vmem:[%s453 + $0x88] sm:$0xf]
        %v489 = vld [vmem:[%s453 + $0x8c] sm:$0xf]
        %v490 = vld [vmem:[%s453 + $0x90] sm:$0xf]
        %v491 = vld [vmem:[%s453 + $0x94] sm:$0xf]
        %v492 = vld [vmem:[%s453 + $0x98] sm:$0xf]
        %v493 = vld [vmem:[%s453 + $0x9c] sm:$0xf]
        %v494 = vld [vmem:[%s453 + $0xa0] sm:$0xf]
        %v495 = vld [vmem:[%s453 + $0xa4] sm:$0xf]
        %v496 = vld [vmem:[%s453 + $0xa8] sm:$0xf]
        %v497 = vld [vmem:[%s453 + $0xac] sm:$0xf]
        %v498 = vld [vmem:[%s453 + $0xb0] sm:$0xf]
        %v499 = vld [vmem:[%s453 + $0xb4] sm:$0xf]
        %v500 = vld [vmem:[%s453 + $0xb8] sm:$0xf]
        %v501 = vld [vmem:[%s453 + $0xbc] sm:$0xf]
        %v502 = vld [vmem:[%s453 + $0xc0] sm:$0xf]
        %v503 = vld [vmem:[%s453 + $0xc4] sm:$0xf]
        %v504 = vld [vmem:[%s453 + $0xc8] sm:$0xf]
        %v505 = vld [vmem:[%s453 + $0xcc] sm:$0xf]
        %v506 = vld [vmem:[%s453 + $0xd0] sm:$0xf]
        %v507 = vld [vmem:[%s453 + $0xd4] sm:$0xf]
        %v508 = vld [vmem:[%s453 + $0xd8] sm:$0xf]
        %v509 = vld [vmem:[%s453 + $0xdc] sm:$0xf]
        %v510 = vld [vmem:[%s453 + $0xe0] sm:$0xf]
        %v511 = vld [vmem:[%s453 + $0xe4] sm:$0xf]
        %v512 = vld [vmem:[%s453 + $0xe8] sm:$0xf]
        %v513 = vld [vmem:[%s453 + $0xec] sm:$0xf]
        %v514 = vld [vmem:[%s453 + $0xf0] sm:$0xf]
        %v515 = vld [vmem:[%s453 + $0xf4] sm:$0xf]
        %v516 = vld [vmem:[%s453 + $0xf8] sm:$0xf]
        %v517 = vld [vmem:[%s453 + $0xfc] sm:$0xf]
        %vm518 = vsmask.f32 7424
        %v520 = vshrl.u32 %v445, 16
        %v522 = vshll.u32 %v445, 16
        %v524 = vrot.slane %v522, 1
        %v525 = vor.u32 %v520, %v524
        %v527 = vshll.u32 %v361, 16
        %v529 = vrot.slane %v527, 1
        %v530 = vsel %vm518, %v525, %v529
        %v532 = vshrl.u32 %v446, 16
        %v534 = vshll.u32 %v446, 16
        %v536 = vrot.slane %v534, 1
        %v537 = vor.u32 %v532, %v536
        %v539 = vshll.u32 %v362, 16
        %v541 = vrot.slane %v539, 1
        %v542 = vsel %vm518, %v537, %v541
        %v544 = vshrl.u32 %v447, 16
        %v546 = vshll.u32 %v447, 16
        %v548 = vrot.slane %v546, 1
        %v549 = vor.u32 %v544, %v548
        %v551 = vshll.u32 %v363, 16
        %v553 = vrot.slane %v551, 1
        %v554 = vsel %vm518, %v549, %v553
        %v556 = vshrl.u32 %v448, 16
        %v558 = vshll.u32 %v448, 16
        %v560 = vrot.slane %v558, 1
        %v561 = vor.u32 %v556, %v560
        %v563 = vshll.u32 %v364, 16
        %v565 = vrot.slane %v563, 1
        %v566 = vsel %vm518, %v561, %v565
        %v567 = vshrl.u32 %v361, 16
        %v569 = vor.u32 %v567, %v529
        %v571 = vshll.u32 %v365, 16
        %v573 = vrot.slane %v571, 1
        %v574 = vsel %vm518, %v569, %v573
        %v575 = vshrl.u32 %v362, 16
        %v577 = vor.u32 %v575, %v541
        %v579 = vshll.u32 %v366, 16
        %v581 = vrot.slane %v579, 1
        %v582 = vsel %vm518, %v577, %v581
        %v583 = vshrl.u32 %v363, 16
        %v585 = vor.u32 %v583, %v553
        %v587 = vshll.u32 %v367, 16
        %v589 = vrot.slane %v587, 1
        %v590 = vsel %vm518, %v585, %v589
        %v591 = vshrl.u32 %v364, 16
        %v593 = vor.u32 %v591, %v565
        %v595 = vshll.u32 %v368, 16
        %v597 = vrot.slane %v595, 1
        %v598 = vsel %vm518, %v593, %v597
        %v599 = vshrl.u32 %v365, 16
        %v601 = vor.u32 %v599, %v573
        %v603 = vshll.u32 %v449, 16
        %v605 = vrot.slane %v603, 1
        %v606 = vsel %vm518, %v601, %v605
        %v607 = vshrl.u32 %v366, 16
        %v609 = vor.u32 %v607, %v581
        %v611 = vshll.u32 %v450, 16
        %v613 = vrot.slane %v611, 1
        %v614 = vsel %vm518, %v609, %v613
        %v615 = vshrl.u32 %v367, 16
        %v617 = vor.u32 %v615, %v589
        %v619 = vshll.u32 %v451, 16
        %v621 = vrot.slane %v619, 1
        %v622 = vsel %vm518, %v617, %v621
        %v623 = vshrl.u32 %v368, 16
        %v625 = vor.u32 %v623, %v597
        %v627 = vshll.u32 %v452, 16
        %v629 = vrot.slane %v627, 1
        %v630 = vsel %vm518, %v625, %v629
        %v631 = vshrl.u32 %v449, 16
        %v633 = vor.u32 %v631, %v605
        %v634 = vshrl.u32 %v450, 16
        %v636 = vor.u32 %v634, %v613
        %v637 = vshrl.u32 %v451, 16
        %v639 = vor.u32 %v637, %v621
        %v640 = vshrl.u32 %v452, 16
        %v642 = vor.u32 %v640, %v629
        %v723 = vunpack.c.l.b16 %v454
        %v724 = vunpack.c.l.b16 %v455
        %v725 = vunpack.c.l.b16 %v456
        %v726 = vunpack.c.l.b16 %v457
        %v727 = vunpack.c.l.b16 %v458
        %v728 = vunpack.c.l.b16 %v459
        %v729 = vunpack.c.l.b16 %v460
        %v730 = vunpack.c.l.b16 %v461
        %v731 = vunpack.c.l.b16 %v462
        %v732 = vunpack.c.l.b16 %v463
        %v733 = vunpack.c.l.b16 %v464
        %v734 = vunpack.c.l.b16 %v465
        %v735 = vunpack.c.l.b16 %v466
        %v736 = vunpack.c.l.b16 %v467
        %v737 = vunpack.c.l.b16 %v468
        %v738 = vunpack.c.l.b16 %v469
        %v739 = vunpack.c.l.b16 %v470
        %v740 = vunpack.c.l.b16 %v471
        %v741 = vunpack.c.l.b16 %v472
        %v742 = vunpack.c.l.b16 %v473
        %v743 = vunpack.c.l.b16 %v474
        %v744 = vunpack.c.l.b16 %v475
        %v745 = vunpack.c.l.b16 %v476
        %v746 = vunpack.c.l.b16 %v477
        %v747 = vunpack.c.l.b16 %v478
        %v748 = vunpack.c.l.b16 %v479
        %v749 = vunpack.c.l.b16 %v480
        %v750 = vunpack.c.l.b16 %v481
        %v751 = vunpack.c.l.b16 %v482
        %v752 = vunpack.c.l.b16 %v483
        %v753 = vunpack.c.l.b16 %v484
        %v754 = vunpack.c.l.b16 %v485
        %v755 = vunpack.c.l.b16 %v486
        %v756 = vunpack.c.l.b16 %v487
        %v757 = vunpack.c.l.b16 %v488
        %v758 = vunpack.c.l.b16 %v489
        %v759 = vunpack.c.l.b16 %v490
        %v760 = vunpack.c.l.b16 %v491
        %v761 = vunpack.c.l.b16 %v492
        %v762 = vunpack.c.l.b16 %v493
        %v763 = vunpack.c.l.b16 %v494
        %v764 = vunpack.c.l.b16 %v495
        %v765 = vunpack.c.l.b16 %v496
        %v766 = vunpack.c.l.b16 %v497
        %v767 = vunpack.c.l.b16 %v498
        %v768 = vunpack.c.l.b16 %v499
        %v769 = vunpack.c.l.b16 %v500
        %v770 = vunpack.c.l.b16 %v501
        %v771 = vunpack.c.l.b16 %v502
        %v772 = vunpack.c.l.b16 %v503
        %v773 = vunpack.c.l.b16 %v504
        %v774 = vunpack.c.l.b16 %v505
        %v775 = vunpack.c.l.b16 %v506
        %v776 = vunpack.c.l.b16 %v507
        %v777 = vunpack.c.l.b16 %v508
        %v778 = vunpack.c.l.b16 %v509
        %v779 = vunpack.c.l.b16 %v510
        %v780 = vunpack.c.l.b16 %v511
        %v781 = vunpack.c.l.b16 %v512
        %v782 = vunpack.c.l.b16 %v513
        %v783 = vunpack.c.l.b16 %v514
        %v784 = vunpack.c.l.b16 %v515
        %v785 = vunpack.c.l.b16 %v516
        %v786 = vunpack.c.l.b16 %v517
        %v787 = vpack.c.b16 %v724, %v723
        %v788 = vpack.c.b16 %v726, %v725
        %v789 = vpack.c.b16 %v728, %v727
        %v790 = vpack.c.b16 %v730, %v729
        %v791 = vpack.c.b16 %v732, %v731
        %v792 = vpack.c.b16 %v734, %v733
        %v793 = vpack.c.b16 %v736, %v735
        %v794 = vpack.c.b16 %v738, %v737
        %v795 = vpack.c.b16 %v740, %v739
        %v796 = vpack.c.b16 %v742, %v741
        %v797 = vpack.c.b16 %v744, %v743
        %v798 = vpack.c.b16 %v746, %v745
        %v799 = vpack.c.b16 %v748, %v747
        %v800 = vpack.c.b16 %v750, %v749
        %v801 = vpack.c.b16 %v752, %v751
        %v802 = vpack.c.b16 %v754, %v753
        %v803 = vpack.c.b16 %v756, %v755
        %v804 = vpack.c.b16 %v758, %v757
        %v805 = vpack.c.b16 %v760, %v759
        %v806 = vpack.c.b16 %v762, %v761
        %v807 = vpack.c.b16 %v764, %v763
        %v808 = vpack.c.b16 %v766, %v765
        %v809 = vpack.c.b16 %v768, %v767
        %v810 = vpack.c.b16 %v770, %v769
        %v811 = vpack.c.b16 %v772, %v771
        %v812 = vpack.c.b16 %v774, %v773
        %v813 = vpack.c.b16 %v776, %v775
        %v814 = vpack.c.b16 %v778, %v777
        %v815 = vpack.c.b16 %v780, %v779
        %v816 = vpack.c.b16 %v782, %v781
        %v817 = vpack.c.b16 %v784, %v783
        %v818 = vpack.c.b16 %v786, %v785
        %851 = vmatprep.subr.bf16.mxu0 0
        %852 = vmatpush1.bf16.msra.mxu0 %v794
        %853 = vmatprep.subr.bf16.mxu0 0
        %854 = vmatpush1.bf16.msra.mxu0 %v793
        %855 = vmatprep.subr.bf16.mxu0 0
        %856 = vmatpush1.bf16.msra.mxu0 %v792
        %857 = vmatprep.subr.bf16.mxu0 0
        %858 = vmatpush1.bf16.msra.mxu0 %v791
        %859 = vmatprep.subr.bf16.mxu0 0
        %860 = vmatpush1.bf16.msra.mxu0 %v790
        %861 = vmatprep.subr.bf16.mxu0 0
        %862 = vmatpush1.bf16.msra.mxu0 %v789
        %863 = vmatprep.subr.bf16.mxu0 0
        %864 = vmatpush1.bf16.msra.mxu0 %v788
        %865 = vmatprep.subr.bf16.mxu0 0
        %866 = vmatpush1.bf16.msra.mxu0 %v787
        %867 = vmatprep.subr.bf16.mxu0 0
        %868 = vmatpush2.bf16.msra.mxu0 %v802
        %869 = vmatprep.subr.bf16.mxu0 0
        %870 = vmatpush2.bf16.msra.mxu0 %v801
        %871 = vmatprep.subr.bf16.mxu0 0
        %872 = vmatpush2.bf16.msra.mxu0 %v800
        %873 = vmatprep.subr.bf16.mxu0 0
        %874 = vmatpush2.bf16.msra.mxu0 %v799
        %875 = vmatprep.subr.bf16.mxu0 0
        %876 = vmatpush2.bf16.msra.mxu0 %v798
        %877 = vmatprep.subr.bf16.mxu0 0
        %878 = vmatpush2.bf16.msra.mxu0 %v797
        %879 = vmatprep.subr.bf16.mxu0 0
        %880 = vmatpush2.bf16.msra.mxu0 %v796
        %881 = vmatprep.subr.bf16.mxu0 0
        %882 = vmatpush2.bf16.msra.mxu0 %v795
        %883 = vmatprep.mubr.bf16.mxu0 %v542
        %884 = vmatmul.mubr.bf16.gmra.mxu0 %v530
        %v885 = vpop.f32.mrf.mxu0
        %v886 = vadd.f32 0.0, %v885
        %v887 = vpop.f32.mrf.mxu0
        %v888 = vpop.f32.mrf.mxu0
        %v889 = vadd.f32 0.0, %v888
        %v890 = vpop.f32.mrf.mxu0
        %891 = vmatprep.mubr.bf16.mxu0 %v582
        %892 = vmatmul.mubr.bf16.gmra.mxu0 %v574
        %v893 = vpop.f32.mrf.mxu0
        %v894 = vadd.f32 0.0, %v893
        %v895 = vpop.f32.mrf.mxu0
        %v896 = vpop.f32.mrf.mxu0
        %v897 = vadd.f32 0.0, %v896
        %v898 = vpop.f32.mrf.mxu0
        %899 = vmatprep.mubr.bf16.mxu0 %v614
        %900 = vmatmul.mubr.bf16.gmra.mxu0 %v606
        %v901 = vpop.f32.mrf.mxu0
        %v902 = vadd.f32 0.0, %v901
        %v903 = vpop.f32.mrf.mxu0
        %v904 = vpop.f32.mrf.mxu0
        %v905 = vadd.f32 0.0, %v904
        %v906 = vpop.f32.mrf.mxu0
        %907 = vmatprep.mubr.bf16.mxu0 %v636
        %908 = vmatmul.mubr.bf16.gmra.mxu0 %v633
        %v909 = vpop.f32.mrf.mxu0
        %v910 = vadd.f32 0.0, %v909
        %v911 = vpop.f32.mrf.mxu0
        %v912 = vpop.f32.mrf.mxu0
        %v913 = vpop.f32.mrf.mxu0
        %914 = vdwg.mxu0
        %915 = vmatprep.subr.bf16.mxu0 0
        %916 = vmatpush1.bf16.msra.mxu0 %v810
        %917 = vmatprep.subr.bf16.mxu0 0
        %918 = vmatpush1.bf16.msra.mxu0 %v809
        %919 = vmatprep.subr.bf16.mxu0 0
        %920 = vmatpush1.bf16.msra.mxu0 %v808
        %921 = vmatprep.subr.bf16.mxu0 0
        %922 = vmatpush1.bf16.msra.mxu0 %v807
        %923 = vmatprep.subr.bf16.mxu0 0
        %924 = vmatpush1.bf16.msra.mxu0 %v806
        %925 = vmatprep.subr.bf16.mxu0 0
        %926 = vmatpush1.bf16.msra.mxu0 %v805
        %927 = vmatprep.subr.bf16.mxu0 0
        %928 = vmatpush1.bf16.msra.mxu0 %v804
        %929 = vmatprep.subr.bf16.mxu0 0
        %930 = vmatpush1.bf16.msra.mxu0 %v803
        %931 = vmatprep.subr.bf16.mxu0 0
        %932 = vmatpush2.bf16.msra.mxu0 %v818
        %933 = vmatprep.subr.bf16.mxu0 0
        %934 = vmatpush2.bf16.msra.mxu0 %v817
        %935 = vmatprep.subr.bf16.mxu0 0
        %936 = vmatpush2.bf16.msra.mxu0 %v816
        %937 = vmatprep.subr.bf16.mxu0 0
        %938 = vmatpush2.bf16.msra.mxu0 %v815
        %939 = vmatprep.subr.bf16.mxu0 0
        %940 = vmatpush2.bf16.msra.mxu0 %v814
        %941 = vmatprep.subr.bf16.mxu0 0
        %942 = vmatpush2.bf16.msra.mxu0 %v813
        %943 = vmatprep.subr.bf16.mxu0 0
        %944 = vmatpush2.bf16.msra.mxu0 %v812
        %945 = vmatprep.subr.bf16.mxu0 0
        %946 = vmatpush2.bf16.msra.mxu0 %v811
        %947 = vmatprep.mubr.bf16.mxu0 %v566
        %948 = vmatmul.mubr.bf16.gmra.mxu0 %v554
        %v949 = vpop.f32.mrf.mxu0
        %v950 = vadd.f32 %v886, %v949
        %v951 = vpop.f32.mrf.mxu0
        %v952 = vpop.f32.mrf.mxu0
        %v953 = vadd.f32 %v889, %v952
        %v954 = vpop.f32.mrf.mxu0
        %955 = vmatprep.mubr.bf16.mxu0 %v598
        %956 = vmatmul.mubr.bf16.gmra.mxu0 %v590
        %v957 = vpop.f32.mrf.mxu0
        %v958 = vadd.f32 %v894, %v957
        %v959 = vpop.f32.mrf.mxu0
        %v960 = vpop.f32.mrf.mxu0
        %v961 = vadd.f32 %v897, %v960
        %v962 = vpop.f32.mrf.mxu0
        %963 = vmatprep.mubr.bf16.mxu0 %v630
        %964 = vmatmul.mubr.bf16.gmra.mxu0 %v622
        %v965 = vpop.f32.mrf.mxu0
        %v966 = vadd.f32 %v902, %v965
        %v967 = vpop.f32.mrf.mxu0
        %v968 = vpop.f32.mrf.mxu0
        %v969 = vadd.f32 %v905, %v968
        %v970 = vpop.f32.mrf.mxu0
        %971 = vmatprep.mubr.bf16.mxu0 %v642
        %972 = vmatmul.mubr.bf16.gmra.mxu0 %v639
        %v973 = vpop.f32.mrf.mxu0
        %v974 = vadd.f32 %v910, %v973
        %v975 = vpop.f32.mrf.mxu0
        %v976 = vpop.f32.mrf.mxu0
        %v977 = vpop.f32.mrf.mxu0
        %978 = vdwg.mxu0
        %v1043 = vunpack.c.l.b16 %v373
        %v1044 = vunpack.c.l.b16 %v374
        %v1045 = vunpack.c.l.b16 %v375
        %v1046 = vunpack.c.l.b16 %v376
        %v1047 = vunpack.c.l.b16 %v377
        %v1048 = vunpack.c.l.b16 %v378
        %v1049 = vunpack.c.l.b16 %v379
        %v1050 = vunpack.c.l.b16 %v380
        %v1051 = vunpack.c.l.b16 %v381
        %v1052 = vunpack.c.l.b16 %v382
        %v1053 = vunpack.c.l.b16 %v383
        %v1054 = vunpack.c.l.b16 %v384
        %v1055 = vunpack.c.l.b16 %v385
        %v1056 = vunpack.c.l.b16 %v386
        %v1057 = vunpack.c.l.b16 %v387
        %v1058 = vunpack.c.l.b16 %v388
        %v1059 = vunpack.c.l.b16 %v389
        %v1060 = vunpack.c.l.b16 %v390
        %v1061 = vunpack.c.l.b16 %v391
        %v1062 = vunpack.c.l.b16 %v392
        %v1063 = vunpack.c.l.b16 %v393
        %v1064 = vunpack.c.l.b16 %v394
        %v1065 = vunpack.c.l.b16 %v395
        %v1066 = vunpack.c.l.b16 %v396
        %v1067 = vunpack.c.l.b16 %v397
        %v1068 = vunpack.c.l.b16 %v398
        %v1069 = vunpack.c.l.b16 %v399
        %v1070 = vunpack.c.l.b16 %v400
        %v1071 = vunpack.c.l.b16 %v401
        %v1072 = vunpack.c.l.b16 %v402
        %v1073 = vunpack.c.l.b16 %v403
        %v1074 = vunpack.c.l.b16 %v404
        %v1075 = vunpack.c.l.b16 %v405
        %v1076 = vunpack.c.l.b16 %v406
        %v1077 = vunpack.c.l.b16 %v407
        %v1078 = vunpack.c.l.b16 %v408
        %v1079 = vunpack.c.l.b16 %v409
        %v1080 = vunpack.c.l.b16 %v410
        %v1081 = vunpack.c.l.b16 %v411
        %v1082 = vunpack.c.l.b16 %v412
        %v1083 = vunpack.c.l.b16 %v413
        %v1084 = vunpack.c.l.b16 %v414
        %v1085 = vunpack.c.l.b16 %v415
        %v1086 = vunpack.c.l.b16 %v416
        %v1087 = vunpack.c.l.b16 %v417
        %v1088 = vunpack.c.l.b16 %v418
        %v1089 = vunpack.c.l.b16 %v419
        %v1090 = vunpack.c.l.b16 %v420
        %v1091 = vunpack.c.l.b16 %v421
        %v1092 = vunpack.c.l.b16 %v422
        %v1093 = vunpack.c.l.b16 %v423
        %v1094 = vunpack.c.l.b16 %v424
        %v1095 = vunpack.c.l.b16 %v425
        %v1096 = vunpack.c.l.b16 %v426
        %v1097 = vunpack.c.l.b16 %v427
        %v1098 = vunpack.c.l.b16 %v428
        %v1099 = vunpack.c.l.b16 %v429
        %v1100 = vunpack.c.l.b16 %v430
        %v1101 = vunpack.c.l.b16 %v431
        %v1102 = vunpack.c.l.b16 %v432
        %v1103 = vunpack.c.l.b16 %v433
        %v1104 = vunpack.c.l.b16 %v434
        %v1105 = vunpack.c.l.b16 %v435
        %v1106 = vunpack.c.l.b16 %v436
        %v1107 = vpack.c.b16 %v1044, %v1043
        %v1108 = vpack.c.b16 %v1046, %v1045
        %v1109 = vpack.c.b16 %v1048, %v1047
        %v1110 = vpack.c.b16 %v1050, %v1049
        %v1111 = vpack.c.b16 %v1052, %v1051
        %v1112 = vpack.c.b16 %v1054, %v1053
        %v1113 = vpack.c.b16 %v1056, %v1055
        %v1114 = vpack.c.b16 %v1058, %v1057
        %v1115 = vpack.c.b16 %v1060, %v1059
        %v1116 = vpack.c.b16 %v1062, %v1061
        %v1117 = vpack.c.b16 %v1064, %v1063
        %v1118 = vpack.c.b16 %v1066, %v1065
        %v1119 = vpack.c.b16 %v1068, %v1067
        %v1120 = vpack.c.b16 %v1070, %v1069
        %v1121 = vpack.c.b16 %v1072, %v1071
        %v1122 = vpack.c.b16 %v1074, %v1073
        %v1123 = vpack.c.b16 %v1076, %v1075
        %v1124 = vpack.c.b16 %v1078, %v1077
        %v1125 = vpack.c.b16 %v1080, %v1079
        %v1126 = vpack.c.b16 %v1082, %v1081
        %v1127 = vpack.c.b16 %v1084, %v1083
        %v1128 = vpack.c.b16 %v1086, %v1085
        %v1129 = vpack.c.b16 %v1088, %v1087
        %v1130 = vpack.c.b16 %v1090, %v1089
        %v1131 = vpack.c.b16 %v1092, %v1091
        %v1132 = vpack.c.b16 %v1094, %v1093
        %v1133 = vpack.c.b16 %v1096, %v1095
        %v1134 = vpack.c.b16 %v1098, %v1097
        %v1135 = vpack.c.b16 %v1100, %v1099
        %v1136 = vpack.c.b16 %v1102, %v1101
        %v1137 = vpack.c.b16 %v1104, %v1103
        %v1138 = vpack.c.b16 %v1106, %v1105
        %1171 = vmatprep.subr.bf16.mxu0 0
        %1172 = vmatpush1.bf16.msra.mxu0 %v1114
        %1173 = vmatprep.subr.bf16.mxu0 0
        %1174 = vmatpush1.bf16.msra.mxu0 %v1113
        %1175 = vmatprep.subr.bf16.mxu0 0
        %1176 = vmatpush1.bf16.msra.mxu0 %v1112
        %1177 = vmatprep.subr.bf16.mxu0 0
        %1178 = vmatpush1.bf16.msra.mxu0 %v1111
        %1179 = vmatprep.subr.bf16.mxu0 0
        %1180 = vmatpush1.bf16.msra.mxu0 %v1110
        %1181 = vmatprep.subr.bf16.mxu0 0
        %1182 = vmatpush1.bf16.msra.mxu0 %v1109
        %1183 = vmatprep.subr.bf16.mxu0 0
        %1184 = vmatpush1.bf16.msra.mxu0 %v1108
        %1185 = vmatprep.subr.bf16.mxu0 0
        %1186 = vmatpush1.bf16.msra.mxu0 %v1107
        %1187 = vmatprep.subr.bf16.mxu0 0
        %1188 = vmatpush2.bf16.msra.mxu0 %v1122
        %1189 = vmatprep.subr.bf16.mxu0 0
        %1190 = vmatpush2.bf16.msra.mxu0 %v1121
        %1191 = vmatprep.subr.bf16.mxu0 0
        %1192 = vmatpush2.bf16.msra.mxu0 %v1120
        %1193 = vmatprep.subr.bf16.mxu0 0
        %1194 = vmatpush2.bf16.msra.mxu0 %v1119
        %1195 = vmatprep.subr.bf16.mxu0 0
        %1196 = vmatpush2.bf16.msra.mxu0 %v1118
        %1197 = vmatprep.subr.bf16.mxu0 0
        %1198 = vmatpush2.bf16.msra.mxu0 %v1117
        %1199 = vmatprep.subr.bf16.mxu0 0
        %1200 = vmatpush2.bf16.msra.mxu0 %v1116
        %1201 = vmatprep.subr.bf16.mxu0 0
        %1202 = vmatpush2.bf16.msra.mxu0 %v1115
        %1203 = vmatprep.mubr.bf16.mxu0 %v358
        %1204 = vmatmul.mubr.bf16.gmra.mxu0 %v357
        %v1205 = vpop.f32.mrf.mxu0
        %v1206 = vadd.f32 %v950, %v1205
        %v1207 = vpop.f32.mrf.mxu0
        %v1208 = vpop.f32.mrf.mxu0
        %v1209 = vadd.f32 %v953, %v1208
        %v1210 = vpop.f32.mrf.mxu0
        %1211 = vmatprep.mubr.bf16.mxu0 %v362
        %1212 = vmatmul.mubr.bf16.gmra.mxu0 %v361
        %v1213 = vpop.f32.mrf.mxu0
        %v1214 = vadd.f32 %v958, %v1213
        %v1215 = vpop.f32.mrf.mxu0
        %v1216 = vpop.f32.mrf.mxu0
        %v1217 = vadd.f32 %v961, %v1216
        %v1218 = vpop.f32.mrf.mxu0
        %1219 = vmatprep.mubr.bf16.mxu0 %v366
        %1220 = vmatmul.mubr.bf16.gmra.mxu0 %v365
        %v1221 = vpop.f32.mrf.mxu0
        %v1222 = vadd.f32 %v966, %v1221
        %v1223 = vpop.f32.mrf.mxu0
        %v1224 = vpop.f32.mrf.mxu0
        %v1225 = vadd.f32 %v969, %v1224
        %v1226 = vpop.f32.mrf.mxu0
        %1227 = vmatprep.mubr.bf16.mxu0 %v370
        %1228 = vmatmul.mubr.bf16.gmra.mxu0 %v369
        %v1229 = vpop.f32.mrf.mxu0
        %v1230 = vadd.f32 %v974, %v1229
        %v1231 = vpop.f32.mrf.mxu0
        %v1232 = vpop.f32.mrf.mxu0
        %v1233 = vpop.f32.mrf.mxu0
        %1234 = vdwg.mxu0
        %1235 = vmatprep.subr.bf16.mxu0 0
        %1236 = vmatpush1.bf16.msra.mxu0 %v1130
        %1237 = vmatprep.subr.bf16.mxu0 0
        %1238 = vmatpush1.bf16.msra.mxu0 %v1129
        %1239 = vmatprep.subr.bf16.mxu0 0
        %1240 = vmatpush1.bf16.msra.mxu0 %v1128
        %1241 = vmatprep.subr.bf16.mxu0 0
        %1242 = vmatpush1.bf16.msra.mxu0 %v1127
        %1243 = vmatprep.subr.bf16.mxu0 0
        %1244 = vmatpush1.bf16.msra.mxu0 %v1126
        %1245 = vmatprep.subr.bf16.mxu0 0
        %1246 = vmatpush1.bf16.msra.mxu0 %v1125
        %1247 = vmatprep.subr.bf16.mxu0 0
        %1248 = vmatpush1.bf16.msra.mxu0 %v1124
        %1249 = vmatprep.subr.bf16.mxu0 0
        %1250 = vmatpush1.bf16.msra.mxu0 %v1123
        %1251 = vmatprep.subr.bf16.mxu0 0
        %1252 = vmatpush2.bf16.msra.mxu0 %v1138
        %1253 = vmatprep.subr.bf16.mxu0 0
        %1254 = vmatpush2.bf16.msra.mxu0 %v1137
        %1255 = vmatprep.subr.bf16.mxu0 0
        %1256 = vmatpush2.bf16.msra.mxu0 %v1136
        %1257 = vmatprep.subr.bf16.mxu0 0
        %1258 = vmatpush2.bf16.msra.mxu0 %v1135
        %1259 = vmatprep.subr.bf16.mxu0 0
        %1260 = vmatpush2.bf16.msra.mxu0 %v1134
        %1261 = vmatprep.subr.bf16.mxu0 0
        %1262 = vmatpush2.bf16.msra.mxu0 %v1133
        %1263 = vmatprep.subr.bf16.mxu0 0
        %1264 = vmatpush2.bf16.msra.mxu0 %v1132
        %1265 = vmatprep.subr.bf16.mxu0 0
        %1266 = vmatpush2.bf16.msra.mxu0 %v1131
        %1267 = vmatprep.mubr.bf16.mxu0 %v360
        %1268 = vmatmul.mubr.bf16.gmra.mxu0 %v359
        %v1269 = vpop.f32.mrf.mxu0
        %v1270 = vadd.f32 %v1206, %v1269
        %v1271 = vpop.f32.mrf.mxu0
        %v1272 = vpop.f32.mrf.mxu0
        %v1273 = vadd.f32 %v1209, %v1272
        %v1274 = vpop.f32.mrf.mxu0
        %1275 = vmatprep.mubr.bf16.mxu0 %v364
        %1276 = vmatmul.mubr.bf16.gmra.mxu0 %v363
        %v1277 = vpop.f32.mrf.mxu0
        %v1278 = vadd.f32 %v1214, %v1277
        %v1279 = vpop.f32.mrf.mxu0
        %v1280 = vpop.f32.mrf.mxu0
        %v1281 = vadd.f32 %v1217, %v1280
        %v1282 = vpop.f32.mrf.mxu0
        %1283 = vmatprep.mubr.bf16.mxu0 %v368
        %1284 = vmatmul.mubr.bf16.gmra.mxu0 %v367
        %v1285 = vpop.f32.mrf.mxu0
        %v1286 = vadd.f32 %v1222, %v1285
        %v1287 = vpop.f32.mrf.mxu0
        %v1288 = vpop.f32.mrf.mxu0
        %v1289 = vadd.f32 %v1225, %v1288
        %v1290 = vpop.f32.mrf.mxu0
        %1291 = vmatprep.mubr.bf16.mxu0 %v372
        %1292 = vmatmul.mubr.bf16.gmra.mxu0 %v371
        %v1293 = vpop.f32.mrf.mxu0
        %v1294 = vadd.f32 %v1230, %v1293
        %v1295 = vpop.f32.mrf.mxu0
        %v1296 = vpop.f32.mrf.mxu0
        %v1297 = vpop.f32.mrf.mxu0
        %1298 = vdwg.mxu0
        %v1299 = vld [vmem:[%s284 + $0x20] sm:$0xff]
        %v1300 = vld [vmem:[%s284 + $0x28] sm:$0xff]
        %v1301 = vld [vmem:[%s284 + $0x30] sm:$0xff]
        %v1302 = vld [vmem:[%s284 + $0x38] sm:$0xff]
        %v1303 = vld [vmem:[%s284 + $0x40] sm:$0xff]
        %v1304 = vld [vmem:[%s284 + $0x48] sm:$0xff]
        %v1305 = vld [vmem:[%s284 + $0x50] sm:$0xff]
        %v1306 = vld [vmem:[%s284 + $0x58] sm:$0xff]
        %v1307 = vld [vmem:[%s284 + $0x60] sm:$0xff]
        %v1308 = vld [vmem:[%s284 + $0x68] sm:$0xff]
        %v1309 = vld [vmem:[%s284 + $0x70] sm:$0xff]
        %v1310 = vld [vmem:[%s284 + $0x78] sm:$0xff]
        %v1311 = vld [vmem:[%s284 + $0x80] sm:$0xff]
        %v1312 = vld [vmem:[%s284 + $0x88] sm:$0xff]
        %v1313 = vld [vmem:[%s284 + $0x90] sm:$0xff]
        %v1314 = vld [vmem:[%s284 + $0x98] sm:$0xff]
        %v1315 = vld [vmem:[%s284 + $0xa0] sm:$0xff]
        %v1316 = vld [vmem:[%s284 + $0xa8] sm:$0xff]
        %v1317 = vld [vmem:[%s284 + $0xb0] sm:$0xff]
        %v1318 = vld [vmem:[%s284 + $0xb8] sm:$0xff]
        %v1319 = vld [vmem:[%s284 + $0xc0] sm:$0xff]
        %v1320 = vld [vmem:[%s284 + $0xc8] sm:$0xff]
        %v1321 = vld [vmem:[%s284 + $0xd0] sm:$0xff]
        %v1322 = vld [vmem:[%s284 + $0xd8] sm:$0xff]
        %v1323 = vld [vmem:[%s284 + $0xe0] sm:$0x7f]
        %v1324 = vld [vmem:[%s284 + $0xe8] sm:$0x7f]
        %v1325 = vld [vmem:[%s284 + $0xf0] sm:$0x7f]
        %v1326 = vld [vmem:[%s284 + $0xf8] sm:$0x7f]
        %v1327 = vpack.c.bf16 %v1303, %v1299
        %v1328 = vpack.c.bf16 %v1304, %v1300
        %v1329 = vpack.c.bf16 %v1305, %v1301
        %v1330 = vpack.c.bf16 %v1306, %v1302
        %v1331 = vpack.c.bf16 %v1311, %v1307
        %v1332 = vpack.c.bf16 %v1312, %v1308
        %v1333 = vpack.c.bf16 %v1313, %v1309
        %v1334 = vpack.c.bf16 %v1314, %v1310
        %v1335 = vpack.c.bf16 %v1319, %v1315
        %v1336 = vpack.c.bf16 %v1320, %v1316
        %v1337 = vpack.c.bf16 %v1321, %v1317
        %v1338 = vpack.c.bf16 %v1322, %v1318
        %v1339 = vpack.c.bf16 %v1323, %v1323
        %v1340 = vpack.c.bf16 %v1324, %v1324
        %v1341 = vpack.c.bf16 %v1325, %v1325
        %v1342 = vpack.c.bf16 %v1326, %v1326
        %s1343 = scalar_lea.vmem [#allocation6], 512
        %v1344 = vld [vmem:[%s1343] sm:$0xf]
        %v1345 = vld [vmem:[%s1343 + $0x4] sm:$0xf]
        %v1346 = vld [vmem:[%s1343 + $0x8] sm:$0xf]
        %v1347 = vld [vmem:[%s1343 + $0xc] sm:$0xf]
        %v1348 = vld [vmem:[%s1343 + $0x10] sm:$0xf]
        %v1349 = vld [vmem:[%s1343 + $0x14] sm:$0xf]
        %v1350 = vld [vmem:[%s1343 + $0x18] sm:$0xf]
        %v1351 = vld [vmem:[%s1343 + $0x1c] sm:$0xf]
        %v1352 = vld [vmem:[%s1343 + $0x20] sm:$0xf]
        %v1353 = vld [vmem:[%s1343 + $0x24] sm:$0xf]
        %v1354 = vld [vmem:[%s1343 + $0x28] sm:$0xf]
        %v1355 = vld [vmem:[%s1343 + $0x2c] sm:$0xf]
        %v1356 = vld [vmem:[%s1343 + $0x30] sm:$0xf]
        %v1357 = vld [vmem:[%s1343 + $0x34] sm:$0xf]
        %v1358 = vld [vmem:[%s1343 + $0x38] sm:$0xf]
        %v1359 = vld [vmem:[%s1343 + $0x3c] sm:$0xf]
        %v1360 = vld [vmem:[%s1343 + $0x40] sm:$0xf]
        %v1361 = vld [vmem:[%s1343 + $0x44] sm:$0xf]
        %v1362 = vld [vmem:[%s1343 + $0x48] sm:$0xf]
        %v1363 = vld [vmem:[%s1343 + $0x4c] sm:$0xf]
        %v1364 = vld [vmem:[%s1343 + $0x50] sm:$0xf]
        %v1365 = vld [vmem:[%s1343 + $0x54] sm:$0xf]
        %v1366 = vld [vmem:[%s1343 + $0x58] sm:$0xf]
        %v1367 = vld [vmem:[%s1343 + $0x5c] sm:$0xf]
        %v1368 = vld [vmem:[%s1343 + $0x60] sm:$0xf]
        %v1369 = vld [vmem:[%s1343 + $0x64] sm:$0xf]
        %v1370 = vld [vmem:[%s1343 + $0x68] sm:$0xf]
        %v1371 = vld [vmem:[%s1343 + $0x6c] sm:$0xf]
        %v1372 = vld [vmem:[%s1343 + $0x70] sm:$0xf]
        %v1373 = vld [vmem:[%s1343 + $0x74] sm:$0xf]
        %v1374 = vld [vmem:[%s1343 + $0x78] sm:$0xf]
        %v1375 = vld [vmem:[%s1343 + $0x7c] sm:$0xf]
        %v1376 = vld [vmem:[%s1343 + $0x80] sm:$0xf]
        %v1377 = vld [vmem:[%s1343 + $0x84] sm:$0xf]
        %v1378 = vld [vmem:[%s1343 + $0x88] sm:$0xf]
        %v1379 = vld [vmem:[%s1343 + $0x8c] sm:$0xf]
        %v1380 = vld [vmem:[%s1343 + $0x90] sm:$0xf]
        %v1381 = vld [vmem:[%s1343 + $0x94] sm:$0xf]
        %v1382 = vld [vmem:[%s1343 + $0x98] sm:$0xf]
        %v1383 = vld [vmem:[%s1343 + $0x9c] sm:$0xf]
        %v1384 = vld [vmem:[%s1343 + $0xa0] sm:$0xf]
        %v1385 = vld [vmem:[%s1343 + $0xa4] sm:$0xf]
        %v1386 = vld [vmem:[%s1343 + $0xa8] sm:$0xf]
        %v1387 = vld [vmem:[%s1343 + $0xac] sm:$0xf]
        %v1388 = vld [vmem:[%s1343 + $0xb0] sm:$0xf]
        %v1389 = vld [vmem:[%s1343 + $0xb4] sm:$0xf]
        %v1390 = vld [vmem:[%s1343 + $0xb8] sm:$0xf]
        %v1391 = vld [vmem:[%s1343 + $0xbc] sm:$0xf]
        %v1392 = vld [vmem:[%s1343 + $0xc0] sm:$0xf]
        %v1393 = vld [vmem:[%s1343 + $0xc4] sm:$0xf]
        %v1394 = vld [vmem:[%s1343 + $0xc8] sm:$0xf]
        %v1395 = vld [vmem:[%s1343 + $0xcc] sm:$0xf]
        %v1396 = vld [vmem:[%s1343 + $0xd0] sm:$0xf]
        %v1397 = vld [vmem:[%s1343 + $0xd4] sm:$0xf]
        %v1398 = vld [vmem:[%s1343 + $0xd8] sm:$0xf]
        %v1399 = vld [vmem:[%s1343 + $0xdc] sm:$0xf]
        %v1400 = vld [vmem:[%s1343 + $0xe0] sm:$0xf]
        %v1401 = vld [vmem:[%s1343 + $0xe4] sm:$0xf]
        %v1402 = vld [vmem:[%s1343 + $0xe8] sm:$0xf]
        %v1403 = vld [vmem:[%s1343 + $0xec] sm:$0xf]
        %v1404 = vld [vmem:[%s1343 + $0xf0] sm:$0xf]
        %v1405 = vld [vmem:[%s1343 + $0xf4] sm:$0xf]
        %v1406 = vld [vmem:[%s1343 + $0xf8] sm:$0xf]
        %v1407 = vld [vmem:[%s1343 + $0xfc] sm:$0xf]
        %v1472 = vunpack.c.l.b16 %v1344
        %v1473 = vunpack.c.l.b16 %v1345
        %v1474 = vunpack.c.l.b16 %v1346
        %v1475 = vunpack.c.l.b16 %v1347
        %v1476 = vunpack.c.l.b16 %v1348
        %v1477 = vunpack.c.l.b16 %v1349
        %v1478 = vunpack.c.l.b16 %v1350
        %v1479 = vunpack.c.l.b16 %v1351
        %v1480 = vunpack.c.l.b16 %v1352
        %v1481 = vunpack.c.l.b16 %v1353
        %v1482 = vunpack.c.l.b16 %v1354
        %v1483 = vunpack.c.l.b16 %v1355
        %v1484 = vunpack.c.l.b16 %v1356
        %v1485 = vunpack.c.l.b16 %v1357
        %v1486 = vunpack.c.l.b16 %v1358
        %v1487 = vunpack.c.l.b16 %v1359
        %v1488 = vunpack.c.l.b16 %v1360
        %v1489 = vunpack.c.l.b16 %v1361
        %v1490 = vunpack.c.l.b16 %v1362
        %v1491 = vunpack.c.l.b16 %v1363
        %v1492 = vunpack.c.l.b16 %v1364
        %v1493 = vunpack.c.l.b16 %v1365
        %v1494 = vunpack.c.l.b16 %v1366
        %v1495 = vunpack.c.l.b16 %v1367
        %v1496 = vunpack.c.l.b16 %v1368
        %v1497 = vunpack.c.l.b16 %v1369
        %v1498 = vunpack.c.l.b16 %v1370
        %v1499 = vunpack.c.l.b16 %v1371
        %v1500 = vunpack.c.l.b16 %v1372
        %v1501 = vunpack.c.l.b16 %v1373
        %v1502 = vunpack.c.l.b16 %v1374
        %v1503 = vunpack.c.l.b16 %v1375
        %v1504 = vunpack.c.l.b16 %v1376
        %v1505 = vunpack.c.l.b16 %v1377
        %v1506 = vunpack.c.l.b16 %v1378
        %v1507 = vunpack.c.l.b16 %v1379
        %v1508 = vunpack.c.l.b16 %v1380
        %v1509 = vunpack.c.l.b16 %v1381
        %v1510 = vunpack.c.l.b16 %v1382
        %v1511 = vunpack.c.l.b16 %v1383
        %v1512 = vunpack.c.l.b16 %v1384
        %v1513 = vunpack.c.l.b16 %v1385
        %v1514 = vunpack.c.l.b16 %v1386
        %v1515 = vunpack.c.l.b16 %v1387
        %v1516 = vunpack.c.l.b16 %v1388
        %v1517 = vunpack.c.l.b16 %v1389
        %v1518 = vunpack.c.l.b16 %v1390
        %v1519 = vunpack.c.l.b16 %v1391
        %v1520 = vunpack.c.l.b16 %v1392
        %v1521 = vunpack.c.l.b16 %v1393
        %v1522 = vunpack.c.l.b16 %v1394
        %v1523 = vunpack.c.l.b16 %v1395
        %v1524 = vunpack.c.l.b16 %v1396
        %v1525 = vunpack.c.l.b16 %v1397
        %v1526 = vunpack.c.l.b16 %v1398
        %v1527 = vunpack.c.l.b16 %v1399
        %v1528 = vunpack.c.l.b16 %v1400
        %v1529 = vunpack.c.l.b16 %v1401
        %v1530 = vunpack.c.l.b16 %v1402
        %v1531 = vunpack.c.l.b16 %v1403
        %v1532 = vunpack.c.l.b16 %v1404
        %v1533 = vunpack.c.l.b16 %v1405
        %v1534 = vunpack.c.l.b16 %v1406
        %v1535 = vunpack.c.l.b16 %v1407
        %v1536 = vpack.c.b16 %v1473, %v1472
        %v1537 = vpack.c.b16 %v1475, %v1474
        %v1538 = vpack.c.b16 %v1477, %v1476
        %v1539 = vpack.c.b16 %v1479, %v1478
        %v1540 = vpack.c.b16 %v1481, %v1480
        %v1541 = vpack.c.b16 %v1483, %v1482
        %v1542 = vpack.c.b16 %v1485, %v1484
        %v1543 = vpack.c.b16 %v1487, %v1486
        %v1544 = vpack.c.b16 %v1489, %v1488
        %v1545 = vpack.c.b16 %v1491, %v1490
        %v1546 = vpack.c.b16 %v1493, %v1492
        %v1547 = vpack.c.b16 %v1495, %v1494
        %v1548 = vpack.c.b16 %v1497, %v1496
        %v1549 = vpack.c.b16 %v1499, %v1498
        %v1550 = vpack.c.b16 %v1501, %v1500
        %v1551 = vpack.c.b16 %v1503, %v1502
        %v1552 = vpack.c.b16 %v1505, %v1504
        %v1553 = vpack.c.b16 %v1507, %v1506
        %v1554 = vpack.c.b16 %v1509, %v1508
        %v1555 = vpack.c.b16 %v1511, %v1510
        %v1556 = vpack.c.b16 %v1513, %v1512
        %v1557 = vpack.c.b16 %v1515, %v1514
        %v1558 = vpack.c.b16 %v1517, %v1516
        %v1559 = vpack.c.b16 %v1519, %v1518
        %v1560 = vpack.c.b16 %v1521, %v1520
        %v1561 = vpack.c.b16 %v1523, %v1522
        %v1562 = vpack.c.b16 %v1525, %v1524
        %v1563 = vpack.c.b16 %v1527, %v1526
        %v1564 = vpack.c.b16 %v1529, %v1528
        %v1565 = vpack.c.b16 %v1531, %v1530
        %v1566 = vpack.c.b16 %v1533, %v1532
        %v1567 = vpack.c.b16 %v1535, %v1534
        %1600 = vmatprep.subr.bf16.mxu0 0
        %1601 = vmatpush1.bf16.msra.mxu0 %v1543
        %1602 = vmatprep.subr.bf16.mxu0 0
        %1603 = vmatpush1.bf16.msra.mxu0 %v1542
        %1604 = vmatprep.subr.bf16.mxu0 0
        %1605 = vmatpush1.bf16.msra.mxu0 %v1541
        %1606 = vmatprep.subr.bf16.mxu0 0
        %1607 = vmatpush1.bf16.msra.mxu0 %v1540
        %1608 = vmatprep.subr.bf16.mxu0 0
        %1609 = vmatpush1.bf16.msra.mxu0 %v1539
        %1610 = vmatprep.subr.bf16.mxu0 0
        %1611 = vmatpush1.bf16.msra.mxu0 %v1538
        %1612 = vmatprep.subr.bf16.mxu0 0
        %1613 = vmatpush1.bf16.msra.mxu0 %v1537
        %1614 = vmatprep.subr.bf16.mxu0 0
        %1615 = vmatpush1.bf16.msra.mxu0 %v1536
        %1616 = vmatprep.subr.bf16.mxu0 0
        %1617 = vmatpush2.bf16.msra.mxu0 %v1551
        %1618 = vmatprep.subr.bf16.mxu0 0
        %1619 = vmatpush2.bf16.msra.mxu0 %v1550
        %1620 = vmatprep.subr.bf16.mxu0 0
        %1621 = vmatpush2.bf16.msra.mxu0 %v1549
        %1622 = vmatprep.subr.bf16.mxu0 0
        %1623 = vmatpush2.bf16.msra.mxu0 %v1548
        %1624 = vmatprep.subr.bf16.mxu0 0
        %1625 = vmatpush2.bf16.msra.mxu0 %v1547
        %1626 = vmatprep.subr.bf16.mxu0 0
        %1627 = vmatpush2.bf16.msra.mxu0 %v1546
        %1628 = vmatprep.subr.bf16.mxu0 0
        %1629 = vmatpush2.bf16.msra.mxu0 %v1545
        %1630 = vmatprep.subr.bf16.mxu0 0
        %1631 = vmatpush2.bf16.msra.mxu0 %v1544
        %1632 = vmatprep.mubr.bf16.mxu0 %v1328
        %1633 = vmatmul.mubr.bf16.gmra.mxu0 %v1327
        %v1634 = vpop.f32.mrf.mxu0
        %v1635 = vadd.f32 0.0, %v1634
        %v1636 = vpop.f32.mrf.mxu0
        %v1637 = vpop.f32.mrf.mxu0
        %v1638 = vadd.f32 0.0, %v1637
        %v1639 = vpop.f32.mrf.mxu0
        %1640 = vmatprep.mubr.bf16.mxu0 %v1332
        %1641 = vmatmul.mubr.bf16.gmra.mxu0 %v1331
        %v1642 = vpop.f32.mrf.mxu0
        %v1643 = vadd.f32 0.0, %v1642
        %v1644 = vpop.f32.mrf.mxu0
        %v1645 = vpop.f32.mrf.mxu0
        %v1646 = vadd.f32 0.0, %v1645
        %v1647 = vpop.f32.mrf.mxu0
        %1648 = vmatprep.mubr.bf16.mxu0 %v1336
        %1649 = vmatmul.mubr.bf16.gmra.mxu0 %v1335
        %v1650 = vpop.f32.mrf.mxu0
        %v1651 = vadd.f32 0.0, %v1650
        %v1652 = vpop.f32.mrf.mxu0
        %v1653 = vpop.f32.mrf.mxu0
        %v1654 = vadd.f32 0.0, %v1653
        %v1655 = vpop.f32.mrf.mxu0
        %1656 = vmatprep.mubr.bf16.mxu0 %v1340
        %1657 = vmatmul.mubr.bf16.gmra.mxu0 %v1339
        %v1658 = vpop.f32.mrf.mxu0
        %v1659 = vadd.f32 0.0, %v1658
        %v1660 = vpop.f32.mrf.mxu0
        %v1661 = vpop.f32.mrf.mxu0
        %v1662 = vpop.f32.mrf.mxu0
        %1663 = vdwg.mxu0
        %1664 = vmatprep.subr.bf16.mxu0 0
        %1665 = vmatpush1.bf16.msra.mxu0 %v1559
        %1666 = vmatprep.subr.bf16.mxu0 0
        %1667 = vmatpush1.bf16.msra.mxu0 %v1558
        %1668 = vmatprep.subr.bf16.mxu0 0
        %1669 = vmatpush1.bf16.msra.mxu0 %v1557
        %1670 = vmatprep.subr.bf16.mxu0 0
        %1671 = vmatpush1.bf16.msra.mxu0 %v1556
        %1672 = vmatprep.subr.bf16.mxu0 0
        %1673 = vmatpush1.bf16.msra.mxu0 %v1555
        %1674 = vmatprep.subr.bf16.mxu0 0
        %1675 = vmatpush1.bf16.msra.mxu0 %v1554
        %1676 = vmatprep.subr.bf16.mxu0 0
        %1677 = vmatpush1.bf16.msra.mxu0 %v1553
        %1678 = vmatprep.subr.bf16.mxu0 0
        %1679 = vmatpush1.bf16.msra.mxu0 %v1552
        %1680 = vmatprep.subr.bf16.mxu0 0
        %1681 = vmatpush2.bf16.msra.mxu0 %v1567
        %1682 = vmatprep.subr.bf16.mxu0 0
        %1683 = vmatpush2.bf16.msra.mxu0 %v1566
        %1684 = vmatprep.subr.bf16.mxu0 0
        %1685 = vmatpush2.bf16.msra.mxu0 %v1565
        %1686 = vmatprep.subr.bf16.mxu0 0
        %1687 = vmatpush2.bf16.msra.mxu0 %v1564
        %1688 = vmatprep.subr.bf16.mxu0 0
        %1689 = vmatpush2.bf16.msra.mxu0 %v1563
        %1690 = vmatprep.subr.bf16.mxu0 0
        %1691 = vmatpush2.bf16.msra.mxu0 %v1562
        %1692 = vmatprep.subr.bf16.mxu0 0
        %1693 = vmatpush2.bf16.msra.mxu0 %v1561
        %1694 = vmatprep.subr.bf16.mxu0 0
        %1695 = vmatpush2.bf16.msra.mxu0 %v1560
        %1696 = vmatprep.mubr.bf16.mxu0 %v1330
        %1697 = vmatmul.mubr.bf16.gmra.mxu0 %v1329
        %v1698 = vpop.f32.mrf.mxu0
        %v1699 = vadd.f32 %v1635, %v1698
        %v1700 = vpop.f32.mrf.mxu0
        %v1701 = vpop.f32.mrf.mxu0
        %v1702 = vadd.f32 %v1638, %v1701
        %v1703 = vpop.f32.mrf.mxu0
        %1704 = vmatprep.mubr.bf16.mxu0 %v1334
        %1705 = vmatmul.mubr.bf16.gmra.mxu0 %v1333
        %v1706 = vpop.f32.mrf.mxu0
        %v1707 = vadd.f32 %v1643, %v1706
        %v1708 = vpop.f32.mrf.mxu0
        %v1709 = vpop.f32.mrf.mxu0
        %v1710 = vadd.f32 %v1646, %v1709
        %v1711 = vpop.f32.mrf.mxu0
        %1712 = vmatprep.mubr.bf16.mxu0 %v1338
        %1713 = vmatmul.mubr.bf16.gmra.mxu0 %v1337
        %v1714 = vpop.f32.mrf.mxu0
        %v1715 = vadd.f32 %v1651, %v1714
        %v1716 = vpop.f32.mrf.mxu0
        %v1717 = vpop.f32.mrf.mxu0
        %v1718 = vadd.f32 %v1654, %v1717
        %v1719 = vpop.f32.mrf.mxu0
        %1720 = vmatprep.mubr.bf16.mxu0 %v1342
        %1721 = vmatmul.mubr.bf16.gmra.mxu0 %v1341
        %v1722 = vpop.f32.mrf.mxu0
        %v1723 = vadd.f32 %v1659, %v1722
        %v1724 = vpop.f32.mrf.mxu0
        %v1725 = vpop.f32.mrf.mxu0
        %v1726 = vpop.f32.mrf.mxu0
        %1727 = vdwg.mxu0
        %v1728 = vadd.f32 %v1270, %v1699
        %v1729 = vadd.f32 %v1273, %v1702
        %v1730 = vadd.f32 %v1278, %v1707
        %v1731 = vadd.f32 %v1281, %v1710
        %v1732 = vadd.f32 %v1286, %v1715
        %v1733 = vadd.f32 %v1289, %v1718
        %v1734 = vadd.f32 %v1294, %v1723
        %v1735 = vld [vmem:[%s284 + $0x20] sm:$0xfe]
        %v1736 = vld [vmem:[%s284 + $0x28] sm:$0xfe]
        %v1737 = vld [vmem:[%s284 + $0x30] sm:$0xfe]
        %v1738 = vld [vmem:[%s284 + $0x38] sm:$0xfe]
        %v1739 = vld [vmem:[%s284 + $0xe0] sm:$0xff]
        %v1740 = vld [vmem:[%s284 + $0xe8] sm:$0xff]
        %v1741 = vld [vmem:[%s284 + $0xf0] sm:$0xff]
        %v1742 = vld [vmem:[%s284 + $0xf8] sm:$0xff]
        %v1743 = vpack.c.bf16 %v1303, %v1735
        %v1744 = vpack.c.bf16 %v1304, %v1736
        %v1745 = vpack.c.bf16 %v1305, %v1737
        %v1746 = vpack.c.bf16 %v1306, %v1738
        %v1747 = vpack.c.bf16 %v1739, %v1739
        %v1748 = vpack.c.bf16 %v1740, %v1740
        %v1749 = vpack.c.bf16 %v1741, %v1741
        %v1750 = vpack.c.bf16 %v1742, %v1742
        %s1751 = scalar_lea.vmem [#allocation6], 768
        %v1752 = vld [vmem:[%s1751] sm:$0xf]
        %v1753 = vld [vmem:[%s1751 + $0x4] sm:$0xf]
        %v1754 = vld [vmem:[%s1751 + $0x8] sm:$0xf]
        %v1755 = vld [vmem:[%s1751 + $0xc] sm:$0xf]
        %v1756 = vld [vmem:[%s1751 + $0x10] sm:$0xf]
        %v1757 = vld [vmem:[%s1751 + $0x14] sm:$0xf]
        %v1758 = vld [vmem:[%s1751 + $0x18] sm:$0xf]
        %v1759 = vld [vmem:[%s1751 + $0x1c] sm:$0xf]
        %v1760 = vld [vmem:[%s1751 + $0x20] sm:$0xf]
        %v1761 = vld [vmem:[%s1751 + $0x24] sm:$0xf]
        %v1762 = vld [vmem:[%s1751 + $0x28] sm:$0xf]
        %v1763 = vld [vmem:[%s1751 + $0x2c] sm:$0xf]
        %v1764 = vld [vmem:[%s1751 + $0x30] sm:$0xf]
        %v1765 = vld [vmem:[%s1751 + $0x34] sm:$0xf]
        %v1766 = vld [vmem:[%s1751 + $0x38] sm:$0xf]
        %v1767 = vld [vmem:[%s1751 + $0x3c] sm:$0xf]
        %v1768 = vld [vmem:[%s1751 + $0x40] sm:$0xf]
        %v1769 = vld [vmem:[%s1751 + $0x44] sm:$0xf]
        %v1770 = vld [vmem:[%s1751 + $0x48] sm:$0xf]
        %v1771 = vld [vmem:[%s1751 + $0x4c] sm:$0xf]
        %v1772 = vld [vmem:[%s1751 + $0x50] sm:$0xf]
        %v1773 = vld [vmem:[%s1751 + $0x54] sm:$0xf]
        %v1774 = vld [vmem:[%s1751 + $0x58] sm:$0xf]
        %v1775 = vld [vmem:[%s1751 + $0x5c] sm:$0xf]
        %v1776 = vld [vmem:[%s1751 + $0x60] sm:$0xf]
        %v1777 = vld [vmem:[%s1751 + $0x64] sm:$0xf]
        %v1778 = vld [vmem:[%s1751 + $0x68] sm:$0xf]
        %v1779 = vld [vmem:[%s1751 + $0x6c] sm:$0xf]
        %v1780 = vld [vmem:[%s1751 + $0x70] sm:$0xf]
        %v1781 = vld [vmem:[%s1751 + $0x74] sm:$0xf]
        %v1782 = vld [vmem:[%s1751 + $0x78] sm:$0xf]
        %v1783 = vld [vmem:[%s1751 + $0x7c] sm:$0xf]
        %v1784 = vld [vmem:[%s1751 + $0x80] sm:$0xf]
        %v1785 = vld [vmem:[%s1751 + $0x84] sm:$0xf]
        %v1786 = vld [vmem:[%s1751 + $0x88] sm:$0xf]
        %v1787 = vld [vmem:[%s1751 + $0x8c] sm:$0xf]
        %v1788 = vld [vmem:[%s1751 + $0x90] sm:$0xf]
        %v1789 = vld [vmem:[%s1751 + $0x94] sm:$0xf]
        %v1790 = vld [vmem:[%s1751 + $0x98] sm:$0xf]
        %v1791 = vld [vmem:[%s1751 + $0x9c] sm:$0xf]
        %v1792 = vld [vmem:[%s1751 + $0xa0] sm:$0xf]
        %v1793 = vld [vmem:[%s1751 + $0xa4] sm:$0xf]
        %v1794 = vld [vmem:[%s1751 + $0xa8] sm:$0xf]
        %v1795 = vld [vmem:[%s1751 + $0xac] sm:$0xf]
        %v1796 = vld [vmem:[%s1751 + $0xb0] sm:$0xf]
        %v1797 = vld [vmem:[%s1751 + $0xb4] sm:$0xf]
        %v1798 = vld [vmem:[%s1751 + $0xb8] sm:$0xf]
        %v1799 = vld [vmem:[%s1751 + $0xbc] sm:$0xf]
        %v1800 = vld [vmem:[%s1751 + $0xc0] sm:$0xf]
        %v1801 = vld [vmem:[%s1751 + $0xc4] sm:$0xf]
        %v1802 = vld [vmem:[%s1751 + $0xc8] sm:$0xf]
        %v1803 = vld [vmem:[%s1751 + $0xcc] sm:$0xf]
        %v1804 = vld [vmem:[%s1751 + $0xd0] sm:$0xf]
        %v1805 = vld [vmem:[%s1751 + $0xd4] sm:$0xf]
        %v1806 = vld [vmem:[%s1751 + $0xd8] sm:$0xf]
        %v1807 = vld [vmem:[%s1751 + $0xdc] sm:$0xf]
        %v1808 = vld [vmem:[%s1751 + $0xe0] sm:$0xf]
        %v1809 = vld [vmem:[%s1751 + $0xe4] sm:$0xf]
        %v1810 = vld [vmem:[%s1751 + $0xe8] sm:$0xf]
        %v1811 = vld [vmem:[%s1751 + $0xec] sm:$0xf]
        %v1812 = vld [vmem:[%s1751 + $0xf0] sm:$0xf]
        %v1813 = vld [vmem:[%s1751 + $0xf4] sm:$0xf]
        %v1814 = vld [vmem:[%s1751 + $0xf8] sm:$0xf]
        %v1815 = vld [vmem:[%s1751 + $0xfc] sm:$0xf]
        %v1817 = vshrl.u32 %v1743, 16
        %v1819 = vshll.u32 %v1743, 16
        %v1821 = vrot.slane %v1819, 1
        %v1822 = vor.u32 %v1817, %v1821
        %v1824 = vshll.u32 %v1331, 16
        %v1826 = vrot.slane %v1824, 1
        %v1827 = vsel %vm518, %v1822, %v1826
        %v1829 = vshrl.u32 %v1744, 16
        %v1831 = vshll.u32 %v1744, 16
        %v1833 = vrot.slane %v1831, 1
        %v1834 = vor.u32 %v1829, %v1833
        %v1836 = vshll.u32 %v1332, 16
        %v1838 = vrot.slane %v1836, 1
        %v1839 = vsel %vm518, %v1834, %v1838
        %v1841 = vshrl.u32 %v1745, 16
        %v1843 = vshll.u32 %v1745, 16
        %v1845 = vrot.slane %v1843, 1
        %v1846 = vor.u32 %v1841, %v1845
        %v1848 = vshll.u32 %v1333, 16
        %v1850 = vrot.slane %v1848, 1
        %v1851 = vsel %vm518, %v1846, %v1850
        %v1853 = vshrl.u32 %v1746, 16
        %v1855 = vshll.u32 %v1746, 16
        %v1857 = vrot.slane %v1855, 1
        %v1858 = vor.u32 %v1853, %v1857
        %v1860 = vshll.u32 %v1334, 16
        %v1862 = vrot.slane %v1860, 1
        %v1863 = vsel %vm518, %v1858, %v1862
        %v1864 = vshrl.u32 %v1331, 16
        %v1866 = vor.u32 %v1864, %v1826
        %v1868 = vshll.u32 %v1335, 16
        %v1870 = vrot.slane %v1868, 1
        %v1871 = vsel %vm518, %v1866, %v1870
        %v1872 = vshrl.u32 %v1332, 16
        %v1874 = vor.u32 %v1872, %v1838
        %v1876 = vshll.u32 %v1336, 16
        %v1878 = vrot.slane %v1876, 1
        %v1879 = vsel %vm518, %v1874, %v1878
        %v1880 = vshrl.u32 %v1333, 16
        %v1882 = vor.u32 %v1880, %v1850
        %v1884 = vshll.u32 %v1337, 16
        %v1886 = vrot.slane %v1884, 1
        %v1887 = vsel %vm518, %v1882, %v1886
        %v1888 = vshrl.u32 %v1334, 16
        %v1890 = vor.u32 %v1888, %v1862
        %v1892 = vshll.u32 %v1338, 16
        %v1894 = vrot.slane %v1892, 1
        %v1895 = vsel %vm518, %v1890, %v1894
        %v1896 = vshrl.u32 %v1335, 16
        %v1898 = vor.u32 %v1896, %v1870
        %v1900 = vshll.u32 %v1747, 16
        %v1902 = vrot.slane %v1900, 1
        %v1903 = vsel %vm518, %v1898, %v1902
        %v1904 = vshrl.u32 %v1336, 16
        %v1906 = vor.u32 %v1904, %v1878
        %v1908 = vshll.u32 %v1748, 16
        %v1910 = vrot.slane %v1908, 1
        %v1911 = vsel %vm518, %v1906, %v1910
        %v1912 = vshrl.u32 %v1337, 16
        %v1914 = vor.u32 %v1912, %v1886
        %v1916 = vshll.u32 %v1749, 16
        %v1918 = vrot.slane %v1916, 1
        %v1919 = vsel %vm518, %v1914, %v1918
        %v1920 = vshrl.u32 %v1338, 16
        %v1922 = vor.u32 %v1920, %v1894
        %v1924 = vshll.u32 %v1750, 16
        %v1926 = vrot.slane %v1924, 1
        %v1927 = vsel %vm518, %v1922, %v1926
        %v1928 = vshrl.u32 %v1747, 16
        %v1930 = vor.u32 %v1928, %v1902
        %v1931 = vshrl.u32 %v1748, 16
        %v1933 = vor.u32 %v1931, %v1910
        %v1934 = vshrl.u32 %v1749, 16
        %v1936 = vor.u32 %v1934, %v1918
        %v1937 = vshrl.u32 %v1750, 16
        %v1939 = vor.u32 %v1937, %v1926
        %v2020 = vunpack.c.l.b16 %v1752
        %v2021 = vunpack.c.l.b16 %v1753
        %v2022 = vunpack.c.l.b16 %v1754
        %v2023 = vunpack.c.l.b16 %v1755
        %v2024 = vunpack.c.l.b16 %v1756
        %v2025 = vunpack.c.l.b16 %v1757
        %v2026 = vunpack.c.l.b16 %v1758
        %v2027 = vunpack.c.l.b16 %v1759
        %v2028 = vunpack.c.l.b16 %v1760
        %v2029 = vunpack.c.l.b16 %v1761
        %v2030 = vunpack.c.l.b16 %v1762
        %v2031 = vunpack.c.l.b16 %v1763
        %v2032 = vunpack.c.l.b16 %v1764
        %v2033 = vunpack.c.l.b16 %v1765
        %v2034 = vunpack.c.l.b16 %v1766
        %v2035 = vunpack.c.l.b16 %v1767
        %v2036 = vunpack.c.l.b16 %v1768
        %v2037 = vunpack.c.l.b16 %v1769
        %v2038 = vunpack.c.l.b16 %v1770
        %v2039 = vunpack.c.l.b16 %v1771
        %v2040 = vunpack.c.l.b16 %v1772
        %v2041 = vunpack.c.l.b16 %v1773
        %v2042 = vunpack.c.l.b16 %v1774
        %v2043 = vunpack.c.l.b16 %v1775
        %v2044 = vunpack.c.l.b16 %v1776
        %v2045 = vunpack.c.l.b16 %v1777
        %v2046 = vunpack.c.l.b16 %v1778
        %v2047 = vunpack.c.l.b16 %v1779
        %v2048 = vunpack.c.l.b16 %v1780
        %v2049 = vunpack.c.l.b16 %v1781
        %v2050 = vunpack.c.l.b16 %v1782
        %v2051 = vunpack.c.l.b16 %v1783
        %v2052 = vunpack.c.l.b16 %v1784
        %v2053 = vunpack.c.l.b16 %v1785
        %v2054 = vunpack.c.l.b16 %v1786
        %v2055 = vunpack.c.l.b16 %v1787
        %v2056 = vunpack.c.l.b16 %v1788
        %v2057 = vunpack.c.l.b16 %v1789
        %v2058 = vunpack.c.l.b16 %v1790
        %v2059 = vunpack.c.l.b16 %v1791
        %v2060 = vunpack.c.l.b16 %v1792
        %v2061 = vunpack.c.l.b16 %v1793
        %v2062 = vunpack.c.l.b16 %v1794
        %v2063 = vunpack.c.l.b16 %v1795
        %v2064 = vunpack.c.l.b16 %v1796
        %v2065 = vunpack.c.l.b16 %v1797
        %v2066 = vunpack.c.l.b16 %v1798
        %v2067 = vunpack.c.l.b16 %v1799
        %v2068 = vunpack.c.l.b16 %v1800
        %v2069 = vunpack.c.l.b16 %v1801
        %v2070 = vunpack.c.l.b16 %v1802
        %v2071 = vunpack.c.l.b16 %v1803
        %v2072 = vunpack.c.l.b16 %v1804
        %v2073 = vunpack.c.l.b16 %v1805
        %v2074 = vunpack.c.l.b16 %v1806
        %v2075 = vunpack.c.l.b16 %v1807
        %v2076 = vunpack.c.l.b16 %v1808
        %v2077 = vunpack.c.l.b16 %v1809
        %v2078 = vunpack.c.l.b16 %v1810
        %v2079 = vunpack.c.l.b16 %v1811
        %v2080 = vunpack.c.l.b16 %v1812
        %v2081 = vunpack.c.l.b16 %v1813
        %v2082 = vunpack.c.l.b16 %v1814
        %v2083 = vunpack.c.l.b16 %v1815
        %v2084 = vpack.c.b16 %v2021, %v2020
        %v2085 = vpack.c.b16 %v2023, %v2022
        %v2086 = vpack.c.b16 %v2025, %v2024
        %v2087 = vpack.c.b16 %v2027, %v2026
        %v2088 = vpack.c.b16 %v2029, %v2028
        %v2089 = vpack.c.b16 %v2031, %v2030
        %v2090 = vpack.c.b16 %v2033, %v2032
        %v2091 = vpack.c.b16 %v2035, %v2034
        %v2092 = vpack.c.b16 %v2037, %v2036
        %v2093 = vpack.c.b16 %v2039, %v2038
        %v2094 = vpack.c.b16 %v2041, %v2040
        %v2095 = vpack.c.b16 %v2043, %v2042
        %v2096 = vpack.c.b16 %v2045, %v2044
        %v2097 = vpack.c.b16 %v2047, %v2046
        %v2098 = vpack.c.b16 %v2049, %v2048
        %v2099 = vpack.c.b16 %v2051, %v2050
        %v2100 = vpack.c.b16 %v2053, %v2052
        %v2101 = vpack.c.b16 %v2055, %v2054
        %v2102 = vpack.c.b16 %v2057, %v2056
        %v2103 = vpack.c.b16 %v2059, %v2058
        %v2104 = vpack.c.b16 %v2061, %v2060
        %v2105 = vpack.c.b16 %v2063, %v2062
        %v2106 = vpack.c.b16 %v2065, %v2064
        %v2107 = vpack.c.b16 %v2067, %v2066
        %v2108 = vpack.c.b16 %v2069, %v2068
        %v2109 = vpack.c.b16 %v2071, %v2070
        %v2110 = vpack.c.b16 %v2073, %v2072
        %v2111 = vpack.c.b16 %v2075, %v2074
        %v2112 = vpack.c.b16 %v2077, %v2076
        %v2113 = vpack.c.b16 %v2079, %v2078
        %v2114 = vpack.c.b16 %v2081, %v2080
        %v2115 = vpack.c.b16 %v2083, %v2082
        %2148 = vmatprep.subr.bf16.mxu0 0
        %2149 = vmatpush1.bf16.msra.mxu0 %v2091
        %2150 = vmatprep.subr.bf16.mxu0 0
        %2151 = vmatpush1.bf16.msra.mxu0 %v2090
        %2152 = vmatprep.subr.bf16.mxu0 0
        %2153 = vmatpush1.bf16.msra.mxu0 %v2089
        %2154 = vmatprep.subr.bf16.mxu0 0
        %2155 = vmatpush1.bf16.msra.mxu0 %v2088
        %2156 = vmatprep.subr.bf16.mxu0 0
        %2157 = vmatpush1.bf16.msra.mxu0 %v2087
        %2158 = vmatprep.subr.bf16.mxu0 0
        %2159 = vmatpush1.bf16.msra.mxu0 %v2086
        %2160 = vmatprep.subr.bf16.mxu0 0
        %2161 = vmatpush1.bf16.msra.mxu0 %v2085
        %2162 = vmatprep.subr.bf16.mxu0 0
        %2163 = vmatpush1.bf16.msra.mxu0 %v2084
        %2164 = vmatprep.subr.bf16.mxu0 0
        %2165 = vmatpush2.bf16.msra.mxu0 %v2099
        %2166 = vmatprep.subr.bf16.mxu0 0
        %2167 = vmatpush2.bf16.msra.mxu0 %v2098
        %2168 = vmatprep.subr.bf16.mxu0 0
        %2169 = vmatpush2.bf16.msra.mxu0 %v2097
        %2170 = vmatprep.subr.bf16.mxu0 0
        %2171 = vmatpush2.bf16.msra.mxu0 %v2096
        %2172 = vmatprep.subr.bf16.mxu0 0
        %2173 = vmatpush2.bf16.msra.mxu0 %v2095
        %2174 = vmatprep.subr.bf16.mxu0 0
        %2175 = vmatpush2.bf16.msra.mxu0 %v2094
        %2176 = vmatprep.subr.bf16.mxu0 0
        %2177 = vmatpush2.bf16.msra.mxu0 %v2093
        %2178 = vmatprep.subr.bf16.mxu0 0
        %2179 = vmatpush2.bf16.msra.mxu0 %v2092
        %2180 = vmatprep.mubr.bf16.mxu0 %v1839
        %2181 = vmatmul.mubr.bf16.gmra.mxu0 %v1827
        %v2182 = vpop.f32.mrf.mxu0
        %v2183 = vadd.f32 0.0, %v2182
        %v2184 = vpop.f32.mrf.mxu0
        %v2185 = vpop.f32.mrf.mxu0
        %v2186 = vadd.f32 0.0, %v2185
        %v2187 = vpop.f32.mrf.mxu0
        %2188 = vmatprep.mubr.bf16.mxu0 %v1879
        %2189 = vmatmul.mubr.bf16.gmra.mxu0 %v1871
        %v2190 = vpop.f32.mrf.mxu0
        %v2191 = vadd.f32 0.0, %v2190
        %v2192 = vpop.f32.mrf.mxu0
        %v2193 = vpop.f32.mrf.mxu0
        %v2194 = vadd.f32 0.0, %v2193
        %v2195 = vpop.f32.mrf.mxu0
        %2196 = vmatprep.mubr.bf16.mxu0 %v1911
        %2197 = vmatmul.mubr.bf16.gmra.mxu0 %v1903
        %v2198 = vpop.f32.mrf.mxu0
        %v2199 = vadd.f32 0.0, %v2198
        %v2200 = vpop.f32.mrf.mxu0
        %v2201 = vpop.f32.mrf.mxu0
        %v2202 = vadd.f32 0.0, %v2201
        %v2203 = vpop.f32.mrf.mxu0
        %2204 = vmatprep.mubr.bf16.mxu0 %v1933
        %2205 = vmatmul.mubr.bf16.gmra.mxu0 %v1930
        %v2206 = vpop.f32.mrf.mxu0
        %v2207 = vadd.f32 0.0, %v2206
        %v2208 = vpop.f32.mrf.mxu0
        %v2209 = vpop.f32.mrf.mxu0
        %v2210 = vpop.f32.mrf.mxu0
        %2211 = vdwg.mxu0
        %2212 = vmatprep.subr.bf16.mxu0 0
        %2213 = vmatpush1.bf16.msra.mxu0 %v2107
        %2214 = vmatprep.subr.bf16.mxu0 0
        %2215 = vmatpush1.bf16.msra.mxu0 %v2106
        %2216 = vmatprep.subr.bf16.mxu0 0
        %2217 = vmatpush1.bf16.msra.mxu0 %v2105
        %2218 = vmatprep.subr.bf16.mxu0 0
        %2219 = vmatpush1.bf16.msra.mxu0 %v2104
        %2220 = vmatprep.subr.bf16.mxu0 0
        %2221 = vmatpush1.bf16.msra.mxu0 %v2103
        %2222 = vmatprep.subr.bf16.mxu0 0
        %2223 = vmatpush1.bf16.msra.mxu0 %v2102
        %2224 = vmatprep.subr.bf16.mxu0 0
        %2225 = vmatpush1.bf16.msra.mxu0 %v2101
        %2226 = vmatprep.subr.bf16.mxu0 0
        %2227 = vmatpush1.bf16.msra.mxu0 %v2100
        %2228 = vmatprep.subr.bf16.mxu0 0
        %2229 = vmatpush2.bf16.msra.mxu0 %v2115
        %2230 = vmatprep.subr.bf16.mxu0 0
        %2231 = vmatpush2.bf16.msra.mxu0 %v2114
        %2232 = vmatprep.subr.bf16.mxu0 0
        %2233 = vmatpush2.bf16.msra.mxu0 %v2113
        %2234 = vmatprep.subr.bf16.mxu0 0
        %2235 = vmatpush2.bf16.msra.mxu0 %v2112
        %2236 = vmatprep.subr.bf16.mxu0 0
        %2237 = vmatpush2.bf16.msra.mxu0 %v2111
        %2238 = vmatprep.subr.bf16.mxu0 0
        %2239 = vmatpush2.bf16.msra.mxu0 %v2110
        %2240 = vmatprep.subr.bf16.mxu0 0
        %2241 = vmatpush2.bf16.msra.mxu0 %v2109
        %2242 = vmatprep.subr.bf16.mxu0 0
        %2243 = vmatpush2.bf16.msra.mxu0 %v2108
        %2244 = vmatprep.mubr.bf16.mxu0 %v1863
        %2245 = vmatmul.mubr.bf16.gmra.mxu0 %v1851
        %v2246 = vpop.f32.mrf.mxu0
        %v2247 = vadd.f32 %v2183, %v2246
        %v2248 = vpop.f32.mrf.mxu0
        %v2249 = vpop.f32.mrf.mxu0
        %v2250 = vadd.f32 %v2186, %v2249
        %v2251 = vpop.f32.mrf.mxu0
        %2252 = vmatprep.mubr.bf16.mxu0 %v1895
        %2253 = vmatmul.mubr.bf16.gmra.mxu0 %v1887
        %v2254 = vpop.f32.mrf.mxu0
        %v2255 = vadd.f32 %v2191, %v2254
        %v2256 = vpop.f32.mrf.mxu0
        %v2257 = vpop.f32.mrf.mxu0
        %v2258 = vadd.f32 %v2194, %v2257
        %v2259 = vpop.f32.mrf.mxu0
        %2260 = vmatprep.mubr.bf16.mxu0 %v1927
        %2261 = vmatmul.mubr.bf16.gmra.mxu0 %v1919
        %v2262 = vpop.f32.mrf.mxu0
        %v2263 = vadd.f32 %v2199, %v2262
        %v2264 = vpop.f32.mrf.mxu0
        %v2265 = vpop.f32.mrf.mxu0
        %v2266 = vadd.f32 %v2202, %v2265
        %v2267 = vpop.f32.mrf.mxu0
        %2268 = vmatprep.mubr.bf16.mxu0 %v1939
        %2269 = vmatmul.mubr.bf16.gmra.mxu0 %v1936
        %v2270 = vpop.f32.mrf.mxu0
        %v2271 = vadd.f32 %v2207, %v2270
        %v2272 = vpop.f32.mrf.mxu0
        %v2273 = vpop.f32.mrf.mxu0
        %v2274 = vpop.f32.mrf.mxu0
        %2275 = vdwg.mxu0
        %v2276 = vadd.f32 %v1728, %v2247
        %v2277 = vadd.f32 %v1729, %v2250
        %v2278 = vadd.f32 %v1730, %v2255
        %v2279 = vadd.f32 %v1731, %v2258
        %v2280 = vadd.f32 %v1732, %v2263
        %v2281 = vadd.f32 %v1733, %v2266
        %v2282 = vadd.f32 %v1734, %v2271
        %v2283 = vmax.f32 %v2276, 0.0
        %v2284 = vmax.f32 %v2277, 0.0
        %v2285 = vmax.f32 %v2278, 0.0
        %v2286 = vmax.f32 %v2279, 0.0
        %v2287 = vmax.f32 %v2280, 0.0
        %v2288 = vmax.f32 %v2281, 0.0
        %v2289 = vmax.f32 %v2282, 0.0
        %2290 = vst [vmem:[#allocation2] sm:$0xff] 0.0
        %2291 = vst [vmem:[#allocation2 + $0x8] sm:$0xff] 0.0
        %2292 = vst [vmem:[#allocation2 + $0x10] sm:$0xff] 0.0
        %2293 = vst [vmem:[#allocation2 + $0x18] sm:$0xff] 0.0
        %2294 = vst [vmem:[#allocation2 + $0x20] sm:$0xff] 0.0
        %2295 = vst [vmem:[#allocation2 + $0x28] sm:$0xff] 0.0
        %2296 = vst [vmem:[#allocation2 + $0x30] sm:$0xff] 0.0
        %2297 = vst [vmem:[#allocation2 + $0x38] sm:$0xff] 0.0
        %2298 = vst [vmem:[#allocation2 + $0x40] sm:$0xff] 0.0
        %2299 = vst [vmem:[#allocation2 + $0x48] sm:$0xff] 0.0
        %2300 = vst [vmem:[#allocation2 + $0x50] sm:$0x1] 0.0
        %2301 = vst [vmem:[#allocation2 + $0xa] sm:$0x7f] %v2283
        %2302 = vst [vmem:[#allocation2 + $0x13] sm:$0x7f] %v2284
        %2303 = vst [vmem:[#allocation2 + $0x1c] sm:$0x7f] %v2285
        %2304 = vst [vmem:[#allocation2 + $0x25] sm:$0x7f] %v2286
        %2305 = vst [vmem:[#allocation2 + $0x2e] sm:$0x7f] %v2287
        %2306 = vst [vmem:[#allocation2 + $0x37] sm:$0x7f] %v2288
        %2307 = vst [vmem:[#allocation2 + $0x40] sm:$0x7f] %v2289
        %v2308 = vld [vmem:[%s4] sm:$0x1]
        %v2309 = vld [vmem:[%s5] sm:$0x1]
        %v2310 = vld [vmem:[%s6] sm:$0xff]
        %v2311 = vld [vmem:[%s6 + $0x8] sm:$0xff]
        %v2312 = vld [vmem:[%s6 + $0x10] sm:$0xff]
        %v2313 = vld [vmem:[%s6 + $0x18] sm:$0xff]
        %v2314 = vld [vmem:[%s6 + $0x20] sm:$0xff]
        %v2315 = vld [vmem:[%s6 + $0x28] sm:$0xff]
        %v2316 = vld [vmem:[%s6 + $0x30] sm:$0xff]
        %v2317 = vld [vmem:[%s6 + $0x38] sm:$0x1f]
        %v2318 = vld [vmem:[#allocation2] sm:$0xff]
        %v2319 = vld [vmem:[#allocation2 + $0x8] sm:$0xff]
        %v2320 = vld [vmem:[#allocation2 + $0x10] sm:$0xff]
        %v2321 = vld [vmem:[#allocation2 + $0x18] sm:$0xff]
        %v2322 = vld [vmem:[#allocation2 + $0x20] sm:$0xff]
        %v2323 = vld [vmem:[#allocation2 + $0x28] sm:$0xff]
        %v2324 = vld [vmem:[#allocation2 + $0x30] sm:$0xff]
        %v2325 = vld [vmem:[#allocation2 + $0x38] sm:$0x1f]
        %v2326 = vpack.c.bf16 %v2319, %v2318
        %v2327 = vpack.c.bf16 %v2321, %v2320
        %v2328 = vpack.c.bf16 %v2323, %v2322
        %v2329 = vpack.c.bf16 %v2325, %v2324
        %v2330 = vld [vmem:[#allocation8] sm:$0xf]
        %v2331 = vld [vmem:[#allocation8 + $0x4] sm:$0xf]
        %v2332 = vld [vmem:[#allocation8 + $0x8] sm:$0xf]
        %v2333 = vld [vmem:[#allocation8 + $0xc] sm:$0xf]
        %v2334 = vld [vmem:[#allocation8 + $0x10] sm:$0xf]
        %v2335 = vld [vmem:[#allocation8 + $0x14] sm:$0xf]
        %v2336 = vld [vmem:[#allocation8 + $0x18] sm:$0xf]
        %v2337 = vld [vmem:[#allocation8 + $0x1c] sm:$0xf]
        %v2338 = vld [vmem:[#allocation8 + $0x20] sm:$0xf]
        %v2339 = vld [vmem:[#allocation8 + $0x24] sm:$0xf]
        %v2340 = vld [vmem:[#allocation8 + $0x28] sm:$0xf]
        %v2341 = vld [vmem:[#allocation8 + $0x2c] sm:$0xf]
        %v2342 = vld [vmem:[#allocation8 + $0x30] sm:$0xf]
        %v2343 = vld [vmem:[#allocation8 + $0x34] sm:$0xf]
        %v2344 = vld [vmem:[#allocation8 + $0x38] sm:$0xf]
        %v2345 = vld [vmem:[#allocation8 + $0x3c] sm:$0xf]
        %v2346 = vld [vmem:[#allocation2 + $0x1] sm:$0xff]
        %v2347 = vld [vmem:[#allocation2 + $0x9] sm:$0xff]
        %v2348 = vld [vmem:[#allocation2 + $0x11] sm:$0xff]
        %v2349 = vld [vmem:[#allocation2 + $0x19] sm:$0xff]
        %v2350 = vld [vmem:[#allocation2 + $0x21] sm:$0xff]
        %v2351 = vld [vmem:[#allocation2 + $0x29] sm:$0xff]
        %v2352 = vld [vmem:[#allocation2 + $0x31] sm:$0xff]
        %v2353 = vld [vmem:[#allocation2 + $0x39] sm:$0x1f]
        %v2354 = vpack.c.bf16 %v2347, %v2346
        %v2355 = vpack.c.bf16 %v2349, %v2348
        %v2356 = vpack.c.bf16 %v2351, %v2350
        %v2357 = vpack.c.bf16 %v2353, %v2352
        %s2358 = scalar_lea.vmem [#allocation8], 64
        %v2359 = vld [vmem:[%s2358] sm:$0xf]
        %v2360 = vld [vmem:[%s2358 + $0x4] sm:$0xf]
        %v2361 = vld [vmem:[%s2358 + $0x8] sm:$0xf]
        %v2362 = vld [vmem:[%s2358 + $0xc] sm:$0xf]
        %v2363 = vld [vmem:[%s2358 + $0x10] sm:$0xf]
        %v2364 = vld [vmem:[%s2358 + $0x14] sm:$0xf]
        %v2365 = vld [vmem:[%s2358 + $0x18] sm:$0xf]
        %v2366 = vld [vmem:[%s2358 + $0x1c] sm:$0xf]
        %v2367 = vld [vmem:[%s2358 + $0x20] sm:$0xf]
        %v2368 = vld [vmem:[%s2358 + $0x24] sm:$0xf]
        %v2369 = vld [vmem:[%s2358 + $0x28] sm:$0xf]
        %v2370 = vld [vmem:[%s2358 + $0x2c] sm:$0xf]
        %v2371 = vld [vmem:[%s2358 + $0x30] sm:$0xf]
        %v2372 = vld [vmem:[%s2358 + $0x34] sm:$0xf]
        %v2373 = vld [vmem:[%s2358 + $0x38] sm:$0xf]
        %v2374 = vld [vmem:[%s2358 + $0x3c] sm:$0xf]
        %v2391 = vunpack.c.l.b16 %v2359
        %v2392 = vunpack.c.l.b16 %v2360
        %v2393 = vunpack.c.l.b16 %v2361
        %v2394 = vunpack.c.l.b16 %v2362
        %v2395 = vunpack.c.l.b16 %v2363
        %v2396 = vunpack.c.l.b16 %v2364
        %v2397 = vunpack.c.l.b16 %v2365
        %v2398 = vunpack.c.l.b16 %v2366
        %v2399 = vunpack.c.l.b16 %v2367
        %v2400 = vunpack.c.l.b16 %v2368
        %v2401 = vunpack.c.l.b16 %v2369
        %v2402 = vunpack.c.l.b16 %v2370
        %v2403 = vunpack.c.l.b16 %v2371
        %v2404 = vunpack.c.l.b16 %v2372
        %v2405 = vunpack.c.l.b16 %v2373
        %v2406 = vunpack.c.l.b16 %v2374
        %v2407 = vpack.c.b16 %v2392, %v2391
        %v2408 = vpack.c.b16 %v2394, %v2393
        %v2409 = vpack.c.b16 %v2396, %v2395
        %v2410 = vpack.c.b16 %v2398, %v2397
        %v2411 = vpack.c.b16 %v2400, %v2399
        %v2412 = vpack.c.b16 %v2402, %v2401
        %v2413 = vpack.c.b16 %v2404, %v2403
        %v2414 = vpack.c.b16 %v2406, %v2405
        %2423 = vmatprep.subr.bf16.mxu0 0
        %2424 = vmatpush1.bf16.msra.mxu0 %v2414
        %2425 = vmatprep.subr.bf16.mxu0 0
        %2426 = vmatpush1.bf16.msra.mxu0 %v2413
        %2427 = vmatprep.subr.bf16.mxu0 0
        %2428 = vmatpush1.bf16.msra.mxu0 %v2412
        %2429 = vmatprep.subr.bf16.mxu0 0
        %2430 = vmatpush1.bf16.msra.mxu0 %v2411
        %2431 = vmatprep.subr.bf16.mxu0 0
        %2432 = vmatpush1.bf16.msra.mxu0 %v2410
        %2433 = vmatprep.subr.bf16.mxu0 0
        %2434 = vmatpush1.bf16.msra.mxu0 %v2409
        %2435 = vmatprep.subr.bf16.mxu0 0
        %2436 = vmatpush1.bf16.msra.mxu0 %v2408
        %2437 = vmatprep.subr.bf16.mxu0 0
        %2438 = vmatpush1.bf16.msra.mxu0 %v2407
        %2439 = vmatprep.subr.bf16.mxu0 0
        %2440 = vmatpush2.bf16.msra.mxu0 0
        %2441 = vmatprep.subr.bf16.mxu0 0
        %2442 = vmatpush2.bf16.msra.mxu0 0
        %2443 = vmatprep.subr.bf16.mxu0 0
        %2444 = vmatpush2.bf16.msra.mxu0 0
        %2445 = vmatprep.subr.bf16.mxu0 0
        %2446 = vmatpush2.bf16.msra.mxu0 0
        %2447 = vmatprep.subr.bf16.mxu0 0
        %2448 = vmatpush2.bf16.msra.mxu0 0
        %2449 = vmatprep.subr.bf16.mxu0 0
        %2450 = vmatpush2.bf16.msra.mxu0 0
        %2451 = vmatprep.subr.bf16.mxu0 0
        %2452 = vmatpush2.bf16.msra.mxu0 0
        %2453 = vmatprep.subr.bf16.mxu0 0
        %2454 = vmatpush2.bf16.msra.mxu0 0
        %2455 = vmatprep.mubr.bf16.mxu0 0
        %2456 = vmatmul.mubr.bf16.gmra.mxu0 %v2354
        %v2457 = vpop.f32.mrf.mxu0
        %v2458 = vadd.f32 0.0, %v2457
        %v2459 = vpop.f32.mrf.mxu0
        %v2460 = vpop.f32.mrf.mxu0
        %v2461 = vadd.f32 0.0, %v2460
        %v2462 = vpop.f32.mrf.mxu0
        %2463 = vmatprep.mubr.bf16.mxu0 0
        %2464 = vmatmul.mubr.bf16.gmra.mxu0 %v2355
        %v2465 = vpop.f32.mrf.mxu0
        %v2466 = vadd.f32 0.0, %v2465
        %v2467 = vpop.f32.mrf.mxu0
        %v2468 = vpop.f32.mrf.mxu0
        %v2469 = vadd.f32 0.0, %v2468
        %v2470 = vpop.f32.mrf.mxu0
        %2471 = vmatprep.mubr.bf16.mxu0 0
        %2472 = vmatmul.mubr.bf16.gmra.mxu0 %v2356
        %v2473 = vpop.f32.mrf.mxu0
        %v2474 = vadd.f32 0.0, %v2473
        %v2475 = vpop.f32.mrf.mxu0
        %v2476 = vpop.f32.mrf.mxu0
        %v2477 = vadd.f32 0.0, %v2476
        %v2478 = vpop.f32.mrf.mxu0
        %2479 = vmatprep.mubr.bf16.mxu0 0
        %2480 = vmatmul.mubr.bf16.gmra.mxu0 %v2357
        %v2481 = vpop.f32.mrf.mxu0
        %v2482 = vadd.f32 0.0, %v2481
        %v2483 = vpop.f32.mrf.mxu0
        %v2484 = vpop.f32.mrf.mxu0
        %v2485 = vadd.f32 0.0, %v2484
        %v2486 = vpop.f32.mrf.mxu0
        %2487 = vdwg.mxu0
        %v2504 = vunpack.c.l.b16 %v2330
        %v2505 = vunpack.c.l.b16 %v2331
        %v2506 = vunpack.c.l.b16 %v2332
        %v2507 = vunpack.c.l.b16 %v2333
        %v2508 = vunpack.c.l.b16 %v2334
        %v2509 = vunpack.c.l.b16 %v2335
        %v2510 = vunpack.c.l.b16 %v2336
        %v2511 = vunpack.c.l.b16 %v2337
        %v2512 = vunpack.c.l.b16 %v2338
        %v2513 = vunpack.c.l.b16 %v2339
        %v2514 = vunpack.c.l.b16 %v2340
        %v2515 = vunpack.c.l.b16 %v2341
        %v2516 = vunpack.c.l.b16 %v2342
        %v2517 = vunpack.c.l.b16 %v2343
        %v2518 = vunpack.c.l.b16 %v2344
        %v2519 = vunpack.c.l.b16 %v2345
        %v2520 = vpack.c.b16 %v2505, %v2504
        %v2521 = vpack.c.b16 %v2507, %v2506
        %v2522 = vpack.c.b16 %v2509, %v2508
        %v2523 = vpack.c.b16 %v2511, %v2510
        %v2524 = vpack.c.b16 %v2513, %v2512
        %v2525 = vpack.c.b16 %v2515, %v2514
        %v2526 = vpack.c.b16 %v2517, %v2516
        %v2527 = vpack.c.b16 %v2519, %v2518
        %2536 = vmatprep.subr.bf16.mxu0 0
        %2537 = vmatpush1.bf16.msra.mxu0 %v2527
        %2538 = vmatprep.subr.bf16.mxu0 0
        %2539 = vmatpush1.bf16.msra.mxu0 %v2526
        %2540 = vmatprep.subr.bf16.mxu0 0
        %2541 = vmatpush1.bf16.msra.mxu0 %v2525
        %2542 = vmatprep.subr.bf16.mxu0 0
        %2543 = vmatpush1.bf16.msra.mxu0 %v2524
        %2544 = vmatprep.subr.bf16.mxu0 0
        %2545 = vmatpush1.bf16.msra.mxu0 %v2523
        %2546 = vmatprep.subr.bf16.mxu0 0
        %2547 = vmatpush1.bf16.msra.mxu0 %v2522
        %2548 = vmatprep.subr.bf16.mxu0 0
        %2549 = vmatpush1.bf16.msra.mxu0 %v2521
        %2550 = vmatprep.subr.bf16.mxu0 0
        %2551 = vmatpush1.bf16.msra.mxu0 %v2520
        %2552 = vmatprep.subr.bf16.mxu0 0
        %2553 = vmatpush2.bf16.msra.mxu0 0
        %2554 = vmatprep.subr.bf16.mxu0 0
        %2555 = vmatpush2.bf16.msra.mxu0 0
        %2556 = vmatprep.subr.bf16.mxu0 0
        %2557 = vmatpush2.bf16.msra.mxu0 0
        %2558 = vmatprep.subr.bf16.mxu0 0
        %2559 = vmatpush2.bf16.msra.mxu0 0
        %2560 = vmatprep.subr.bf16.mxu0 0
        %2561 = vmatpush2.bf16.msra.mxu0 0
        %2562 = vmatprep.subr.bf16.mxu0 0
        %2563 = vmatpush2.bf16.msra.mxu0 0
        %2564 = vmatprep.subr.bf16.mxu0 0
        %2565 = vmatpush2.bf16.msra.mxu0 0
        %2566 = vmatprep.subr.bf16.mxu0 0
        %2567 = vmatpush2.bf16.msra.mxu0 0
        %2568 = vmatprep.mubr.bf16.mxu0 0
        %2569 = vmatmul.mubr.bf16.gmra.mxu0 %v2326
        %v2570 = vpop.f32.mrf.mxu0
        %v2571 = vadd.f32 %v2458, %v2570
        %v2572 = vpop.f32.mrf.mxu0
        %v2573 = vpop.f32.mrf.mxu0
        %v2574 = vadd.f32 %v2461, %v2573
        %v2575 = vpop.f32.mrf.mxu0
        %2576 = vmatprep.mubr.bf16.mxu0 0
        %2577 = vmatmul.mubr.bf16.gmra.mxu0 %v2327
        %v2578 = vpop.f32.mrf.mxu0
        %v2579 = vadd.f32 %v2466, %v2578
        %v2580 = vpop.f32.mrf.mxu0
        %v2581 = vpop.f32.mrf.mxu0
        %v2582 = vadd.f32 %v2469, %v2581
        %v2583 = vpop.f32.mrf.mxu0
        %2584 = vmatprep.mubr.bf16.mxu0 0
        %2585 = vmatmul.mubr.bf16.gmra.mxu0 %v2328
        %v2586 = vpop.f32.mrf.mxu0
        %v2587 = vadd.f32 %v2474, %v2586
        %v2588 = vpop.f32.mrf.mxu0
        %v2589 = vpop.f32.mrf.mxu0
        %v2590 = vadd.f32 %v2477, %v2589
        %v2591 = vpop.f32.mrf.mxu0
        %2592 = vmatprep.mubr.bf16.mxu0 0
        %2593 = vmatmul.mubr.bf16.gmra.mxu0 %v2329
        %v2594 = vpop.f32.mrf.mxu0
        %v2595 = vadd.f32 %v2482, %v2594
        %v2596 = vpop.f32.mrf.mxu0
        %v2597 = vpop.f32.mrf.mxu0
        %v2598 = vadd.f32 %v2485, %v2597
        %v2599 = vpop.f32.mrf.mxu0
        %2600 = vdwg.mxu0
        %v2601 = vld [vmem:[#allocation2 + $0x2] sm:$0xff]
        %v2602 = vld [vmem:[#allocation2 + $0xa] sm:$0xff]
        %v2603 = vld [vmem:[#allocation2 + $0x12] sm:$0xff]
        %v2604 = vld [vmem:[#allocation2 + $0x1a] sm:$0xff]
        %v2605 = vld [vmem:[#allocation2 + $0x22] sm:$0xff]
        %v2606 = vld [vmem:[#allocation2 + $0x2a] sm:$0xff]
        %v2607 = vld [vmem:[#allocation2 + $0x32] sm:$0xff]
        %v2608 = vld [vmem:[#allocation2 + $0x3a] sm:$0x1f]
        %v2609 = vpack.c.bf16 %v2602, %v2601
        %v2610 = vpack.c.bf16 %v2604, %v2603
        %v2611 = vpack.c.bf16 %v2606, %v2605
        %v2612 = vpack.c.bf16 %v2608, %v2607
        %s2613 = scalar_lea.vmem [#allocation8], 128
        %v2614 = vld [vmem:[%s2613] sm:$0xf]
        %v2615 = vld [vmem:[%s2613 + $0x4] sm:$0xf]
        %v2616 = vld [vmem:[%s2613 + $0x8] sm:$0xf]
        %v2617 = vld [vmem:[%s2613 + $0xc] sm:$0xf]
        %v2618 = vld [vmem:[%s2613 + $0x10] sm:$0xf]
        %v2619 = vld [vmem:[%s2613 + $0x14] sm:$0xf]
        %v2620 = vld [vmem:[%s2613 + $0x18] sm:$0xf]
        %v2621 = vld [vmem:[%s2613 + $0x1c] sm:$0xf]
        %v2622 = vld [vmem:[%s2613 + $0x20] sm:$0xf]
        %v2623 = vld [vmem:[%s2613 + $0x24] sm:$0xf]
        %v2624 = vld [vmem:[%s2613 + $0x28] sm:$0xf]
        %v2625 = vld [vmem:[%s2613 + $0x2c] sm:$0xf]
        %v2626 = vld [vmem:[%s2613 + $0x30] sm:$0xf]
        %v2627 = vld [vmem:[%s2613 + $0x34] sm:$0xf]
        %v2628 = vld [vmem:[%s2613 + $0x38] sm:$0xf]
        %v2629 = vld [vmem:[%s2613 + $0x3c] sm:$0xf]
        %v2646 = vunpack.c.l.b16 %v2614
        %v2647 = vunpack.c.l.b16 %v2615
        %v2648 = vunpack.c.l.b16 %v2616
        %v2649 = vunpack.c.l.b16 %v2617
        %v2650 = vunpack.c.l.b16 %v2618
        %v2651 = vunpack.c.l.b16 %v2619
        %v2652 = vunpack.c.l.b16 %v2620
        %v2653 = vunpack.c.l.b16 %v2621
        %v2654 = vunpack.c.l.b16 %v2622
        %v2655 = vunpack.c.l.b16 %v2623
        %v2656 = vunpack.c.l.b16 %v2624
        %v2657 = vunpack.c.l.b16 %v2625
        %v2658 = vunpack.c.l.b16 %v2626
        %v2659 = vunpack.c.l.b16 %v2627
        %v2660 = vunpack.c.l.b16 %v2628
        %v2661 = vunpack.c.l.b16 %v2629
        %v2662 = vpack.c.b16 %v2647, %v2646
        %v2663 = vpack.c.b16 %v2649, %v2648
        %v2664 = vpack.c.b16 %v2651, %v2650
        %v2665 = vpack.c.b16 %v2653, %v2652
        %v2666 = vpack.c.b16 %v2655, %v2654
        %v2667 = vpack.c.b16 %v2657, %v2656
        %v2668 = vpack.c.b16 %v2659, %v2658
        %v2669 = vpack.c.b16 %v2661, %v2660
        %2678 = vmatprep.subr.bf16.mxu0 0
        %2679 = vmatpush1.bf16.msra.mxu0 %v2669
        %2680 = vmatprep.subr.bf16.mxu0 0
        %2681 = vmatpush1.bf16.msra.mxu0 %v2668
        %2682 = vmatprep.subr.bf16.mxu0 0
        %2683 = vmatpush1.bf16.msra.mxu0 %v2667
        %2684 = vmatprep.subr.bf16.mxu0 0
        %2685 = vmatpush1.bf16.msra.mxu0 %v2666
        %2686 = vmatprep.subr.bf16.mxu0 0
        %2687 = vmatpush1.bf16.msra.mxu0 %v2665
        %2688 = vmatprep.subr.bf16.mxu0 0
        %2689 = vmatpush1.bf16.msra.mxu0 %v2664
        %2690 = vmatprep.subr.bf16.mxu0 0
        %2691 = vmatpush1.bf16.msra.mxu0 %v2663
        %2692 = vmatprep.subr.bf16.mxu0 0
        %2693 = vmatpush1.bf16.msra.mxu0 %v2662
        %2694 = vmatprep.subr.bf16.mxu0 0
        %2695 = vmatpush2.bf16.msra.mxu0 0
        %2696 = vmatprep.subr.bf16.mxu0 0
        %2697 = vmatpush2.bf16.msra.mxu0 0
        %2698 = vmatprep.subr.bf16.mxu0 0
        %2699 = vmatpush2.bf16.msra.mxu0 0
        %2700 = vmatprep.subr.bf16.mxu0 0
        %2701 = vmatpush2.bf16.msra.mxu0 0
        %2702 = vmatprep.subr.bf16.mxu0 0
        %2703 = vmatpush2.bf16.msra.mxu0 0
        %2704 = vmatprep.subr.bf16.mxu0 0
        %2705 = vmatpush2.bf16.msra.mxu0 0
        %2706 = vmatprep.subr.bf16.mxu0 0
        %2707 = vmatpush2.bf16.msra.mxu0 0
        %2708 = vmatprep.subr.bf16.mxu0 0
        %2709 = vmatpush2.bf16.msra.mxu0 0
        %2710 = vmatprep.mubr.bf16.mxu0 0
        %2711 = vmatmul.mubr.bf16.gmra.mxu0 %v2609
        %v2712 = vpop.f32.mrf.mxu0
        %v2713 = vadd.f32 0.0, %v2712
        %v2714 = vpop.f32.mrf.mxu0
        %v2715 = vpop.f32.mrf.mxu0
        %v2716 = vadd.f32 0.0, %v2715
        %v2717 = vpop.f32.mrf.mxu0
        %2718 = vmatprep.mubr.bf16.mxu0 0
        %2719 = vmatmul.mubr.bf16.gmra.mxu0 %v2610
        %v2720 = vpop.f32.mrf.mxu0
        %v2721 = vadd.f32 0.0, %v2720
        %v2722 = vpop.f32.mrf.mxu0
        %v2723 = vpop.f32.mrf.mxu0
        %v2724 = vadd.f32 0.0, %v2723
        %v2725 = vpop.f32.mrf.mxu0
        %2726 = vmatprep.mubr.bf16.mxu0 0
        %2727 = vmatmul.mubr.bf16.gmra.mxu0 %v2611
        %v2728 = vpop.f32.mrf.mxu0
        %v2729 = vadd.f32 0.0, %v2728
        %v2730 = vpop.f32.mrf.mxu0
        %v2731 = vpop.f32.mrf.mxu0
        %v2732 = vadd.f32 0.0, %v2731
        %v2733 = vpop.f32.mrf.mxu0
        %2734 = vmatprep.mubr.bf16.mxu0 0
        %2735 = vmatmul.mubr.bf16.gmra.mxu0 %v2612
        %v2736 = vpop.f32.mrf.mxu0
        %v2737 = vadd.f32 0.0, %v2736
        %v2738 = vpop.f32.mrf.mxu0
        %v2739 = vpop.f32.mrf.mxu0
        %v2740 = vadd.f32 0.0, %v2739
        %v2741 = vpop.f32.mrf.mxu0
        %2742 = vdwg.mxu0
        %v2743 = vadd.f32 %v2571, %v2713
        %v2744 = vadd.f32 %v2574, %v2716
        %v2745 = vadd.f32 %v2579, %v2721
        %v2746 = vadd.f32 %v2582, %v2724
        %v2747 = vadd.f32 %v2587, %v2729
        %v2748 = vadd.f32 %v2590, %v2732
        %v2749 = vadd.f32 %v2595, %v2737
        %v2750 = vadd.f32 %v2598, %v2740
        %v2751 = vld [vmem:[#allocation2 + $0x9] sm:$0xff]
        %v2752 = vld [vmem:[#allocation2 + $0x11] sm:$0xff]
        %v2753 = vld [vmem:[#allocation2 + $0x19] sm:$0xff]
        %v2754 = vld [vmem:[#allocation2 + $0x21] sm:$0xff]
        %v2755 = vld [vmem:[#allocation2 + $0x29] sm:$0xff]
        %v2756 = vld [vmem:[#allocation2 + $0x31] sm:$0xff]
        %v2757 = vld [vmem:[#allocation2 + $0x39] sm:$0xff]
        %v2758 = vld [vmem:[#allocation2 + $0x41] sm:$0x1f]
        %v2759 = vpack.c.bf16 %v2752, %v2751
        %v2760 = vpack.c.bf16 %v2754, %v2753
        %v2761 = vpack.c.bf16 %v2756, %v2755
        %v2762 = vpack.c.bf16 %v2758, %v2757
        %s2763 = scalar_lea.vmem [#allocation8], 192
        %v2764 = vld [vmem:[%s2763] sm:$0xf]
        %v2765 = vld [vmem:[%s2763 + $0x4] sm:$0xf]
        %v2766 = vld [vmem:[%s2763 + $0x8] sm:$0xf]
        %v2767 = vld [vmem:[%s2763 + $0xc] sm:$0xf]
        %v2768 = vld [vmem:[%s2763 + $0x10] sm:$0xf]
        %v2769 = vld [vmem:[%s2763 + $0x14] sm:$0xf]
        %v2770 = vld [vmem:[%s2763 + $0x18] sm:$0xf]
        %v2771 = vld [vmem:[%s2763 + $0x1c] sm:$0xf]
        %v2772 = vld [vmem:[%s2763 + $0x20] sm:$0xf]
        %v2773 = vld [vmem:[%s2763 + $0x24] sm:$0xf]
        %v2774 = vld [vmem:[%s2763 + $0x28] sm:$0xf]
        %v2775 = vld [vmem:[%s2763 + $0x2c] sm:$0xf]
        %v2776 = vld [vmem:[%s2763 + $0x30] sm:$0xf]
        %v2777 = vld [vmem:[%s2763 + $0x34] sm:$0xf]
        %v2778 = vld [vmem:[%s2763 + $0x38] sm:$0xf]
        %v2779 = vld [vmem:[%s2763 + $0x3c] sm:$0xf]
        %v2796 = vunpack.c.l.b16 %v2764
        %v2797 = vunpack.c.l.b16 %v2765
        %v2798 = vunpack.c.l.b16 %v2766
        %v2799 = vunpack.c.l.b16 %v2767
        %v2800 = vunpack.c.l.b16 %v2768
        %v2801 = vunpack.c.l.b16 %v2769
        %v2802 = vunpack.c.l.b16 %v2770
        %v2803 = vunpack.c.l.b16 %v2771
        %v2804 = vunpack.c.l.b16 %v2772
        %v2805 = vunpack.c.l.b16 %v2773
        %v2806 = vunpack.c.l.b16 %v2774
        %v2807 = vunpack.c.l.b16 %v2775
        %v2808 = vunpack.c.l.b16 %v2776
        %v2809 = vunpack.c.l.b16 %v2777
        %v2810 = vunpack.c.l.b16 %v2778
        %v2811 = vunpack.c.l.b16 %v2779
        %v2812 = vpack.c.b16 %v2797, %v2796
        %v2813 = vpack.c.b16 %v2799, %v2798
        %v2814 = vpack.c.b16 %v2801, %v2800
        %v2815 = vpack.c.b16 %v2803, %v2802
        %v2816 = vpack.c.b16 %v2805, %v2804
        %v2817 = vpack.c.b16 %v2807, %v2806
        %v2818 = vpack.c.b16 %v2809, %v2808
        %v2819 = vpack.c.b16 %v2811, %v2810
        %2828 = vmatprep.subr.bf16.mxu0 0
        %2829 = vmatpush1.bf16.msra.mxu0 %v2819
        %2830 = vmatprep.subr.bf16.mxu0 0
        %2831 = vmatpush1.bf16.msra.mxu0 %v2818
        %2832 = vmatprep.subr.bf16.mxu0 0
        %2833 = vmatpush1.bf16.msra.mxu0 %v2817
        %2834 = vmatprep.subr.bf16.mxu0 0
        %2835 = vmatpush1.bf16.msra.mxu0 %v2816
        %2836 = vmatprep.subr.bf16.mxu0 0
        %2837 = vmatpush1.bf16.msra.mxu0 %v2815
        %2838 = vmatprep.subr.bf16.mxu0 0
        %2839 = vmatpush1.bf16.msra.mxu0 %v2814
        %2840 = vmatprep.subr.bf16.mxu0 0
        %2841 = vmatpush1.bf16.msra.mxu0 %v2813
        %2842 = vmatprep.subr.bf16.mxu0 0
        %2843 = vmatpush1.bf16.msra.mxu0 %v2812
        %2844 = vmatprep.subr.bf16.mxu0 0
        %2845 = vmatpush2.bf16.msra.mxu0 0
        %2846 = vmatprep.subr.bf16.mxu0 0
        %2847 = vmatpush2.bf16.msra.mxu0 0
        %2848 = vmatprep.subr.bf16.mxu0 0
        %2849 = vmatpush2.bf16.msra.mxu0 0
        %2850 = vmatprep.subr.bf16.mxu0 0
        %2851 = vmatpush2.bf16.msra.mxu0 0
        %2852 = vmatprep.subr.bf16.mxu0 0
        %2853 = vmatpush2.bf16.msra.mxu0 0
        %2854 = vmatprep.subr.bf16.mxu0 0
        %2855 = vmatpush2.bf16.msra.mxu0 0
        %2856 = vmatprep.subr.bf16.mxu0 0
        %2857 = vmatpush2.bf16.msra.mxu0 0
        %2858 = vmatprep.subr.bf16.mxu0 0
        %2859 = vmatpush2.bf16.msra.mxu0 0
        %2860 = vmatprep.mubr.bf16.mxu0 0
        %2861 = vmatmul.mubr.bf16.gmra.mxu0 %v2759
        %v2862 = vpop.f32.mrf.mxu0
        %v2863 = vadd.f32 0.0, %v2862
        %v2864 = vpop.f32.mrf.mxu0
        %v2865 = vpop.f32.mrf.mxu0
        %v2866 = vadd.f32 0.0, %v2865
        %v2867 = vpop.f32.mrf.mxu0
        %2868 = vmatprep.mubr.bf16.mxu0 0
        %2869 = vmatmul.mubr.bf16.gmra.mxu0 %v2760
        %v2870 = vpop.f32.mrf.mxu0
        %v2871 = vadd.f32 0.0, %v2870
        %v2872 = vpop.f32.mrf.mxu0
        %v2873 = vpop.f32.mrf.mxu0
        %v2874 = vadd.f32 0.0, %v2873
        %v2875 = vpop.f32.mrf.mxu0
        %2876 = vmatprep.mubr.bf16.mxu0 0
        %2877 = vmatmul.mubr.bf16.gmra.mxu0 %v2761
        %v2878 = vpop.f32.mrf.mxu0
        %v2879 = vadd.f32 0.0, %v2878
        %v2880 = vpop.f32.mrf.mxu0
        %v2881 = vpop.f32.mrf.mxu0
        %v2882 = vadd.f32 0.0, %v2881
        %v2883 = vpop.f32.mrf.mxu0
        %2884 = vmatprep.mubr.bf16.mxu0 0
        %2885 = vmatmul.mubr.bf16.gmra.mxu0 %v2762
        %v2886 = vpop.f32.mrf.mxu0
        %v2887 = vadd.f32 0.0, %v2886
        %v2888 = vpop.f32.mrf.mxu0
        %v2889 = vpop.f32.mrf.mxu0
        %v2890 = vadd.f32 0.0, %v2889
        %v2891 = vpop.f32.mrf.mxu0
        %2892 = vdwg.mxu0
        %v2893 = vadd.f32 %v2743, %v2863
        %v2894 = vadd.f32 %v2744, %v2866
        %v2895 = vadd.f32 %v2745, %v2871
        %v2896 = vadd.f32 %v2746, %v2874
        %v2897 = vadd.f32 %v2747, %v2879
        %v2898 = vadd.f32 %v2748, %v2882
        %v2899 = vadd.f32 %v2749, %v2887
        %v2900 = vadd.f32 %v2750, %v2890
        %v2901 = vld [vmem:[#allocation2 + $0xa] sm:$0xff]
        %v2902 = vld [vmem:[#allocation2 + $0x12] sm:$0xff]
        %v2903 = vld [vmem:[#allocation2 + $0x1a] sm:$0xff]
        %v2904 = vld [vmem:[#allocation2 + $0x22] sm:$0xff]
        %v2905 = vld [vmem:[#allocation2 + $0x2a] sm:$0xff]
        %v2906 = vld [vmem:[#allocation2 + $0x32] sm:$0xff]
        %v2907 = vld [vmem:[#allocation2 + $0x3a] sm:$0xff]
        %v2908 = vld [vmem:[#allocation2 + $0x42] sm:$0x1f]
        %v2909 = vpack.c.bf16 %v2902, %v2901
        %v2910 = vpack.c.bf16 %v2904, %v2903
        %v2911 = vpack.c.bf16 %v2906, %v2905
        %v2912 = vpack.c.bf16 %v2908, %v2907
        %s2913 = scalar_lea.vmem [#allocation8], 256
        %v2914 = vld [vmem:[%s2913] sm:$0xf]
        %v2915 = vld [vmem:[%s2913 + $0x4] sm:$0xf]
        %v2916 = vld [vmem:[%s2913 + $0x8] sm:$0xf]
        %v2917 = vld [vmem:[%s2913 + $0xc] sm:$0xf]
        %v2918 = vld [vmem:[%s2913 + $0x10] sm:$0xf]
        %v2919 = vld [vmem:[%s2913 + $0x14] sm:$0xf]
        %v2920 = vld [vmem:[%s2913 + $0x18] sm:$0xf]
        %v2921 = vld [vmem:[%s2913 + $0x1c] sm:$0xf]
        %v2922 = vld [vmem:[%s2913 + $0x20] sm:$0xf]
        %v2923 = vld [vmem:[%s2913 + $0x24] sm:$0xf]
        %v2924 = vld [vmem:[%s2913 + $0x28] sm:$0xf]
        %v2925 = vld [vmem:[%s2913 + $0x2c] sm:$0xf]
        %v2926 = vld [vmem:[%s2913 + $0x30] sm:$0xf]
        %v2927 = vld [vmem:[%s2913 + $0x34] sm:$0xf]
        %v2928 = vld [vmem:[%s2913 + $0x38] sm:$0xf]
        %v2929 = vld [vmem:[%s2913 + $0x3c] sm:$0xf]
        %v2946 = vunpack.c.l.b16 %v2914
        %v2947 = vunpack.c.l.b16 %v2915
        %v2948 = vunpack.c.l.b16 %v2916
        %v2949 = vunpack.c.l.b16 %v2917
        %v2950 = vunpack.c.l.b16 %v2918
        %v2951 = vunpack.c.l.b16 %v2919
        %v2952 = vunpack.c.l.b16 %v2920
        %v2953 = vunpack.c.l.b16 %v2921
        %v2954 = vunpack.c.l.b16 %v2922
        %v2955 = vunpack.c.l.b16 %v2923
        %v2956 = vunpack.c.l.b16 %v2924
        %v2957 = vunpack.c.l.b16 %v2925
        %v2958 = vunpack.c.l.b16 %v2926
        %v2959 = vunpack.c.l.b16 %v2927
        %v2960 = vunpack.c.l.b16 %v2928
        %v2961 = vunpack.c.l.b16 %v2929
        %v2962 = vpack.c.b16 %v2947, %v2946
        %v2963 = vpack.c.b16 %v2949, %v2948
        %v2964 = vpack.c.b16 %v2951, %v2950
        %v2965 = vpack.c.b16 %v2953, %v2952
        %v2966 = vpack.c.b16 %v2955, %v2954
        %v2967 = vpack.c.b16 %v2957, %v2956
        %v2968 = vpack.c.b16 %v2959, %v2958
        %v2969 = vpack.c.b16 %v2961, %v2960
        %2978 = vmatprep.subr.bf16.mxu0 0
        %2979 = vmatpush1.bf16.msra.mxu0 %v2969
        %2980 = vmatprep.subr.bf16.mxu0 0
        %2981 = vmatpush1.bf16.msra.mxu0 %v2968
        %2982 = vmatprep.subr.bf16.mxu0 0
        %2983 = vmatpush1.bf16.msra.mxu0 %v2967
        %2984 = vmatprep.subr.bf16.mxu0 0
        %2985 = vmatpush1.bf16.msra.mxu0 %v2966
        %2986 = vmatprep.subr.bf16.mxu0 0
        %2987 = vmatpush1.bf16.msra.mxu0 %v2965
        %2988 = vmatprep.subr.bf16.mxu0 0
        %2989 = vmatpush1.bf16.msra.mxu0 %v2964
        %2990 = vmatprep.subr.bf16.mxu0 0
        %2991 = vmatpush1.bf16.msra.mxu0 %v2963
        %2992 = vmatprep.subr.bf16.mxu0 0
        %2993 = vmatpush1.bf16.msra.mxu0 %v2962
        %2994 = vmatprep.subr.bf16.mxu0 0
        %2995 = vmatpush2.bf16.msra.mxu0 0
        %2996 = vmatprep.subr.bf16.mxu0 0
        %2997 = vmatpush2.bf16.msra.mxu0 0
        %2998 = vmatprep.subr.bf16.mxu0 0
        %2999 = vmatpush2.bf16.msra.mxu0 0
        %3000 = vmatprep.subr.bf16.mxu0 0
        %3001 = vmatpush2.bf16.msra.mxu0 0
        %3002 = vmatprep.subr.bf16.mxu0 0
        %3003 = vmatpush2.bf16.msra.mxu0 0
        %3004 = vmatprep.subr.bf16.mxu0 0
        %3005 = vmatpush2.bf16.msra.mxu0 0
        %3006 = vmatprep.subr.bf16.mxu0 0
        %3007 = vmatpush2.bf16.msra.mxu0 0
        %3008 = vmatprep.subr.bf16.mxu0 0
        %3009 = vmatpush2.bf16.msra.mxu0 0
        %3010 = vmatprep.mubr.bf16.mxu0 0
        %3011 = vmatmul.mubr.bf16.gmra.mxu0 %v2909
        %v3012 = vpop.f32.mrf.mxu0
        %v3013 = vadd.f32 0.0, %v3012
        %v3014 = vpop.f32.mrf.mxu0
        %v3015 = vpop.f32.mrf.mxu0
        %v3016 = vadd.f32 0.0, %v3015
        %v3017 = vpop.f32.mrf.mxu0
        %3018 = vmatprep.mubr.bf16.mxu0 0
        %3019 = vmatmul.mubr.bf16.gmra.mxu0 %v2910
        %v3020 = vpop.f32.mrf.mxu0
        %v3021 = vadd.f32 0.0, %v3020
        %v3022 = vpop.f32.mrf.mxu0
        %v3023 = vpop.f32.mrf.mxu0
        %v3024 = vadd.f32 0.0, %v3023
        %v3025 = vpop.f32.mrf.mxu0
        %3026 = vmatprep.mubr.bf16.mxu0 0
        %3027 = vmatmul.mubr.bf16.gmra.mxu0 %v2911
        %v3028 = vpop.f32.mrf.mxu0
        %v3029 = vadd.f32 0.0, %v3028
        %v3030 = vpop.f32.mrf.mxu0
        %v3031 = vpop.f32.mrf.mxu0
        %v3032 = vadd.f32 0.0, %v3031
        %v3033 = vpop.f32.mrf.mxu0
        %3034 = vmatprep.mubr.bf16.mxu0 0
        %3035 = vmatmul.mubr.bf16.gmra.mxu0 %v2912
        %v3036 = vpop.f32.mrf.mxu0
        %v3037 = vadd.f32 0.0, %v3036
        %v3038 = vpop.f32.mrf.mxu0
        %v3039 = vpop.f32.mrf.mxu0
        %v3040 = vadd.f32 0.0, %v3039
        %v3041 = vpop.f32.mrf.mxu0
        %3042 = vdwg.mxu0
        %v3043 = vadd.f32 %v2893, %v3013
        %v3044 = vadd.f32 %v2894, %v3016
        %v3045 = vadd.f32 %v2895, %v3021
        %v3046 = vadd.f32 %v2896, %v3024
        %v3047 = vadd.f32 %v2897, %v3029
        %v3048 = vadd.f32 %v2898, %v3032
        %v3049 = vadd.f32 %v2899, %v3037
        %v3050 = vadd.f32 %v2900, %v3040
        %v3051 = vld [vmem:[#allocation2 + $0xb] sm:$0xff]
        %v3052 = vld [vmem:[#allocation2 + $0x13] sm:$0xff]
        %v3053 = vld [vmem:[#allocation2 + $0x1b] sm:$0xff]
        %v3054 = vld [vmem:[#allocation2 + $0x23] sm:$0xff]
        %v3055 = vld [vmem:[#allocation2 + $0x2b] sm:$0xff]
        %v3056 = vld [vmem:[#allocation2 + $0x33] sm:$0xff]
        %v3057 = vld [vmem:[#allocation2 + $0x3b] sm:$0xff]
        %v3058 = vld [vmem:[#allocation2 + $0x43] sm:$0x1f]
        %v3059 = vpack.c.bf16 %v3052, %v3051
        %v3060 = vpack.c.bf16 %v3054, %v3053
        %v3061 = vpack.c.bf16 %v3056, %v3055
        %v3062 = vpack.c.bf16 %v3058, %v3057
        %s3063 = scalar_lea.vmem [#allocation8], 320
        %v3064 = vld [vmem:[%s3063] sm:$0xf]
        %v3065 = vld [vmem:[%s3063 + $0x4] sm:$0xf]
        %v3066 = vld [vmem:[%s3063 + $0x8] sm:$0xf]
        %v3067 = vld [vmem:[%s3063 + $0xc] sm:$0xf]
        %v3068 = vld [vmem:[%s3063 + $0x10] sm:$0xf]
        %v3069 = vld [vmem:[%s3063 + $0x14] sm:$0xf]
        %v3070 = vld [vmem:[%s3063 + $0x18] sm:$0xf]
        %v3071 = vld [vmem:[%s3063 + $0x1c] sm:$0xf]
        %v3072 = vld [vmem:[%s3063 + $0x20] sm:$0xf]
        %v3073 = vld [vmem:[%s3063 + $0x24] sm:$0xf]
        %v3074 = vld [vmem:[%s3063 + $0x28] sm:$0xf]
        %v3075 = vld [vmem:[%s3063 + $0x2c] sm:$0xf]
        %v3076 = vld [vmem:[%s3063 + $0x30] sm:$0xf]
        %v3077 = vld [vmem:[%s3063 + $0x34] sm:$0xf]
        %v3078 = vld [vmem:[%s3063 + $0x38] sm:$0xf]
        %v3079 = vld [vmem:[%s3063 + $0x3c] sm:$0xf]
        %v3096 = vunpack.c.l.b16 %v3064
        %v3097 = vunpack.c.l.b16 %v3065
        %v3098 = vunpack.c.l.b16 %v3066
        %v3099 = vunpack.c.l.b16 %v3067
        %v3100 = vunpack.c.l.b16 %v3068
        %v3101 = vunpack.c.l.b16 %v3069
        %v3102 = vunpack.c.l.b16 %v3070
        %v3103 = vunpack.c.l.b16 %v3071
        %v3104 = vunpack.c.l.b16 %v3072
        %v3105 = vunpack.c.l.b16 %v3073
        %v3106 = vunpack.c.l.b16 %v3074
        %v3107 = vunpack.c.l.b16 %v3075
        %v3108 = vunpack.c.l.b16 %v3076
        %v3109 = vunpack.c.l.b16 %v3077
        %v3110 = vunpack.c.l.b16 %v3078
        %v3111 = vunpack.c.l.b16 %v3079
        %v3112 = vpack.c.b16 %v3097, %v3096
        %v3113 = vpack.c.b16 %v3099, %v3098
        %v3114 = vpack.c.b16 %v3101, %v3100
        %v3115 = vpack.c.b16 %v3103, %v3102
        %v3116 = vpack.c.b16 %v3105, %v3104
        %v3117 = vpack.c.b16 %v3107, %v3106
        %v3118 = vpack.c.b16 %v3109, %v3108
        %v3119 = vpack.c.b16 %v3111, %v3110
        %3128 = vmatprep.subr.bf16.mxu0 0
        %3129 = vmatpush1.bf16.msra.mxu0 %v3119
        %3130 = vmatprep.subr.bf16.mxu0 0
        %3131 = vmatpush1.bf16.msra.mxu0 %v3118
        %3132 = vmatprep.subr.bf16.mxu0 0
        %3133 = vmatpush1.bf16.msra.mxu0 %v3117
        %3134 = vmatprep.subr.bf16.mxu0 0
        %3135 = vmatpush1.bf16.msra.mxu0 %v3116
        %3136 = vmatprep.subr.bf16.mxu0 0
        %3137 = vmatpush1.bf16.msra.mxu0 %v3115
        %3138 = vmatprep.subr.bf16.mxu0 0
        %3139 = vmatpush1.bf16.msra.mxu0 %v3114
        %3140 = vmatprep.subr.bf16.mxu0 0
        %3141 = vmatpush1.bf16.msra.mxu0 %v3113
        %3142 = vmatprep.subr.bf16.mxu0 0
        %3143 = vmatpush1.bf16.msra.mxu0 %v3112
        %3144 = vmatprep.subr.bf16.mxu0 0
        %3145 = vmatpush2.bf16.msra.mxu0 0
        %3146 = vmatprep.subr.bf16.mxu0 0
        %3147 = vmatpush2.bf16.msra.mxu0 0
        %3148 = vmatprep.subr.bf16.mxu0 0
        %3149 = vmatpush2.bf16.msra.mxu0 0
        %3150 = vmatprep.subr.bf16.mxu0 0
        %3151 = vmatpush2.bf16.msra.mxu0 0
        %3152 = vmatprep.subr.bf16.mxu0 0
        %3153 = vmatpush2.bf16.msra.mxu0 0
        %3154 = vmatprep.subr.bf16.mxu0 0
        %3155 = vmatpush2.bf16.msra.mxu0 0
        %3156 = vmatprep.subr.bf16.mxu0 0
        %3157 = vmatpush2.bf16.msra.mxu0 0
        %3158 = vmatprep.subr.bf16.mxu0 0
        %3159 = vmatpush2.bf16.msra.mxu0 0
        %3160 = vmatprep.mubr.bf16.mxu0 0
        %3161 = vmatmul.mubr.bf16.gmra.mxu0 %v3059
        %v3162 = vpop.f32.mrf.mxu0
        %v3163 = vadd.f32 0.0, %v3162
        %v3164 = vpop.f32.mrf.mxu0
        %v3165 = vpop.f32.mrf.mxu0
        %v3166 = vadd.f32 0.0, %v3165
        %v3167 = vpop.f32.mrf.mxu0
        %3168 = vmatprep.mubr.bf16.mxu0 0
        %3169 = vmatmul.mubr.bf16.gmra.mxu0 %v3060
        %v3170 = vpop.f32.mrf.mxu0
        %v3171 = vadd.f32 0.0, %v3170
        %v3172 = vpop.f32.mrf.mxu0
        %v3173 = vpop.f32.mrf.mxu0
        %v3174 = vadd.f32 0.0, %v3173
        %v3175 = vpop.f32.mrf.mxu0
        %3176 = vmatprep.mubr.bf16.mxu0 0
        %3177 = vmatmul.mubr.bf16.gmra.mxu0 %v3061
        %v3178 = vpop.f32.mrf.mxu0
        %v3179 = vadd.f32 0.0, %v3178
        %v3180 = vpop.f32.mrf.mxu0
        %v3181 = vpop.f32.mrf.mxu0
        %v3182 = vadd.f32 0.0, %v3181
        %v3183 = vpop.f32.mrf.mxu0
        %3184 = vmatprep.mubr.bf16.mxu0 0
        %3185 = vmatmul.mubr.bf16.gmra.mxu0 %v3062
        %v3186 = vpop.f32.mrf.mxu0
        %v3187 = vadd.f32 0.0, %v3186
        %v3188 = vpop.f32.mrf.mxu0
        %v3189 = vpop.f32.mrf.mxu0
        %v3190 = vadd.f32 0.0, %v3189
        %v3191 = vpop.f32.mrf.mxu0
        %3192 = vdwg.mxu0
        %v3193 = vadd.f32 %v3043, %v3163
        %v3194 = vadd.f32 %v3044, %v3166
        %v3195 = vadd.f32 %v3045, %v3171
        %v3196 = vadd.f32 %v3046, %v3174
        %v3197 = vadd.f32 %v3047, %v3179
        %v3198 = vadd.f32 %v3048, %v3182
        %v3199 = vadd.f32 %v3049, %v3187
        %v3200 = vadd.f32 %v3050, %v3190
        %v3201 = vld [vmem:[#allocation2 + $0x12] sm:$0xff]
        %v3202 = vld [vmem:[#allocation2 + $0x1a] sm:$0xff]
        %v3203 = vld [vmem:[#allocation2 + $0x22] sm:$0xff]
        %v3204 = vld [vmem:[#allocation2 + $0x2a] sm:$0xff]
        %v3205 = vld [vmem:[#allocation2 + $0x32] sm:$0xff]
        %v3206 = vld [vmem:[#allocation2 + $0x3a] sm:$0xff]
        %v3207 = vld [vmem:[#allocation2 + $0x42] sm:$0xff]
        %v3208 = vld [vmem:[#allocation2 + $0x4a] sm:$0x1f]
        %v3209 = vpack.c.bf16 %v3202, %v3201
        %v3210 = vpack.c.bf16 %v3204, %v3203
        %v3211 = vpack.c.bf16 %v3206, %v3205
        %v3212 = vpack.c.bf16 %v3208, %v3207
        %s3213 = scalar_lea.vmem [#allocation8], 384
        %v3214 = vld [vmem:[%s3213] sm:$0xf]
        %v3215 = vld [vmem:[%s3213 + $0x4] sm:$0xf]
        %v3216 = vld [vmem:[%s3213 + $0x8] sm:$0xf]
        %v3217 = vld [vmem:[%s3213 + $0xc] sm:$0xf]
        %v3218 = vld [vmem:[%s3213 + $0x10] sm:$0xf]
        %v3219 = vld [vmem:[%s3213 + $0x14] sm:$0xf]
        %v3220 = vld [vmem:[%s3213 + $0x18] sm:$0xf]
        %v3221 = vld [vmem:[%s3213 + $0x1c] sm:$0xf]
        %v3222 = vld [vmem:[%s3213 + $0x20] sm:$0xf]
        %v3223 = vld [vmem:[%s3213 + $0x24] sm:$0xf]
        %v3224 = vld [vmem:[%s3213 + $0x28] sm:$0xf]
        %v3225 = vld [vmem:[%s3213 + $0x2c] sm:$0xf]
        %v3226 = vld [vmem:[%s3213 + $0x30] sm:$0xf]
        %v3227 = vld [vmem:[%s3213 + $0x34] sm:$0xf]
        %v3228 = vld [vmem:[%s3213 + $0x38] sm:$0xf]
        %v3229 = vld [vmem:[%s3213 + $0x3c] sm:$0xf]
        %v3246 = vunpack.c.l.b16 %v3214
        %v3247 = vunpack.c.l.b16 %v3215
        %v3248 = vunpack.c.l.b16 %v3216
        %v3249 = vunpack.c.l.b16 %v3217
        %v3250 = vunpack.c.l.b16 %v3218
        %v3251 = vunpack.c.l.b16 %v3219
        %v3252 = vunpack.c.l.b16 %v3220
        %v3253 = vunpack.c.l.b16 %v3221
        %v3254 = vunpack.c.l.b16 %v3222
        %v3255 = vunpack.c.l.b16 %v3223
        %v3256 = vunpack.c.l.b16 %v3224
        %v3257 = vunpack.c.l.b16 %v3225
        %v3258 = vunpack.c.l.b16 %v3226
        %v3259 = vunpack.c.l.b16 %v3227
        %v3260 = vunpack.c.l.b16 %v3228
        %v3261 = vunpack.c.l.b16 %v3229
        %v3262 = vpack.c.b16 %v3247, %v3246
        %v3263 = vpack.c.b16 %v3249, %v3248
        %v3264 = vpack.c.b16 %v3251, %v3250
        %v3265 = vpack.c.b16 %v3253, %v3252
        %v3266 = vpack.c.b16 %v3255, %v3254
        %v3267 = vpack.c.b16 %v3257, %v3256
        %v3268 = vpack.c.b16 %v3259, %v3258
        %v3269 = vpack.c.b16 %v3261, %v3260
        %3278 = vmatprep.subr.bf16.mxu0 0
        %3279 = vmatpush1.bf16.msra.mxu0 %v3269
        %3280 = vmatprep.subr.bf16.mxu0 0
        %3281 = vmatpush1.bf16.msra.mxu0 %v3268
        %3282 = vmatprep.subr.bf16.mxu0 0
        %3283 = vmatpush1.bf16.msra.mxu0 %v3267
        %3284 = vmatprep.subr.bf16.mxu0 0
        %3285 = vmatpush1.bf16.msra.mxu0 %v3266
        %3286 = vmatprep.subr.bf16.mxu0 0
        %3287 = vmatpush1.bf16.msra.mxu0 %v3265
        %3288 = vmatprep.subr.bf16.mxu0 0
        %3289 = vmatpush1.bf16.msra.mxu0 %v3264
        %3290 = vmatprep.subr.bf16.mxu0 0
        %3291 = vmatpush1.bf16.msra.mxu0 %v3263
        %3292 = vmatprep.subr.bf16.mxu0 0
        %3293 = vmatpush1.bf16.msra.mxu0 %v3262
        %3294 = vmatprep.subr.bf16.mxu0 0
        %3295 = vmatpush2.bf16.msra.mxu0 0
        %3296 = vmatprep.subr.bf16.mxu0 0
        %3297 = vmatpush2.bf16.msra.mxu0 0
        %3298 = vmatprep.subr.bf16.mxu0 0
        %3299 = vmatpush2.bf16.msra.mxu0 0
        %3300 = vmatprep.subr.bf16.mxu0 0
        %3301 = vmatpush2.bf16.msra.mxu0 0
        %3302 = vmatprep.subr.bf16.mxu0 0
        %3303 = vmatpush2.bf16.msra.mxu0 0
        %3304 = vmatprep.subr.bf16.mxu0 0
        %3305 = vmatpush2.bf16.msra.mxu0 0
        %3306 = vmatprep.subr.bf16.mxu0 0
        %3307 = vmatpush2.bf16.msra.mxu0 0
        %3308 = vmatprep.subr.bf16.mxu0 0
        %3309 = vmatpush2.bf16.msra.mxu0 0
        %3310 = vmatprep.mubr.bf16.mxu0 0
        %3311 = vmatmul.mubr.bf16.gmra.mxu0 %v3209
        %v3312 = vpop.f32.mrf.mxu0
        %v3313 = vadd.f32 0.0, %v3312
        %v3314 = vpop.f32.mrf.mxu0
        %v3315 = vpop.f32.mrf.mxu0
        %v3316 = vadd.f32 0.0, %v3315
        %v3317 = vpop.f32.mrf.mxu0
        %3318 = vmatprep.mubr.bf16.mxu0 0
        %3319 = vmatmul.mubr.bf16.gmra.mxu0 %v3210
        %v3320 = vpop.f32.mrf.mxu0
        %v3321 = vadd.f32 0.0, %v3320
        %v3322 = vpop.f32.mrf.mxu0
        %v3323 = vpop.f32.mrf.mxu0
        %v3324 = vadd.f32 0.0, %v3323
        %v3325 = vpop.f32.mrf.mxu0
        %3326 = vmatprep.mubr.bf16.mxu0 0
        %3327 = vmatmul.mubr.bf16.gmra.mxu0 %v3211
        %v3328 = vpop.f32.mrf.mxu0
        %v3329 = vadd.f32 0.0, %v3328
        %v3330 = vpop.f32.mrf.mxu0
        %v3331 = vpop.f32.mrf.mxu0
        %v3332 = vadd.f32 0.0, %v3331
        %v3333 = vpop.f32.mrf.mxu0
        %3334 = vmatprep.mubr.bf16.mxu0 0
        %3335 = vmatmul.mubr.bf16.gmra.mxu0 %v3212
        %v3336 = vpop.f32.mrf.mxu0
        %v3337 = vadd.f32 0.0, %v3336
        %v3338 = vpop.f32.mrf.mxu0
        %v3339 = vpop.f32.mrf.mxu0
        %v3340 = vadd.f32 0.0, %v3339
        %v3341 = vpop.f32.mrf.mxu0
        %3342 = vdwg.mxu0
        %v3343 = vadd.f32 %v3193, %v3313
        %v3344 = vadd.f32 %v3194, %v3316
        %v3345 = vadd.f32 %v3195, %v3321
        %v3346 = vadd.f32 %v3196, %v3324
        %v3347 = vadd.f32 %v3197, %v3329
        %v3348 = vadd.f32 %v3198, %v3332
        %v3349 = vadd.f32 %v3199, %v3337
        %v3350 = vadd.f32 %v3200, %v3340
        %v3351 = vld [vmem:[#allocation2 + $0x13] sm:$0xff]
        %v3352 = vld [vmem:[#allocation2 + $0x1b] sm:$0xff]
        %v3353 = vld [vmem:[#allocation2 + $0x23] sm:$0xff]
        %v3354 = vld [vmem:[#allocation2 + $0x2b] sm:$0xff]
        %v3355 = vld [vmem:[#allocation2 + $0x33] sm:$0xff]
        %v3356 = vld [vmem:[#allocation2 + $0x3b] sm:$0xff]
        %v3357 = vld [vmem:[#allocation2 + $0x43] sm:$0xff]
        %v3358 = vld [vmem:[#allocation2 + $0x4b] sm:$0x1f]
        %v3359 = vpack.c.bf16 %v3352, %v3351
        %v3360 = vpack.c.bf16 %v3354, %v3353
        %v3361 = vpack.c.bf16 %v3356, %v3355
        %v3362 = vpack.c.bf16 %v3358, %v3357
        %s3363 = scalar_lea.vmem [#allocation8], 448
        %v3364 = vld [vmem:[%s3363] sm:$0xf]
        %v3365 = vld [vmem:[%s3363 + $0x4] sm:$0xf]
        %v3366 = vld [vmem:[%s3363 + $0x8] sm:$0xf]
        %v3367 = vld [vmem:[%s3363 + $0xc] sm:$0xf]
        %v3368 = vld [vmem:[%s3363 + $0x10] sm:$0xf]
        %v3369 = vld [vmem:[%s3363 + $0x14] sm:$0xf]
        %v3370 = vld [vmem:[%s3363 + $0x18] sm:$0xf]
        %v3371 = vld [vmem:[%s3363 + $0x1c] sm:$0xf]
        %v3372 = vld [vmem:[%s3363 + $0x20] sm:$0xf]
        %v3373 = vld [vmem:[%s3363 + $0x24] sm:$0xf]
        %v3374 = vld [vmem:[%s3363 + $0x28] sm:$0xf]
        %v3375 = vld [vmem:[%s3363 + $0x2c] sm:$0xf]
        %v3376 = vld [vmem:[%s3363 + $0x30] sm:$0xf]
        %v3377 = vld [vmem:[%s3363 + $0x34] sm:$0xf]
        %v3378 = vld [vmem:[%s3363 + $0x38] sm:$0xf]
        %v3379 = vld [vmem:[%s3363 + $0x3c] sm:$0xf]
        %v3396 = vunpack.c.l.b16 %v3364
        %v3397 = vunpack.c.l.b16 %v3365
        %v3398 = vunpack.c.l.b16 %v3366
        %v3399 = vunpack.c.l.b16 %v3367
        %v3400 = vunpack.c.l.b16 %v3368
        %v3401 = vunpack.c.l.b16 %v3369
        %v3402 = vunpack.c.l.b16 %v3370
        %v3403 = vunpack.c.l.b16 %v3371
        %v3404 = vunpack.c.l.b16 %v3372
        %v3405 = vunpack.c.l.b16 %v3373
        %v3406 = vunpack.c.l.b16 %v3374
        %v3407 = vunpack.c.l.b16 %v3375
        %v3408 = vunpack.c.l.b16 %v3376
        %v3409 = vunpack.c.l.b16 %v3377
        %v3410 = vunpack.c.l.b16 %v3378
        %v3411 = vunpack.c.l.b16 %v3379
        %v3412 = vpack.c.b16 %v3397, %v3396
        %v3413 = vpack.c.b16 %v3399, %v3398
        %v3414 = vpack.c.b16 %v3401, %v3400
        %v3415 = vpack.c.b16 %v3403, %v3402
        %v3416 = vpack.c.b16 %v3405, %v3404
        %v3417 = vpack.c.b16 %v3407, %v3406
        %v3418 = vpack.c.b16 %v3409, %v3408
        %v3419 = vpack.c.b16 %v3411, %v3410
        %3428 = vmatprep.subr.bf16.mxu0 0
        %3429 = vmatpush1.bf16.msra.mxu0 %v3419
        %3430 = vmatprep.subr.bf16.mxu0 0
        %3431 = vmatpush1.bf16.msra.mxu0 %v3418
        %3432 = vmatprep.subr.bf16.mxu0 0
        %3433 = vmatpush1.bf16.msra.mxu0 %v3417
        %3434 = vmatprep.subr.bf16.mxu0 0
        %3435 = vmatpush1.bf16.msra.mxu0 %v3416
        %3436 = vmatprep.subr.bf16.mxu0 0
        %3437 = vmatpush1.bf16.msra.mxu0 %v3415
        %3438 = vmatprep.subr.bf16.mxu0 0
        %3439 = vmatpush1.bf16.msra.mxu0 %v3414
        %3440 = vmatprep.subr.bf16.mxu0 0
        %3441 = vmatpush1.bf16.msra.mxu0 %v3413
        %3442 = vmatprep.subr.bf16.mxu0 0
        %3443 = vmatpush1.bf16.msra.mxu0 %v3412
        %3444 = vmatprep.subr.bf16.mxu0 0
        %3445 = vmatpush2.bf16.msra.mxu0 0
        %3446 = vmatprep.subr.bf16.mxu0 0
        %3447 = vmatpush2.bf16.msra.mxu0 0
        %3448 = vmatprep.subr.bf16.mxu0 0
        %3449 = vmatpush2.bf16.msra.mxu0 0
        %3450 = vmatprep.subr.bf16.mxu0 0
        %3451 = vmatpush2.bf16.msra.mxu0 0
        %3452 = vmatprep.subr.bf16.mxu0 0
        %3453 = vmatpush2.bf16.msra.mxu0 0
        %3454 = vmatprep.subr.bf16.mxu0 0
        %3455 = vmatpush2.bf16.msra.mxu0 0
        %3456 = vmatprep.subr.bf16.mxu0 0
        %3457 = vmatpush2.bf16.msra.mxu0 0
        %3458 = vmatprep.subr.bf16.mxu0 0
        %3459 = vmatpush2.bf16.msra.mxu0 0
        %3460 = vmatprep.mubr.bf16.mxu0 0
        %3461 = vmatmul.mubr.bf16.gmra.mxu0 %v3359
        %v3462 = vpop.f32.mrf.mxu0
        %v3463 = vadd.f32 0.0, %v3462
        %v3464 = vpop.f32.mrf.mxu0
        %v3465 = vpop.f32.mrf.mxu0
        %v3466 = vadd.f32 0.0, %v3465
        %v3467 = vpop.f32.mrf.mxu0
        %3468 = vmatprep.mubr.bf16.mxu0 0
        %3469 = vmatmul.mubr.bf16.gmra.mxu0 %v3360
        %v3470 = vpop.f32.mrf.mxu0
        %v3471 = vadd.f32 0.0, %v3470
        %v3472 = vpop.f32.mrf.mxu0
        %v3473 = vpop.f32.mrf.mxu0
        %v3474 = vadd.f32 0.0, %v3473
        %v3475 = vpop.f32.mrf.mxu0
        %3476 = vmatprep.mubr.bf16.mxu0 0
        %3477 = vmatmul.mubr.bf16.gmra.mxu0 %v3361
        %v3478 = vpop.f32.mrf.mxu0
        %v3479 = vadd.f32 0.0, %v3478
        %v3480 = vpop.f32.mrf.mxu0
        %v3481 = vpop.f32.mrf.mxu0
        %v3482 = vadd.f32 0.0, %v3481
        %v3483 = vpop.f32.mrf.mxu0
        %3484 = vmatprep.mubr.bf16.mxu0 0
        %3485 = vmatmul.mubr.bf16.gmra.mxu0 %v3362
        %v3486 = vpop.f32.mrf.mxu0
        %v3487 = vadd.f32 0.0, %v3486
        %v3488 = vpop.f32.mrf.mxu0
        %v3489 = vpop.f32.mrf.mxu0
        %v3490 = vadd.f32 0.0, %v3489
        %v3491 = vpop.f32.mrf.mxu0
        %3492 = vdwg.mxu0
        %v3493 = vadd.f32 %v3343, %v3463
        %v3494 = vadd.f32 %v3344, %v3466
        %v3495 = vadd.f32 %v3345, %v3471
        %v3496 = vadd.f32 %v3346, %v3474
        %v3497 = vadd.f32 %v3347, %v3479
        %v3498 = vadd.f32 %v3348, %v3482
        %v3499 = vadd.f32 %v3349, %v3487
        %v3500 = vadd.f32 %v3350, %v3490
        %v3501 = vld [vmem:[#allocation2 + $0x14] sm:$0xff]
        %v3502 = vld [vmem:[#allocation2 + $0x1c] sm:$0xff]
        %v3503 = vld [vmem:[#allocation2 + $0x24] sm:$0xff]
        %v3504 = vld [vmem:[#allocation2 + $0x2c] sm:$0xff]
        %v3505 = vld [vmem:[#allocation2 + $0x34] sm:$0xff]
        %v3506 = vld [vmem:[#allocation2 + $0x3c] sm:$0xff]
        %v3507 = vld [vmem:[#allocation2 + $0x44] sm:$0xff]
        %v3508 = vld [vmem:[#allocation2 + $0x4c] sm:$0x1f]
        %v3509 = vpack.c.bf16 %v3502, %v3501
        %v3510 = vpack.c.bf16 %v3504, %v3503
        %v3511 = vpack.c.bf16 %v3506, %v3505
        %v3512 = vpack.c.bf16 %v3508, %v3507
        %s3513 = scalar_lea.vmem [#allocation8], 512
        %v3514 = vld [vmem:[%s3513] sm:$0xf]
        %v3515 = vld [vmem:[%s3513 + $0x4] sm:$0xf]
        %v3516 = vld [vmem:[%s3513 + $0x8] sm:$0xf]
        %v3517 = vld [vmem:[%s3513 + $0xc] sm:$0xf]
        %v3518 = vld [vmem:[%s3513 + $0x10] sm:$0xf]
        %v3519 = vld [vmem:[%s3513 + $0x14] sm:$0xf]
        %v3520 = vld [vmem:[%s3513 + $0x18] sm:$0xf]
        %v3521 = vld [vmem:[%s3513 + $0x1c] sm:$0xf]
        %v3522 = vld [vmem:[%s3513 + $0x20] sm:$0xf]
        %v3523 = vld [vmem:[%s3513 + $0x24] sm:$0xf]
        %v3524 = vld [vmem:[%s3513 + $0x28] sm:$0xf]
        %v3525 = vld [vmem:[%s3513 + $0x2c] sm:$0xf]
        %v3526 = vld [vmem:[%s3513 + $0x30] sm:$0xf]
        %v3527 = vld [vmem:[%s3513 + $0x34] sm:$0xf]
        %v3528 = vld [vmem:[%s3513 + $0x38] sm:$0xf]
        %v3529 = vld [vmem:[%s3513 + $0x3c] sm:$0xf]
        %v3546 = vunpack.c.l.b16 %v3514
        %v3547 = vunpack.c.l.b16 %v3515
        %v3548 = vunpack.c.l.b16 %v3516
        %v3549 = vunpack.c.l.b16 %v3517
        %v3550 = vunpack.c.l.b16 %v3518
        %v3551 = vunpack.c.l.b16 %v3519
        %v3552 = vunpack.c.l.b16 %v3520
        %v3553 = vunpack.c.l.b16 %v3521
        %v3554 = vunpack.c.l.b16 %v3522
        %v3555 = vunpack.c.l.b16 %v3523
        %v3556 = vunpack.c.l.b16 %v3524
        %v3557 = vunpack.c.l.b16 %v3525
        %v3558 = vunpack.c.l.b16 %v3526
        %v3559 = vunpack.c.l.b16 %v3527
        %v3560 = vunpack.c.l.b16 %v3528
        %v3561 = vunpack.c.l.b16 %v3529
        %v3562 = vpack.c.b16 %v3547, %v3546
        %v3563 = vpack.c.b16 %v3549, %v3548
        %v3564 = vpack.c.b16 %v3551, %v3550
        %v3565 = vpack.c.b16 %v3553, %v3552
        %v3566 = vpack.c.b16 %v3555, %v3554
        %v3567 = vpack.c.b16 %v3557, %v3556
        %v3568 = vpack.c.b16 %v3559, %v3558
        %v3569 = vpack.c.b16 %v3561, %v3560
        %3578 = vmatprep.subr.bf16.mxu0 0
        %3579 = vmatpush1.bf16.msra.mxu0 %v3569
        %3580 = vmatprep.subr.bf16.mxu0 0
        %3581 = vmatpush1.bf16.msra.mxu0 %v3568
        %3582 = vmatprep.subr.bf16.mxu0 0
        %3583 = vmatpush1.bf16.msra.mxu0 %v3567
        %3584 = vmatprep.subr.bf16.mxu0 0
        %3585 = vmatpush1.bf16.msra.mxu0 %v3566
        %3586 = vmatprep.subr.bf16.mxu0 0
        %3587 = vmatpush1.bf16.msra.mxu0 %v3565
        %3588 = vmatprep.subr.bf16.mxu0 0
        %3589 = vmatpush1.bf16.msra.mxu0 %v3564
        %3590 = vmatprep.subr.bf16.mxu0 0
        %3591 = vmatpush1.bf16.msra.mxu0 %v3563
        %3592 = vmatprep.subr.bf16.mxu0 0
        %3593 = vmatpush1.bf16.msra.mxu0 %v3562
        %3594 = vmatprep.subr.bf16.mxu0 0
        %3595 = vmatpush2.bf16.msra.mxu0 0
        %3596 = vmatprep.subr.bf16.mxu0 0
        %3597 = vmatpush2.bf16.msra.mxu0 0
        %3598 = vmatprep.subr.bf16.mxu0 0
        %3599 = vmatpush2.bf16.msra.mxu0 0
        %3600 = vmatprep.subr.bf16.mxu0 0
        %3601 = vmatpush2.bf16.msra.mxu0 0
        %3602 = vmatprep.subr.bf16.mxu0 0
        %3603 = vmatpush2.bf16.msra.mxu0 0
        %3604 = vmatprep.subr.bf16.mxu0 0
        %3605 = vmatpush2.bf16.msra.mxu0 0
        %3606 = vmatprep.subr.bf16.mxu0 0
        %3607 = vmatpush2.bf16.msra.mxu0 0
        %3608 = vmatprep.subr.bf16.mxu0 0
        %3609 = vmatpush2.bf16.msra.mxu0 0
        %3610 = vmatprep.mubr.bf16.mxu0 0
        %3611 = vmatmul.mubr.bf16.gmra.mxu0 %v3509
        %v3612 = vpop.f32.mrf.mxu0
        %v3613 = vadd.f32 0.0, %v3612
        %v3614 = vpop.f32.mrf.mxu0
        %v3615 = vpop.f32.mrf.mxu0
        %v3616 = vadd.f32 0.0, %v3615
        %v3617 = vpop.f32.mrf.mxu0
        %3618 = vmatprep.mubr.bf16.mxu0 0
        %3619 = vmatmul.mubr.bf16.gmra.mxu0 %v3510
        %v3620 = vpop.f32.mrf.mxu0
        %v3621 = vadd.f32 0.0, %v3620
        %v3622 = vpop.f32.mrf.mxu0
        %v3623 = vpop.f32.mrf.mxu0
        %v3624 = vadd.f32 0.0, %v3623
        %v3625 = vpop.f32.mrf.mxu0
        %3626 = vmatprep.mubr.bf16.mxu0 0
        %3627 = vmatmul.mubr.bf16.gmra.mxu0 %v3511
        %v3628 = vpop.f32.mrf.mxu0
        %v3629 = vadd.f32 0.0, %v3628
        %v3630 = vpop.f32.mrf.mxu0
        %v3631 = vpop.f32.mrf.mxu0
        %v3632 = vadd.f32 0.0, %v3631
        %v3633 = vpop.f32.mrf.mxu0
        %3634 = vmatprep.mubr.bf16.mxu0 0
        %3635 = vmatmul.mubr.bf16.gmra.mxu0 %v3512
        %v3636 = vpop.f32.mrf.mxu0
        %v3637 = vadd.f32 0.0, %v3636
        %v3638 = vpop.f32.mrf.mxu0
        %v3639 = vpop.f32.mrf.mxu0
        %v3640 = vadd.f32 0.0, %v3639
        %v3641 = vpop.f32.mrf.mxu0
        %3642 = vdwg.mxu0
        %v3643 = vadd.f32 %v3493, %v3613
        %v3644 = vadd.f32 %v3494, %v3616
        %v3645 = vadd.f32 %v3495, %v3621
        %v3646 = vadd.f32 %v3496, %v3624
        %v3647 = vadd.f32 %v3497, %v3629
        %v3648 = vadd.f32 %v3498, %v3632
        %v3649 = vadd.f32 %v3499, %v3637
        %v3650 = vadd.f32 %v3500, %v3640
        %v3652 = vlaneseq
        %v3653 = vshrl.u32 %v3652, 7
        %v3654 = vsub.s32 0, %v3653
        %v3655 = vrot.slane %v2308, %v3654
        %v3657 = vmul.f32 %v3643, %v3655
        %v3658 = vmul.f32 %v3644, %v3655
        %v3659 = vmul.f32 %v3645, %v3655
        %v3660 = vmul.f32 %v3646, %v3655
        %v3661 = vmul.f32 %v3647, %v3655
        %v3662 = vmul.f32 %v3648, %v3655
        %v3663 = vmul.f32 %v3649, %v3655
        %v3664 = vmul.f32 %v3650, %v3655
        %v3666 = vlaneseq
        %v3667 = vshrl.u32 %v3666, 7
        %v3668 = vsub.s32 0, %v3667
        %v3669 = vrot.slane %v2309, %v3668
        %v3671 = vadd.f32 %v3657, %v3669
        %v3672 = vadd.f32 %v3658, %v3669
        %v3673 = vadd.f32 %v3659, %v3669
        %v3674 = vadd.f32 %v3660, %v3669
        %v3675 = vadd.f32 %v3661, %v3669
        %v3676 = vadd.f32 %v3662, %v3669
        %v3677 = vadd.f32 %v3663, %v3669
        %v3678 = vadd.f32 %v3664, %v3669
        %v3679 = vmax.f32 %v3671, 0.0
        %v3680 = vmax.f32 %v3672, 0.0
        %v3681 = vmax.f32 %v3673, 0.0
        %v3682 = vmax.f32 %v3674, 0.0
        %v3683 = vmax.f32 %v3675, 0.0
        %v3684 = vmax.f32 %v3676, 0.0
        %v3685 = vmax.f32 %v3677, 0.0
        %v3686 = vmax.f32 %v3678, 0.0
        %3688 = vset.pattern.permute.xlu0 0
        %3689 = vperm.xlu0 %3688, %v2310
        %v3690 = vpop.permute.xlu0 %3689
        %3693 = vset.pattern.permute.xlu0 0
        %3694 = vperm.xlu0 %3693, %v2311
        %v3695 = vpop.permute.xlu0 %3694
        %3698 = vset.pattern.permute.xlu0 0
        %3699 = vperm.xlu0 %3698, %v2312
        %v3700 = vpop.permute.xlu0 %3699
        %3703 = vset.pattern.permute.xlu0 0
        %3704 = vperm.xlu0 %3703, %v2313
        %v3705 = vpop.permute.xlu0 %3704
        %3708 = vset.pattern.permute.xlu0 0
        %3709 = vperm.xlu0 %3708, %v2314
        %v3710 = vpop.permute.xlu0 %3709
        %3713 = vset.pattern.permute.xlu0 0
        %3714 = vperm.xlu0 %3713, %v2315
        %v3715 = vpop.permute.xlu0 %3714
        %3718 = vset.pattern.permute.xlu0 0
        %3719 = vperm.xlu0 %3718, %v2316
        %v3720 = vpop.permute.xlu0 %3719
        %3723 = vset.pattern.permute.xlu0 0
        %3724 = vperm.xlu0 %3723, %v2317
        %v3725 = vpop.permute.xlu0 %3724
        %v3727 = vmul.f32 %v3679, %v3690
        %v3728 = vmul.f32 %v3680, %v3695
        %v3729 = vmul.f32 %v3681, %v3700
        %v3730 = vmul.f32 %v3682, %v3705
        %v3731 = vmul.f32 %v3683, %v3710
        %v3732 = vmul.f32 %v3684, %v3715
        %v3733 = vmul.f32 %v3685, %v3720
        %v3734 = vmul.f32 %v3686, %v3725
        %3735 = vst [vmem:[#allocation3] sm:$0xff] 0.0
        %3736 = vst [vmem:[#allocation3 + $0x8] sm:$0xff] 0.0
        %3737 = vst [vmem:[#allocation3 + $0x10] sm:$0xff] 0.0
        %3738 = vst [vmem:[#allocation3 + $0x18] sm:$0xff] 0.0
        %3739 = vst [vmem:[#allocation3 + $0x20] sm:$0xff] 0.0
        %3740 = vst [vmem:[#allocation3 + $0x28] sm:$0xff] 0.0
        %3741 = vst [vmem:[#allocation3 + $0x30] sm:$0xff] 0.0
        %3742 = vst [vmem:[#allocation3 + $0x38] sm:$0xff] 0.0
        %3743 = vst [vmem:[#allocation3 + $0x40] sm:$0xff] 0.0
        %3744 = vst [vmem:[#allocation3 + $0x48] sm:$0xff] 0.0
        %3745 = vst [vmem:[#allocation3 + $0x50] sm:$0x1] 0.0
        %3746 = vst [vmem:[#allocation3 + $0xa] sm:$0xff] %v3727
        %3747 = vst [vmem:[#allocation3 + $0x12] sm:$0xff] %v3728
        %3748 = vst [vmem:[#allocation3 + $0x1a] sm:$0xff] %v3729
        %3749 = vst [vmem:[#allocation3 + $0x22] sm:$0xff] %v3730
        %3750 = vst [vmem:[#allocation3 + $0x2a] sm:$0xff] %v3731
        %3751 = vst [vmem:[#allocation3 + $0x32] sm:$0xff] %v3732
        %3752 = vst [vmem:[#allocation3 + $0x3a] sm:$0xff] %v3733
        %3753 = vst [vmem:[#allocation3 + $0x42] sm:$0x1f] %v3734
        %v3754 = vld [vmem:[#allocation3] sm:$0xff]
        %v3755 = vld [vmem:[#allocation3 + $0x8] sm:$0xff]
        %v3756 = vld [vmem:[#allocation3 + $0x10] sm:$0xff]
        %v3757 = vld [vmem:[#allocation3 + $0x18] sm:$0xff]
        %v3758 = vld [vmem:[#allocation3 + $0x20] sm:$0xff]
        %v3759 = vld [vmem:[#allocation3 + $0x28] sm:$0xff]
        %v3760 = vld [vmem:[#allocation3 + $0x30] sm:$0xff]
        %v3761 = vld [vmem:[#allocation3 + $0x38] sm:$0x1f]
        %v3762 = vpack.c.bf16 %v3755, %v3754
        %v3763 = vpack.c.bf16 %v3757, %v3756
        %v3764 = vpack.c.bf16 %v3759, %v3758
        %v3765 = vpack.c.bf16 %v3761, %v3760
        %v3766 = vld [vmem:[#allocation8] sm:$0xf]
        %v3767 = vld [vmem:[#allocation8 + $0x4] sm:$0xf]
        %v3768 = vld [vmem:[#allocation8 + $0x8] sm:$0xf]
        %v3769 = vld [vmem:[#allocation8 + $0xc] sm:$0xf]
        %v3770 = vld [vmem:[#allocation8 + $0x10] sm:$0xf]
        %v3771 = vld [vmem:[#allocation8 + $0x14] sm:$0xf]
        %v3772 = vld [vmem:[#allocation8 + $0x18] sm:$0xf]
        %v3773 = vld [vmem:[#allocation8 + $0x1c] sm:$0xf]
        %v3774 = vld [vmem:[#allocation8 + $0x20] sm:$0xf]
        %v3775 = vld [vmem:[#allocation8 + $0x24] sm:$0xf]
        %v3776 = vld [vmem:[#allocation8 + $0x28] sm:$0xf]
        %v3777 = vld [vmem:[#allocation8 + $0x2c] sm:$0xf]
        %v3778 = vld [vmem:[#allocation8 + $0x30] sm:$0xf]
        %v3779 = vld [vmem:[#allocation8 + $0x34] sm:$0xf]
        %v3780 = vld [vmem:[#allocation8 + $0x38] sm:$0xf]
        %v3781 = vld [vmem:[#allocation8 + $0x3c] sm:$0xf]
        %v3782 = vld [vmem:[#allocation3 + $0x1] sm:$0xff]
        %v3783 = vld [vmem:[#allocation3 + $0x9] sm:$0xff]
        %v3784 = vld [vmem:[#allocation3 + $0x11] sm:$0xff]
        %v3785 = vld [vmem:[#allocation3 + $0x19] sm:$0xff]
        %v3786 = vld [vmem:[#allocation3 + $0x21] sm:$0xff]
        %v3787 = vld [vmem:[#allocation3 + $0x29] sm:$0xff]
        %v3788 = vld [vmem:[#allocation3 + $0x31] sm:$0xff]
        %v3789 = vld [vmem:[#allocation3 + $0x39] sm:$0x1f]
        %v3790 = vpack.c.bf16 %v3783, %v3782
        %v3791 = vpack.c.bf16 %v3785, %v3784
        %v3792 = vpack.c.bf16 %v3787, %v3786
        %v3793 = vpack.c.bf16 %v3789, %v3788
        %v3794 = vld [vmem:[%s2358] sm:$0xf]
        %v3795 = vld [vmem:[%s2358 + $0x4] sm:$0xf]
        %v3796 = vld [vmem:[%s2358 + $0x8] sm:$0xf]
        %v3797 = vld [vmem:[%s2358 + $0xc] sm:$0xf]
        %v3798 = vld [vmem:[%s2358 + $0x10] sm:$0xf]
        %v3799 = vld [vmem:[%s2358 + $0x14] sm:$0xf]
        %v3800 = vld [vmem:[%s2358 + $0x18] sm:$0xf]
        %v3801 = vld [vmem:[%s2358 + $0x1c] sm:$0xf]
        %v3802 = vld [vmem:[%s2358 + $0x20] sm:$0xf]
        %v3803 = vld [vmem:[%s2358 + $0x24] sm:$0xf]
        %v3804 = vld [vmem:[%s2358 + $0x28] sm:$0xf]
        %v3805 = vld [vmem:[%s2358 + $0x2c] sm:$0xf]
        %v3806 = vld [vmem:[%s2358 + $0x30] sm:$0xf]
        %v3807 = vld [vmem:[%s2358 + $0x34] sm:$0xf]
        %v3808 = vld [vmem:[%s2358 + $0x38] sm:$0xf]
        %v3809 = vld [vmem:[%s2358 + $0x3c] sm:$0xf]
        %v3826 = vunpack.c.l.b16 %v3794
        %v3827 = vunpack.c.l.b16 %v3795
        %v3828 = vunpack.c.l.b16 %v3796
        %v3829 = vunpack.c.l.b16 %v3797
        %v3830 = vunpack.c.l.b16 %v3798
        %v3831 = vunpack.c.l.b16 %v3799
        %v3832 = vunpack.c.l.b16 %v3800
        %v3833 = vunpack.c.l.b16 %v3801
        %v3834 = vunpack.c.l.b16 %v3802
        %v3835 = vunpack.c.l.b16 %v3803
        %v3836 = vunpack.c.l.b16 %v3804
        %v3837 = vunpack.c.l.b16 %v3805
        %v3838 = vunpack.c.l.b16 %v3806
        %v3839 = vunpack.c.l.b16 %v3807
        %v3840 = vunpack.c.l.b16 %v3808
        %v3841 = vunpack.c.l.b16 %v3809
        %v3842 = vpack.c.b16 %v3827, %v3826
        %v3843 = vpack.c.b16 %v3829, %v3828
        %v3844 = vpack.c.b16 %v3831, %v3830
        %v3845 = vpack.c.b16 %v3833, %v3832
        %v3846 = vpack.c.b16 %v3835, %v3834
        %v3847 = vpack.c.b16 %v3837, %v3836
        %v3848 = vpack.c.b16 %v3839, %v3838
        %v3849 = vpack.c.b16 %v3841, %v3840
        %3858 = vmatprep.subr.bf16.mxu0 0
        %3859 = vmatpush1.bf16.msra.mxu0 %v3849
        %3860 = vmatprep.subr.bf16.mxu0 0
        %3861 = vmatpush1.bf16.msra.mxu0 %v3848
        %3862 = vmatprep.subr.bf16.mxu0 0
        %3863 = vmatpush1.bf16.msra.mxu0 %v3847
        %3864 = vmatprep.subr.bf16.mxu0 0
        %3865 = vmatpush1.bf16.msra.mxu0 %v3846
        %3866 = vmatprep.subr.bf16.mxu0 0
        %3867 = vmatpush1.bf16.msra.mxu0 %v3845
        %3868 = vmatprep.subr.bf16.mxu0 0
        %3869 = vmatpush1.bf16.msra.mxu0 %v3844
        %3870 = vmatprep.subr.bf16.mxu0 0
        %3871 = vmatpush1.bf16.msra.mxu0 %v3843
        %3872 = vmatprep.subr.bf16.mxu0 0
        %3873 = vmatpush1.bf16.msra.mxu0 %v3842
        %3874 = vmatprep.subr.bf16.mxu0 0
        %3875 = vmatpush2.bf16.msra.mxu0 0
        %3876 = vmatprep.subr.bf16.mxu0 0
        %3877 = vmatpush2.bf16.msra.mxu0 0
        %3878 = vmatprep.subr.bf16.mxu0 0
        %3879 = vmatpush2.bf16.msra.mxu0 0
        %3880 = vmatprep.subr.bf16.mxu0 0
        %3881 = vmatpush2.bf16.msra.mxu0 0
        %3882 = vmatprep.subr.bf16.mxu0 0
        %3883 = vmatpush2.bf16.msra.mxu0 0
        %3884 = vmatprep.subr.bf16.mxu0 0
        %3885 = vmatpush2.bf16.msra.mxu0 0
        %3886 = vmatprep.subr.bf16.mxu0 0
        %3887 = vmatpush2.bf16.msra.mxu0 0
        %3888 = vmatprep.subr.bf16.mxu0 0
        %3889 = vmatpush2.bf16.msra.mxu0 0
        %3890 = vmatprep.mubr.bf16.mxu0 0
        %3891 = vmatmul.mubr.bf16.gmra.mxu0 %v3790
        %v3892 = vpop.f32.mrf.mxu0
        %v3893 = vadd.f32 0.0, %v3892
        %v3894 = vpop.f32.mrf.mxu0
        %v3895 = vpop.f32.mrf.mxu0
        %v3896 = vadd.f32 0.0, %v3895
        %v3897 = vpop.f32.mrf.mxu0
        %3898 = vmatprep.mubr.bf16.mxu0 0
        %3899 = vmatmul.mubr.bf16.gmra.mxu0 %v3791
        %v3900 = vpop.f32.mrf.mxu0
        %v3901 = vadd.f32 0.0, %v3900
        %v3902 = vpop.f32.mrf.mxu0
        %v3903 = vpop.f32.mrf.mxu0
        %v3904 = vadd.f32 0.0, %v3903
        %v3905 = vpop.f32.mrf.mxu0
        %3906 = vmatprep.mubr.bf16.mxu0 0
        %3907 = vmatmul.mubr.bf16.gmra.mxu0 %v3792
        %v3908 = vpop.f32.mrf.mxu0
        %v3909 = vadd.f32 0.0, %v3908
        %v3910 = vpop.f32.mrf.mxu0
        %v3911 = vpop.f32.mrf.mxu0
        %v3912 = vadd.f32 0.0, %v3911
        %v3913 = vpop.f32.mrf.mxu0
        %3914 = vmatprep.mubr.bf16.mxu0 0
        %3915 = vmatmul.mubr.bf16.gmra.mxu0 %v3793
        %v3916 = vpop.f32.mrf.mxu0
        %v3917 = vadd.f32 0.0, %v3916
        %v3918 = vpop.f32.mrf.mxu0
        %v3919 = vpop.f32.mrf.mxu0
        %v3920 = vadd.f32 0.0, %v3919
        %v3921 = vpop.f32.mrf.mxu0
        %3922 = vdwg.mxu0
        %v3939 = vunpack.c.l.b16 %v3766
        %v3940 = vunpack.c.l.b16 %v3767
        %v3941 = vunpack.c.l.b16 %v3768
        %v3942 = vunpack.c.l.b16 %v3769
        %v3943 = vunpack.c.l.b16 %v3770
        %v3944 = vunpack.c.l.b16 %v3771
        %v3945 = vunpack.c.l.b16 %v3772
        %v3946 = vunpack.c.l.b16 %v3773
        %v3947 = vunpack.c.l.b16 %v3774
        %v3948 = vunpack.c.l.b16 %v3775
        %v3949 = vunpack.c.l.b16 %v3776
        %v3950 = vunpack.c.l.b16 %v3777
        %v3951 = vunpack.c.l.b16 %v3778
        %v3952 = vunpack.c.l.b16 %v3779
        %v3953 = vunpack.c.l.b16 %v3780
        %v3954 = vunpack.c.l.b16 %v3781
        %v3955 = vpack.c.b16 %v3940, %v3939
        %v3956 = vpack.c.b16 %v3942, %v3941
        %v3957 = vpack.c.b16 %v3944, %v3943
        %v3958 = vpack.c.b16 %v3946, %v3945
        %v3959 = vpack.c.b16 %v3948, %v3947
        %v3960 = vpack.c.b16 %v3950, %v3949
        %v3961 = vpack.c.b16 %v3952, %v3951
        %v3962 = vpack.c.b16 %v3954, %v3953
        %3971 = vmatprep.subr.bf16.mxu0 0
        %3972 = vmatpush1.bf16.msra.mxu0 %v3962
        %3973 = vmatprep.subr.bf16.mxu0 0
        %3974 = vmatpush1.bf16.msra.mxu0 %v3961
        %3975 = vmatprep.subr.bf16.mxu0 0
        %3976 = vmatpush1.bf16.msra.mxu0 %v3960
        %3977 = vmatprep.subr.bf16.mxu0 0
        %3978 = vmatpush1.bf16.msra.mxu0 %v3959
        %3979 = vmatprep.subr.bf16.mxu0 0
        %3980 = vmatpush1.bf16.msra.mxu0 %v3958
        %3981 = vmatprep.subr.bf16.mxu0 0
        %3982 = vmatpush1.bf16.msra.mxu0 %v3957
        %3983 = vmatprep.subr.bf16.mxu0 0
        %3984 = vmatpush1.bf16.msra.mxu0 %v3956
        %3985 = vmatprep.subr.bf16.mxu0 0
        %3986 = vmatpush1.bf16.msra.mxu0 %v3955
        %3987 = vmatprep.subr.bf16.mxu0 0
        %3988 = vmatpush2.bf16.msra.mxu0 0
        %3989 = vmatprep.subr.bf16.mxu0 0
        %3990 = vmatpush2.bf16.msra.mxu0 0
        %3991 = vmatprep.subr.bf16.mxu0 0
        %3992 = vmatpush2.bf16.msra.mxu0 0
        %3993 = vmatprep.subr.bf16.mxu0 0
        %3994 = vmatpush2.bf16.msra.mxu0 0
        %3995 = vmatprep.subr.bf16.mxu0 0
        %3996 = vmatpush2.bf16.msra.mxu0 0
        %3997 = vmatprep.subr.bf16.mxu0 0
        %3998 = vmatpush2.bf16.msra.mxu0 0
        %3999 = vmatprep.subr.bf16.mxu0 0
        %4000 = vmatpush2.bf16.msra.mxu0 0
        %4001 = vmatprep.subr.bf16.mxu0 0
        %4002 = vmatpush2.bf16.msra.mxu0 0
        %4003 = vmatprep.mubr.bf16.mxu0 0
        %4004 = vmatmul.mubr.bf16.gmra.mxu0 %v3762
        %v4005 = vpop.f32.mrf.mxu0
        %v4006 = vadd.f32 %v3893, %v4005
        %v4007 = vpop.f32.mrf.mxu0
        %v4008 = vpop.f32.mrf.mxu0
        %v4009 = vadd.f32 %v3896, %v4008
        %v4010 = vpop.f32.mrf.mxu0
        %4011 = vmatprep.mubr.bf16.mxu0 0
        %4012 = vmatmul.mubr.bf16.gmra.mxu0 %v3763
        %v4013 = vpop.f32.mrf.mxu0
        %v4014 = vadd.f32 %v3901, %v4013
        %v4015 = vpop.f32.mrf.mxu0
        %v4016 = vpop.f32.mrf.mxu0
        %v4017 = vadd.f32 %v3904, %v4016
        %v4018 = vpop.f32.mrf.mxu0
        %4019 = vmatprep.mubr.bf16.mxu0 0
        %4020 = vmatmul.mubr.bf16.gmra.mxu0 %v3764
        %v4021 = vpop.f32.mrf.mxu0
        %v4022 = vadd.f32 %v3909, %v4021
        %v4023 = vpop.f32.mrf.mxu0
        %v4024 = vpop.f32.mrf.mxu0
        %v4025 = vadd.f32 %v3912, %v4024
        %v4026 = vpop.f32.mrf.mxu0
        %4027 = vmatprep.mubr.bf16.mxu0 0
        %4028 = vmatmul.mubr.bf16.gmra.mxu0 %v3765
        %v4029 = vpop.f32.mrf.mxu0
        %v4030 = vadd.f32 %v3917, %v4029
        %v4031 = vpop.f32.mrf.mxu0
        %v4032 = vpop.f32.mrf.mxu0
        %v4033 = vadd.f32 %v3920, %v4032
        %v4034 = vpop.f32.mrf.mxu0
        %4035 = vdwg.mxu0
        %v4036 = vld [vmem:[#allocation3 + $0x2] sm:$0xff]
        %v4037 = vld [vmem:[#allocation3 + $0xa] sm:$0xff]
        %v4038 = vld [vmem:[#allocation3 + $0x12] sm:$0xff]
        %v4039 = vld [vmem:[#allocation3 + $0x1a] sm:$0xff]
        %v4040 = vld [vmem:[#allocation3 + $0x22] sm:$0xff]
        %v4041 = vld [vmem:[#allocation3 + $0x2a] sm:$0xff]
        %v4042 = vld [vmem:[#allocation3 + $0x32] sm:$0xff]
        %v4043 = vld [vmem:[#allocation3 + $0x3a] sm:$0x1f]
        %v4044 = vpack.c.bf16 %v4037, %v4036
        %v4045 = vpack.c.bf16 %v4039, %v4038
        %v4046 = vpack.c.bf16 %v4041, %v4040
        %v4047 = vpack.c.bf16 %v4043, %v4042
        %v4048 = vld [vmem:[%s2613] sm:$0xf]
        %v4049 = vld [vmem:[%s2613 + $0x4] sm:$0xf]
        %v4050 = vld [vmem:[%s2613 + $0x8] sm:$0xf]
        %v4051 = vld [vmem:[%s2613 + $0xc] sm:$0xf]
        %v4052 = vld [vmem:[%s2613 + $0x10] sm:$0xf]
        %v4053 = vld [vmem:[%s2613 + $0x14] sm:$0xf]
        %v4054 = vld [vmem:[%s2613 + $0x18] sm:$0xf]
        %v4055 = vld [vmem:[%s2613 + $0x1c] sm:$0xf]
        %v4056 = vld [vmem:[%s2613 + $0x20] sm:$0xf]
        %v4057 = vld [vmem:[%s2613 + $0x24] sm:$0xf]
        %v4058 = vld [vmem:[%s2613 + $0x28] sm:$0xf]
        %v4059 = vld [vmem:[%s2613 + $0x2c] sm:$0xf]
        %v4060 = vld [vmem:[%s2613 + $0x30] sm:$0xf]
        %v4061 = vld [vmem:[%s2613 + $0x34] sm:$0xf]
        %v4062 = vld [vmem:[%s2613 + $0x38] sm:$0xf]
        %v4063 = vld [vmem:[%s2613 + $0x3c] sm:$0xf]
        %v4080 = vunpack.c.l.b16 %v4048
        %v4081 = vunpack.c.l.b16 %v4049
        %v4082 = vunpack.c.l.b16 %v4050
        %v4083 = vunpack.c.l.b16 %v4051
        %v4084 = vunpack.c.l.b16 %v4052
        %v4085 = vunpack.c.l.b16 %v4053
        %v4086 = vunpack.c.l.b16 %v4054
        %v4087 = vunpack.c.l.b16 %v4055
        %v4088 = vunpack.c.l.b16 %v4056
        %v4089 = vunpack.c.l.b16 %v4057
        %v4090 = vunpack.c.l.b16 %v4058
        %v4091 = vunpack.c.l.b16 %v4059
        %v4092 = vunpack.c.l.b16 %v4060
        %v4093 = vunpack.c.l.b16 %v4061
        %v4094 = vunpack.c.l.b16 %v4062
        %v4095 = vunpack.c.l.b16 %v4063
        %v4096 = vpack.c.b16 %v4081, %v4080
        %v4097 = vpack.c.b16 %v4083, %v4082
        %v4098 = vpack.c.b16 %v4085, %v4084
        %v4099 = vpack.c.b16 %v4087, %v4086
        %v4100 = vpack.c.b16 %v4089, %v4088
        %v4101 = vpack.c.b16 %v4091, %v4090
        %v4102 = vpack.c.b16 %v4093, %v4092
        %v4103 = vpack.c.b16 %v4095, %v4094
        %4112 = vmatprep.subr.bf16.mxu0 0
        %4113 = vmatpush1.bf16.msra.mxu0 %v4103
        %4114 = vmatprep.subr.bf16.mxu0 0
        %4115 = vmatpush1.bf16.msra.mxu0 %v4102
        %4116 = vmatprep.subr.bf16.mxu0 0
        %4117 = vmatpush1.bf16.msra.mxu0 %v4101
        %4118 = vmatprep.subr.bf16.mxu0 0
        %4119 = vmatpush1.bf16.msra.mxu0 %v4100
        %4120 = vmatprep.subr.bf16.mxu0 0
        %4121 = vmatpush1.bf16.msra.mxu0 %v4099
        %4122 = vmatprep.subr.bf16.mxu0 0
        %4123 = vmatpush1.bf16.msra.mxu0 %v4098
        %4124 = vmatprep.subr.bf16.mxu0 0
        %4125 = vmatpush1.bf16.msra.mxu0 %v4097
        %4126 = vmatprep.subr.bf16.mxu0 0
        %4127 = vmatpush1.bf16.msra.mxu0 %v4096
        %4128 = vmatprep.subr.bf16.mxu0 0
        %4129 = vmatpush2.bf16.msra.mxu0 0
        %4130 = vmatprep.subr.bf16.mxu0 0
        %4131 = vmatpush2.bf16.msra.mxu0 0
        %4132 = vmatprep.subr.bf16.mxu0 0
        %4133 = vmatpush2.bf16.msra.mxu0 0
        %4134 = vmatprep.subr.bf16.mxu0 0
        %4135 = vmatpush2.bf16.msra.mxu0 0
        %4136 = vmatprep.subr.bf16.mxu0 0
        %4137 = vmatpush2.bf16.msra.mxu0 0
        %4138 = vmatprep.subr.bf16.mxu0 0
        %4139 = vmatpush2.bf16.msra.mxu0 0
        %4140 = vmatprep.subr.bf16.mxu0 0
        %4141 = vmatpush2.bf16.msra.mxu0 0
        %4142 = vmatprep.subr.bf16.mxu0 0
        %4143 = vmatpush2.bf16.msra.mxu0 0
        %4144 = vmatprep.mubr.bf16.mxu0 0
        %4145 = vmatmul.mubr.bf16.gmra.mxu0 %v4044
        %v4146 = vpop.f32.mrf.mxu0
        %v4147 = vadd.f32 0.0, %v4146
        %v4148 = vpop.f32.mrf.mxu0
        %v4149 = vpop.f32.mrf.mxu0
        %v4150 = vadd.f32 0.0, %v4149
        %v4151 = vpop.f32.mrf.mxu0
        %4152 = vmatprep.mubr.bf16.mxu0 0
        %4153 = vmatmul.mubr.bf16.gmra.mxu0 %v4045
        %v4154 = vpop.f32.mrf.mxu0
        %v4155 = vadd.f32 0.0, %v4154
        %v4156 = vpop.f32.mrf.mxu0
        %v4157 = vpop.f32.mrf.mxu0
        %v4158 = vadd.f32 0.0, %v4157
        %v4159 = vpop.f32.mrf.mxu0
        %4160 = vmatprep.mubr.bf16.mxu0 0
        %4161 = vmatmul.mubr.bf16.gmra.mxu0 %v4046
        %v4162 = vpop.f32.mrf.mxu0
        %v4163 = vadd.f32 0.0, %v4162
        %v4164 = vpop.f32.mrf.mxu0
        %v4165 = vpop.f32.mrf.mxu0
        %v4166 = vadd.f32 0.0, %v4165
        %v4167 = vpop.f32.mrf.mxu0
        %4168 = vmatprep.mubr.bf16.mxu0 0
        %4169 = vmatmul.mubr.bf16.gmra.mxu0 %v4047
        %v4170 = vpop.f32.mrf.mxu0
        %v4171 = vadd.f32 0.0, %v4170
        %v4172 = vpop.f32.mrf.mxu0
        %v4173 = vpop.f32.mrf.mxu0
        %v4174 = vadd.f32 0.0, %v4173
        %v4175 = vpop.f32.mrf.mxu0
        %4176 = vdwg.mxu0
        %v4177 = vadd.f32 %v4006, %v4147
        %v4178 = vadd.f32 %v4009, %v4150
        %v4179 = vadd.f32 %v4014, %v4155
        %v4180 = vadd.f32 %v4017, %v4158
        %v4181 = vadd.f32 %v4022, %v4163
        %v4182 = vadd.f32 %v4025, %v4166
        %v4183 = vadd.f32 %v4030, %v4171
        %v4184 = vadd.f32 %v4033, %v4174
        %v4185 = vld [vmem:[#allocation3 + $0x9] sm:$0xff]
        %v4186 = vld [vmem:[#allocation3 + $0x11] sm:$0xff]
        %v4187 = vld [vmem:[#allocation3 + $0x19] sm:$0xff]
        %v4188 = vld [vmem:[#allocation3 + $0x21] sm:$0xff]
        %v4189 = vld [vmem:[#allocation3 + $0x29] sm:$0xff]
        %v4190 = vld [vmem:[#allocation3 + $0x31] sm:$0xff]
        %v4191 = vld [vmem:[#allocation3 + $0x39] sm:$0xff]
        %v4192 = vld [vmem:[#allocation3 + $0x41] sm:$0x1f]
        %v4193 = vpack.c.bf16 %v4186, %v4185
        %v4194 = vpack.c.bf16 %v4188, %v4187
        %v4195 = vpack.c.bf16 %v4190, %v4189
        %v4196 = vpack.c.bf16 %v4192, %v4191
        %v4197 = vld [vmem:[%s2763] sm:$0xf]
        %v4198 = vld [vmem:[%s2763 + $0x4] sm:$0xf]
        %v4199 = vld [vmem:[%s2763 + $0x8] sm:$0xf]
        %v4200 = vld [vmem:[%s2763 + $0xc] sm:$0xf]
        %v4201 = vld [vmem:[%s2763 + $0x10] sm:$0xf]
        %v4202 = vld [vmem:[%s2763 + $0x14] sm:$0xf]
        %v4203 = vld [vmem:[%s2763 + $0x18] sm:$0xf]
        %v4204 = vld [vmem:[%s2763 + $0x1c] sm:$0xf]
        %v4205 = vld [vmem:[%s2763 + $0x20] sm:$0xf]
        %v4206 = vld [vmem:[%s2763 + $0x24] sm:$0xf]
        %v4207 = vld [vmem:[%s2763 + $0x28] sm:$0xf]
        %v4208 = vld [vmem:[%s2763 + $0x2c] sm:$0xf]
        %v4209 = vld [vmem:[%s2763 + $0x30] sm:$0xf]
        %v4210 = vld [vmem:[%s2763 + $0x34] sm:$0xf]
        %v4211 = vld [vmem:[%s2763 + $0x38] sm:$0xf]
        %v4212 = vld [vmem:[%s2763 + $0x3c] sm:$0xf]
        %v4229 = vunpack.c.l.b16 %v4197
        %v4230 = vunpack.c.l.b16 %v4198
        %v4231 = vunpack.c.l.b16 %v4199
        %v4232 = vunpack.c.l.b16 %v4200
        %v4233 = vunpack.c.l.b16 %v4201
        %v4234 = vunpack.c.l.b16 %v4202
        %v4235 = vunpack.c.l.b16 %v4203
        %v4236 = vunpack.c.l.b16 %v4204
        %v4237 = vunpack.c.l.b16 %v4205
        %v4238 = vunpack.c.l.b16 %v4206
        %v4239 = vunpack.c.l.b16 %v4207
        %v4240 = vunpack.c.l.b16 %v4208
        %v4241 = vunpack.c.l.b16 %v4209
        %v4242 = vunpack.c.l.b16 %v4210
        %v4243 = vunpack.c.l.b16 %v4211
        %v4244 = vunpack.c.l.b16 %v4212
        %v4245 = vpack.c.b16 %v4230, %v4229
        %v4246 = vpack.c.b16 %v4232, %v4231
        %v4247 = vpack.c.b16 %v4234, %v4233
        %v4248 = vpack.c.b16 %v4236, %v4235
        %v4249 = vpack.c.b16 %v4238, %v4237
        %v4250 = vpack.c.b16 %v4240, %v4239
        %v4251 = vpack.c.b16 %v4242, %v4241
        %v4252 = vpack.c.b16 %v4244, %v4243
        %4261 = vmatprep.subr.bf16.mxu0 0
        %4262 = vmatpush1.bf16.msra.mxu0 %v4252
        %4263 = vmatprep.subr.bf16.mxu0 0
        %4264 = vmatpush1.bf16.msra.mxu0 %v4251
        %4265 = vmatprep.subr.bf16.mxu0 0
        %4266 = vmatpush1.bf16.msra.mxu0 %v4250
        %4267 = vmatprep.subr.bf16.mxu0 0
        %4268 = vmatpush1.bf16.msra.mxu0 %v4249
        %4269 = vmatprep.subr.bf16.mxu0 0
        %4270 = vmatpush1.bf16.msra.mxu0 %v4248
        %4271 = vmatprep.subr.bf16.mxu0 0
        %4272 = vmatpush1.bf16.msra.mxu0 %v4247
        %4273 = vmatprep.subr.bf16.mxu0 0
        %4274 = vmatpush1.bf16.msra.mxu0 %v4246
        %4275 = vmatprep.subr.bf16.mxu0 0
        %4276 = vmatpush1.bf16.msra.mxu0 %v4245
        %4277 = vmatprep.subr.bf16.mxu0 0
        %4278 = vmatpush2.bf16.msra.mxu0 0
        %4279 = vmatprep.subr.bf16.mxu0 0
        %4280 = vmatpush2.bf16.msra.mxu0 0
        %4281 = vmatprep.subr.bf16.mxu0 0
        %4282 = vmatpush2.bf16.msra.mxu0 0
        %4283 = vmatprep.subr.bf16.mxu0 0
        %4284 = vmatpush2.bf16.msra.mxu0 0
        %4285 = vmatprep.subr.bf16.mxu0 0
        %4286 = vmatpush2.bf16.msra.mxu0 0
        %4287 = vmatprep.subr.bf16.mxu0 0
        %4288 = vmatpush2.bf16.msra.mxu0 0
        %4289 = vmatprep.subr.bf16.mxu0 0
        %4290 = vmatpush2.bf16.msra.mxu0 0
        %4291 = vmatprep.subr.bf16.mxu0 0
        %4292 = vmatpush2.bf16.msra.mxu0 0
        %4293 = vmatprep.mubr.bf16.mxu0 0
        %4294 = vmatmul.mubr.bf16.gmra.mxu0 %v4193
        %v4295 = vpop.f32.mrf.mxu0
        %v4296 = vadd.f32 0.0, %v4295
        %v4297 = vpop.f32.mrf.mxu0
        %v4298 = vpop.f32.mrf.mxu0
        %v4299 = vadd.f32 0.0, %v4298
        %v4300 = vpop.f32.mrf.mxu0
        %4301 = vmatprep.mubr.bf16.mxu0 0
        %4302 = vmatmul.mubr.bf16.gmra.mxu0 %v4194
        %v4303 = vpop.f32.mrf.mxu0
        %v4304 = vadd.f32 0.0, %v4303
        %v4305 = vpop.f32.mrf.mxu0
        %v4306 = vpop.f32.mrf.mxu0
        %v4307 = vadd.f32 0.0, %v4306
        %v4308 = vpop.f32.mrf.mxu0
        %4309 = vmatprep.mubr.bf16.mxu0 0
        %4310 = vmatmul.mubr.bf16.gmra.mxu0 %v4195
        %v4311 = vpop.f32.mrf.mxu0
        %v4312 = vadd.f32 0.0, %v4311
        %v4313 = vpop.f32.mrf.mxu0
        %v4314 = vpop.f32.mrf.mxu0
        %v4315 = vadd.f32 0.0, %v4314
        %v4316 = vpop.f32.mrf.mxu0
        %4317 = vmatprep.mubr.bf16.mxu0 0
        %4318 = vmatmul.mubr.bf16.gmra.mxu0 %v4196
        %v4319 = vpop.f32.mrf.mxu0
        %v4320 = vadd.f32 0.0, %v4319
        %v4321 = vpop.f32.mrf.mxu0
        %v4322 = vpop.f32.mrf.mxu0
        %v4323 = vadd.f32 0.0, %v4322
        %v4324 = vpop.f32.mrf.mxu0
        %4325 = vdwg.mxu0
        %v4326 = vadd.f32 %v4177, %v4296
        %v4327 = vadd.f32 %v4178, %v4299
        %v4328 = vadd.f32 %v4179, %v4304
        %v4329 = vadd.f32 %v4180, %v4307
        %v4330 = vadd.f32 %v4181, %v4312
        %v4331 = vadd.f32 %v4182, %v4315
        %v4332 = vadd.f32 %v4183, %v4320
        %v4333 = vadd.f32 %v4184, %v4323
        %v4334 = vld [vmem:[#allocation3 + $0xa] sm:$0xff]
        %v4335 = vld [vmem:[#allocation3 + $0x12] sm:$0xff]
        %v4336 = vld [vmem:[#allocation3 + $0x1a] sm:$0xff]
        %v4337 = vld [vmem:[#allocation3 + $0x22] sm:$0xff]
        %v4338 = vld [vmem:[#allocation3 + $0x2a] sm:$0xff]
        %v4339 = vld [vmem:[#allocation3 + $0x32] sm:$0xff]
        %v4340 = vld [vmem:[#allocation3 + $0x3a] sm:$0xff]
        %v4341 = vld [vmem:[#allocation3 + $0x42] sm:$0x1f]
        %v4342 = vpack.c.bf16 %v4335, %v4334
        %v4343 = vpack.c.bf16 %v4337, %v4336
        %v4344 = vpack.c.bf16 %v4339, %v4338
        %v4345 = vpack.c.bf16 %v4341, %v4340
        %v4346 = vld [vmem:[%s2913] sm:$0xf]
        %v4347 = vld [vmem:[%s2913 + $0x4] sm:$0xf]
        %v4348 = vld [vmem:[%s2913 + $0x8] sm:$0xf]
        %v4349 = vld [vmem:[%s2913 + $0xc] sm:$0xf]
        %v4350 = vld [vmem:[%s2913 + $0x10] sm:$0xf]
        %v4351 = vld [vmem:[%s2913 + $0x14] sm:$0xf]
        %v4352 = vld [vmem:[%s2913 + $0x18] sm:$0xf]
        %v4353 = vld [vmem:[%s2913 + $0x1c] sm:$0xf]
        %v4354 = vld [vmem:[%s2913 + $0x20] sm:$0xf]
        %v4355 = vld [vmem:[%s2913 + $0x24] sm:$0xf]
        %v4356 = vld [vmem:[%s2913 + $0x28] sm:$0xf]
        %v4357 = vld [vmem:[%s2913 + $0x2c] sm:$0xf]
        %v4358 = vld [vmem:[%s2913 + $0x30] sm:$0xf]
        %v4359 = vld [vmem:[%s2913 + $0x34] sm:$0xf]
        %v4360 = vld [vmem:[%s2913 + $0x38] sm:$0xf]
        %v4361 = vld [vmem:[%s2913 + $0x3c] sm:$0xf]
        %v4378 = vunpack.c.l.b16 %v4346
        %v4379 = vunpack.c.l.b16 %v4347
        %v4380 = vunpack.c.l.b16 %v4348
        %v4381 = vunpack.c.l.b16 %v4349
        %v4382 = vunpack.c.l.b16 %v4350
        %v4383 = vunpack.c.l.b16 %v4351
        %v4384 = vunpack.c.l.b16 %v4352
        %v4385 = vunpack.c.l.b16 %v4353
        %v4386 = vunpack.c.l.b16 %v4354
        %v4387 = vunpack.c.l.b16 %v4355
        %v4388 = vunpack.c.l.b16 %v4356
        %v4389 = vunpack.c.l.b16 %v4357
        %v4390 = vunpack.c.l.b16 %v4358
        %v4391 = vunpack.c.l.b16 %v4359
        %v4392 = vunpack.c.l.b16 %v4360
        %v4393 = vunpack.c.l.b16 %v4361
        %v4394 = vpack.c.b16 %v4379, %v4378
        %v4395 = vpack.c.b16 %v4381, %v4380
        %v4396 = vpack.c.b16 %v4383, %v4382
        %v4397 = vpack.c.b16 %v4385, %v4384
        %v4398 = vpack.c.b16 %v4387, %v4386
        %v4399 = vpack.c.b16 %v4389, %v4388
        %v4400 = vpack.c.b16 %v4391, %v4390
        %v4401 = vpack.c.b16 %v4393, %v4392
        %4410 = vmatprep.subr.bf16.mxu0 0
        %4411 = vmatpush1.bf16.msra.mxu0 %v4401
        %4412 = vmatprep.subr.bf16.mxu0 0
        %4413 = vmatpush1.bf16.msra.mxu0 %v4400
        %4414 = vmatprep.subr.bf16.mxu0 0
        %4415 = vmatpush1.bf16.msra.mxu0 %v4399
        %4416 = vmatprep.subr.bf16.mxu0 0
        %4417 = vmatpush1.bf16.msra.mxu0 %v4398
        %4418 = vmatprep.subr.bf16.mxu0 0
        %4419 = vmatpush1.bf16.msra.mxu0 %v4397
        %4420 = vmatprep.subr.bf16.mxu0 0
        %4421 = vmatpush1.bf16.msra.mxu0 %v4396
        %4422 = vmatprep.subr.bf16.mxu0 0
        %4423 = vmatpush1.bf16.msra.mxu0 %v4395
        %4424 = vmatprep.subr.bf16.mxu0 0
        %4425 = vmatpush1.bf16.msra.mxu0 %v4394
        %4426 = vmatprep.subr.bf16.mxu0 0
        %4427 = vmatpush2.bf16.msra.mxu0 0
        %4428 = vmatprep.subr.bf16.mxu0 0
        %4429 = vmatpush2.bf16.msra.mxu0 0
        %4430 = vmatprep.subr.bf16.mxu0 0
        %4431 = vmatpush2.bf16.msra.mxu0 0
        %4432 = vmatprep.subr.bf16.mxu0 0
        %4433 = vmatpush2.bf16.msra.mxu0 0
        %4434 = vmatprep.subr.bf16.mxu0 0
        %4435 = vmatpush2.bf16.msra.mxu0 0
        %4436 = vmatprep.subr.bf16.mxu0 0
        %4437 = vmatpush2.bf16.msra.mxu0 0
        %4438 = vmatprep.subr.bf16.mxu0 0
        %4439 = vmatpush2.bf16.msra.mxu0 0
        %4440 = vmatprep.subr.bf16.mxu0 0
        %4441 = vmatpush2.bf16.msra.mxu0 0
        %4442 = vmatprep.mubr.bf16.mxu0 0
        %4443 = vmatmul.mubr.bf16.gmra.mxu0 %v4342
        %v4444 = vpop.f32.mrf.mxu0
        %v4445 = vadd.f32 0.0, %v4444
        %v4446 = vpop.f32.mrf.mxu0
        %v4447 = vpop.f32.mrf.mxu0
        %v4448 = vadd.f32 0.0, %v4447
        %v4449 = vpop.f32.mrf.mxu0
        %4450 = vmatprep.mubr.bf16.mxu0 0
        %4451 = vmatmul.mubr.bf16.gmra.mxu0 %v4343
        %v4452 = vpop.f32.mrf.mxu0
        %v4453 = vadd.f32 0.0, %v4452
        %v4454 = vpop.f32.mrf.mxu0
        %v4455 = vpop.f32.mrf.mxu0
        %v4456 = vadd.f32 0.0, %v4455
        %v4457 = vpop.f32.mrf.mxu0
        %4458 = vmatprep.mubr.bf16.mxu0 0
        %4459 = vmatmul.mubr.bf16.gmra.mxu0 %v4344
        %v4460 = vpop.f32.mrf.mxu0
        %v4461 = vadd.f32 0.0, %v4460
        %v4462 = vpop.f32.mrf.mxu0
        %v4463 = vpop.f32.mrf.mxu0
        %v4464 = vadd.f32 0.0, %v4463
        %v4465 = vpop.f32.mrf.mxu0
        %4466 = vmatprep.mubr.bf16.mxu0 0
        %4467 = vmatmul.mubr.bf16.gmra.mxu0 %v4345
        %v4468 = vpop.f32.mrf.mxu0
        %v4469 = vadd.f32 0.0, %v4468
        %v4470 = vpop.f32.mrf.mxu0
        %v4471 = vpop.f32.mrf.mxu0
        %v4472 = vadd.f32 0.0, %v4471
        %v4473 = vpop.f32.mrf.mxu0
        %4474 = vdwg.mxu0
        %v4475 = vadd.f32 %v4326, %v4445
        %v4476 = vadd.f32 %v4327, %v4448
        %v4477 = vadd.f32 %v4328, %v4453
        %v4478 = vadd.f32 %v4329, %v4456
        %v4479 = vadd.f32 %v4330, %v4461
        %v4480 = vadd.f32 %v4331, %v4464
        %v4481 = vadd.f32 %v4332, %v4469
        %v4482 = vadd.f32 %v4333, %v4472
        %v4483 = vld [vmem:[#allocation3 + $0xb] sm:$0xff]
        %v4484 = vld [vmem:[#allocation3 + $0x13] sm:$0xff]
        %v4485 = vld [vmem:[#allocation3 + $0x1b] sm:$0xff]
        %v4486 = vld [vmem:[#allocation3 + $0x23] sm:$0xff]
        %v4487 = vld [vmem:[#allocation3 + $0x2b] sm:$0xff]
        %v4488 = vld [vmem:[#allocation3 + $0x33] sm:$0xff]
        %v4489 = vld [vmem:[#allocation3 + $0x3b] sm:$0xff]
        %v4490 = vld [vmem:[#allocation3 + $0x43] sm:$0x1f]
        %v4491 = vpack.c.bf16 %v4484, %v4483
        %v4492 = vpack.c.bf16 %v4486, %v4485
        %v4493 = vpack.c.bf16 %v4488, %v4487
        %v4494 = vpack.c.bf16 %v4490, %v4489
        %v4495 = vld [vmem:[%s3063] sm:$0xf]
        %v4496 = vld [vmem:[%s3063 + $0x4] sm:$0xf]
        %v4497 = vld [vmem:[%s3063 + $0x8] sm:$0xf]
        %v4498 = vld [vmem:[%s3063 + $0xc] sm:$0xf]
        %v4499 = vld [vmem:[%s3063 + $0x10] sm:$0xf]
        %v4500 = vld [vmem:[%s3063 + $0x14] sm:$0xf]
        %v4501 = vld [vmem:[%s3063 + $0x18] sm:$0xf]
        %v4502 = vld [vmem:[%s3063 + $0x1c] sm:$0xf]
        %v4503 = vld [vmem:[%s3063 + $0x20] sm:$0xf]
        %v4504 = vld [vmem:[%s3063 + $0x24] sm:$0xf]
        %v4505 = vld [vmem:[%s3063 + $0x28] sm:$0xf]
        %v4506 = vld [vmem:[%s3063 + $0x2c] sm:$0xf]
        %v4507 = vld [vmem:[%s3063 + $0x30] sm:$0xf]
        %v4508 = vld [vmem:[%s3063 + $0x34] sm:$0xf]
        %v4509 = vld [vmem:[%s3063 + $0x38] sm:$0xf]
        %v4510 = vld [vmem:[%s3063 + $0x3c] sm:$0xf]
        %v4527 = vunpack.c.l.b16 %v4495
        %v4528 = vunpack.c.l.b16 %v4496
        %v4529 = vunpack.c.l.b16 %v4497
        %v4530 = vunpack.c.l.b16 %v4498
        %v4531 = vunpack.c.l.b16 %v4499
        %v4532 = vunpack.c.l.b16 %v4500
        %v4533 = vunpack.c.l.b16 %v4501
        %v4534 = vunpack.c.l.b16 %v4502
        %v4535 = vunpack.c.l.b16 %v4503
        %v4536 = vunpack.c.l.b16 %v4504
        %v4537 = vunpack.c.l.b16 %v4505
        %v4538 = vunpack.c.l.b16 %v4506
        %v4539 = vunpack.c.l.b16 %v4507
        %v4540 = vunpack.c.l.b16 %v4508
        %v4541 = vunpack.c.l.b16 %v4509
        %v4542 = vunpack.c.l.b16 %v4510
        %v4543 = vpack.c.b16 %v4528, %v4527
        %v4544 = vpack.c.b16 %v4530, %v4529
        %v4545 = vpack.c.b16 %v4532, %v4531
        %v4546 = vpack.c.b16 %v4534, %v4533
        %v4547 = vpack.c.b16 %v4536, %v4535
        %v4548 = vpack.c.b16 %v4538, %v4537
        %v4549 = vpack.c.b16 %v4540, %v4539
        %v4550 = vpack.c.b16 %v4542, %v4541
        %4559 = vmatprep.subr.bf16.mxu0 0
        %4560 = vmatpush1.bf16.msra.mxu0 %v4550
        %4561 = vmatprep.subr.bf16.mxu0 0
        %4562 = vmatpush1.bf16.msra.mxu0 %v4549
        %4563 = vmatprep.subr.bf16.mxu0 0
        %4564 = vmatpush1.bf16.msra.mxu0 %v4548
        %4565 = vmatprep.subr.bf16.mxu0 0
        %4566 = vmatpush1.bf16.msra.mxu0 %v4547
        %4567 = vmatprep.subr.bf16.mxu0 0
        %4568 = vmatpush1.bf16.msra.mxu0 %v4546
        %4569 = vmatprep.subr.bf16.mxu0 0
        %4570 = vmatpush1.bf16.msra.mxu0 %v4545
        %4571 = vmatprep.subr.bf16.mxu0 0
        %4572 = vmatpush1.bf16.msra.mxu0 %v4544
        %4573 = vmatprep.subr.bf16.mxu0 0
        %4574 = vmatpush1.bf16.msra.mxu0 %v4543
        %4575 = vmatprep.subr.bf16.mxu0 0
        %4576 = vmatpush2.bf16.msra.mxu0 0
        %4577 = vmatprep.subr.bf16.mxu0 0
        %4578 = vmatpush2.bf16.msra.mxu0 0
        %4579 = vmatprep.subr.bf16.mxu0 0
        %4580 = vmatpush2.bf16.msra.mxu0 0
        %4581 = vmatprep.subr.bf16.mxu0 0
        %4582 = vmatpush2.bf16.msra.mxu0 0
        %4583 = vmatprep.subr.bf16.mxu0 0
        %4584 = vmatpush2.bf16.msra.mxu0 0
        %4585 = vmatprep.subr.bf16.mxu0 0
        %4586 = vmatpush2.bf16.msra.mxu0 0
        %4587 = vmatprep.subr.bf16.mxu0 0
        %4588 = vmatpush2.bf16.msra.mxu0 0
        %4589 = vmatprep.subr.bf16.mxu0 0
        %4590 = vmatpush2.bf16.msra.mxu0 0
        %4591 = vmatprep.mubr.bf16.mxu0 0
        %4592 = vmatmul.mubr.bf16.gmra.mxu0 %v4491
        %v4593 = vpop.f32.mrf.mxu0
        %v4594 = vadd.f32 0.0, %v4593
        %v4595 = vpop.f32.mrf.mxu0
        %v4596 = vpop.f32.mrf.mxu0
        %v4597 = vadd.f32 0.0, %v4596
        %v4598 = vpop.f32.mrf.mxu0
        %4599 = vmatprep.mubr.bf16.mxu0 0
        %4600 = vmatmul.mubr.bf16.gmra.mxu0 %v4492
        %v4601 = vpop.f32.mrf.mxu0
        %v4602 = vadd.f32 0.0, %v4601
        %v4603 = vpop.f32.mrf.mxu0
        %v4604 = vpop.f32.mrf.mxu0
        %v4605 = vadd.f32 0.0, %v4604
        %v4606 = vpop.f32.mrf.mxu0
        %4607 = vmatprep.mubr.bf16.mxu0 0
        %4608 = vmatmul.mubr.bf16.gmra.mxu0 %v4493
        %v4609 = vpop.f32.mrf.mxu0
        %v4610 = vadd.f32 0.0, %v4609
        %v4611 = vpop.f32.mrf.mxu0
        %v4612 = vpop.f32.mrf.mxu0
        %v4613 = vadd.f32 0.0, %v4612
        %v4614 = vpop.f32.mrf.mxu0
        %4615 = vmatprep.mubr.bf16.mxu0 0
        %4616 = vmatmul.mubr.bf16.gmra.mxu0 %v4494
        %v4617 = vpop.f32.mrf.mxu0
        %v4618 = vadd.f32 0.0, %v4617
        %v4619 = vpop.f32.mrf.mxu0
        %v4620 = vpop.f32.mrf.mxu0
        %v4621 = vadd.f32 0.0, %v4620
        %v4622 = vpop.f32.mrf.mxu0
        %4623 = vdwg.mxu0
        %v4624 = vadd.f32 %v4475, %v4594
        %v4625 = vadd.f32 %v4476, %v4597
        %v4626 = vadd.f32 %v4477, %v4602
        %v4627 = vadd.f32 %v4478, %v4605
        %v4628 = vadd.f32 %v4479, %v4610
        %v4629 = vadd.f32 %v4480, %v4613
        %v4630 = vadd.f32 %v4481, %v4618
        %v4631 = vadd.f32 %v4482, %v4621
        %v4632 = vld [vmem:[#allocation3 + $0x12] sm:$0xff]
        %v4633 = vld [vmem:[#allocation3 + $0x1a] sm:$0xff]
        %v4634 = vld [vmem:[#allocation3 + $0x22] sm:$0xff]
        %v4635 = vld [vmem:[#allocation3 + $0x2a] sm:$0xff]
        %v4636 = vld [vmem:[#allocation3 + $0x32] sm:$0xff]
        %v4637 = vld [vmem:[#allocation3 + $0x3a] sm:$0xff]
        %v4638 = vld [vmem:[#allocation3 + $0x42] sm:$0xff]
        %v4639 = vld [vmem:[#allocation3 + $0x4a] sm:$0x1f]
        %v4640 = vpack.c.bf16 %v4633, %v4632
        %v4641 = vpack.c.bf16 %v4635, %v4634
        %v4642 = vpack.c.bf16 %v4637, %v4636
        %v4643 = vpack.c.bf16 %v4639, %v4638
        %v4644 = vld [vmem:[%s3213] sm:$0xf]
        %v4645 = vld [vmem:[%s3213 + $0x4] sm:$0xf]
        %v4646 = vld [vmem:[%s3213 + $0x8] sm:$0xf]
        %v4647 = vld [vmem:[%s3213 + $0xc] sm:$0xf]
        %v4648 = vld [vmem:[%s3213 + $0x10] sm:$0xf]
        %v4649 = vld [vmem:[%s3213 + $0x14] sm:$0xf]
        %v4650 = vld [vmem:[%s3213 + $0x18] sm:$0xf]
        %v4651 = vld [vmem:[%s3213 + $0x1c] sm:$0xf]
        %v4652 = vld [vmem:[%s3213 + $0x20] sm:$0xf]
        %v4653 = vld [vmem:[%s3213 + $0x24] sm:$0xf]
        %v4654 = vld [vmem:[%s3213 + $0x28] sm:$0xf]
        %v4655 = vld [vmem:[%s3213 + $0x2c] sm:$0xf]
        %v4656 = vld [vmem:[%s3213 + $0x30] sm:$0xf]
        %v4657 = vld [vmem:[%s3213 + $0x34] sm:$0xf]
        %v4658 = vld [vmem:[%s3213 + $0x38] sm:$0xf]
        %v4659 = vld [vmem:[%s3213 + $0x3c] sm:$0xf]
        %v4676 = vunpack.c.l.b16 %v4644
        %v4677 = vunpack.c.l.b16 %v4645
        %v4678 = vunpack.c.l.b16 %v4646
        %v4679 = vunpack.c.l.b16 %v4647
        %v4680 = vunpack.c.l.b16 %v4648
        %v4681 = vunpack.c.l.b16 %v4649
        %v4682 = vunpack.c.l.b16 %v4650
        %v4683 = vunpack.c.l.b16 %v4651
        %v4684 = vunpack.c.l.b16 %v4652
        %v4685 = vunpack.c.l.b16 %v4653
        %v4686 = vunpack.c.l.b16 %v4654
        %v4687 = vunpack.c.l.b16 %v4655
        %v4688 = vunpack.c.l.b16 %v4656
        %v4689 = vunpack.c.l.b16 %v4657
        %v4690 = vunpack.c.l.b16 %v4658
        %v4691 = vunpack.c.l.b16 %v4659
        %v4692 = vpack.c.b16 %v4677, %v4676
        %v4693 = vpack.c.b16 %v4679, %v4678
        %v4694 = vpack.c.b16 %v4681, %v4680
        %v4695 = vpack.c.b16 %v4683, %v4682
        %v4696 = vpack.c.b16 %v4685, %v4684
        %v4697 = vpack.c.b16 %v4687, %v4686
        %v4698 = vpack.c.b16 %v4689, %v4688
        %v4699 = vpack.c.b16 %v4691, %v4690
        %4708 = vmatprep.subr.bf16.mxu0 0
        %4709 = vmatpush1.bf16.msra.mxu0 %v4699
        %4710 = vmatprep.subr.bf16.mxu0 0
        %4711 = vmatpush1.bf16.msra.mxu0 %v4698
        %4712 = vmatprep.subr.bf16.mxu0 0
        %4713 = vmatpush1.bf16.msra.mxu0 %v4697
        %4714 = vmatprep.subr.bf16.mxu0 0
        %4715 = vmatpush1.bf16.msra.mxu0 %v4696
        %4716 = vmatprep.subr.bf16.mxu0 0
        %4717 = vmatpush1.bf16.msra.mxu0 %v4695
        %4718 = vmatprep.subr.bf16.mxu0 0
        %4719 = vmatpush1.bf16.msra.mxu0 %v4694
        %4720 = vmatprep.subr.bf16.mxu0 0
        %4721 = vmatpush1.bf16.msra.mxu0 %v4693
        %4722 = vmatprep.subr.bf16.mxu0 0
        %4723 = vmatpush1.bf16.msra.mxu0 %v4692
        %4724 = vmatprep.subr.bf16.mxu0 0
        %4725 = vmatpush2.bf16.msra.mxu0 0
        %4726 = vmatprep.subr.bf16.mxu0 0
        %4727 = vmatpush2.bf16.msra.mxu0 0
        %4728 = vmatprep.subr.bf16.mxu0 0
        %4729 = vmatpush2.bf16.msra.mxu0 0
        %4730 = vmatprep.subr.bf16.mxu0 0
        %4731 = vmatpush2.bf16.msra.mxu0 0
        %4732 = vmatprep.subr.bf16.mxu0 0
        %4733 = vmatpush2.bf16.msra.mxu0 0
        %4734 = vmatprep.subr.bf16.mxu0 0
        %4735 = vmatpush2.bf16.msra.mxu0 0
        %4736 = vmatprep.subr.bf16.mxu0 0
        %4737 = vmatpush2.bf16.msra.mxu0 0
        %4738 = vmatprep.subr.bf16.mxu0 0
        %4739 = vmatpush2.bf16.msra.mxu0 0
        %4740 = vmatprep.mubr.bf16.mxu0 0
        %4741 = vmatmul.mubr.bf16.gmra.mxu0 %v4640
        %v4742 = vpop.f32.mrf.mxu0
        %v4743 = vadd.f32 0.0, %v4742
        %v4744 = vpop.f32.mrf.mxu0
        %v4745 = vpop.f32.mrf.mxu0
        %v4746 = vadd.f32 0.0, %v4745
        %v4747 = vpop.f32.mrf.mxu0
        %4748 = vmatprep.mubr.bf16.mxu0 0
        %4749 = vmatmul.mubr.bf16.gmra.mxu0 %v4641
        %v4750 = vpop.f32.mrf.mxu0
        %v4751 = vadd.f32 0.0, %v4750
        %v4752 = vpop.f32.mrf.mxu0
        %v4753 = vpop.f32.mrf.mxu0
        %v4754 = vadd.f32 0.0, %v4753
        %v4755 = vpop.f32.mrf.mxu0
        %4756 = vmatprep.mubr.bf16.mxu0 0
        %4757 = vmatmul.mubr.bf16.gmra.mxu0 %v4642
        %v4758 = vpop.f32.mrf.mxu0
        %v4759 = vadd.f32 0.0, %v4758
        %v4760 = vpop.f32.mrf.mxu0
        %v4761 = vpop.f32.mrf.mxu0
        %v4762 = vadd.f32 0.0, %v4761
        %v4763 = vpop.f32.mrf.mxu0
        %4764 = vmatprep.mubr.bf16.mxu0 0
        %4765 = vmatmul.mubr.bf16.gmra.mxu0 %v4643
        %v4766 = vpop.f32.mrf.mxu0
        %v4767 = vadd.f32 0.0, %v4766
        %v4768 = vpop.f32.mrf.mxu0
        %v4769 = vpop.f32.mrf.mxu0
        %v4770 = vadd.f32 0.0, %v4769
        %v4771 = vpop.f32.mrf.mxu0
        %4772 = vdwg.mxu0
        %v4773 = vadd.f32 %v4624, %v4743
        %v4774 = vadd.f32 %v4625, %v4746
        %v4775 = vadd.f32 %v4626, %v4751
        %v4776 = vadd.f32 %v4627, %v4754
        %v4777 = vadd.f32 %v4628, %v4759
        %v4778 = vadd.f32 %v4629, %v4762
        %v4779 = vadd.f32 %v4630, %v4767
        %v4780 = vadd.f32 %v4631, %v4770
        %v4781 = vld [vmem:[#allocation3 + $0x13] sm:$0xff]
        %v4782 = vld [vmem:[#allocation3 + $0x1b] sm:$0xff]
        %v4783 = vld [vmem:[#allocation3 + $0x23] sm:$0xff]
        %v4784 = vld [vmem:[#allocation3 + $0x2b] sm:$0xff]
        %v4785 = vld [vmem:[#allocation3 + $0x33] sm:$0xff]
        %v4786 = vld [vmem:[#allocation3 + $0x3b] sm:$0xff]
        %v4787 = vld [vmem:[#allocation3 + $0x43] sm:$0xff]
        %v4788 = vld [vmem:[#allocation3 + $0x4b] sm:$0x1f]
        %v4789 = vpack.c.bf16 %v4782, %v4781
        %v4790 = vpack.c.bf16 %v4784, %v4783
        %v4791 = vpack.c.bf16 %v4786, %v4785
        %v4792 = vpack.c.bf16 %v4788, %v4787
        %v4793 = vld [vmem:[%s3363] sm:$0xf]
        %v4794 = vld [vmem:[%s3363 + $0x4] sm:$0xf]
        %v4795 = vld [vmem:[%s3363 + $0x8] sm:$0xf]
        %v4796 = vld [vmem:[%s3363 + $0xc] sm:$0xf]
        %v4797 = vld [vmem:[%s3363 + $0x10] sm:$0xf]
        %v4798 = vld [vmem:[%s3363 + $0x14] sm:$0xf]
        %v4799 = vld [vmem:[%s3363 + $0x18] sm:$0xf]
        %v4800 = vld [vmem:[%s3363 + $0x1c] sm:$0xf]
        %v4801 = vld [vmem:[%s3363 + $0x20] sm:$0xf]
        %v4802 = vld [vmem:[%s3363 + $0x24] sm:$0xf]
        %v4803 = vld [vmem:[%s3363 + $0x28] sm:$0xf]
        %v4804 = vld [vmem:[%s3363 + $0x2c] sm:$0xf]
        %v4805 = vld [vmem:[%s3363 + $0x30] sm:$0xf]
        %v4806 = vld [vmem:[%s3363 + $0x34] sm:$0xf]
        %v4807 = vld [vmem:[%s3363 + $0x38] sm:$0xf]
        %v4808 = vld [vmem:[%s3363 + $0x3c] sm:$0xf]
        %v4825 = vunpack.c.l.b16 %v4793
        %v4826 = vunpack.c.l.b16 %v4794
        %v4827 = vunpack.c.l.b16 %v4795
        %v4828 = vunpack.c.l.b16 %v4796
        %v4829 = vunpack.c.l.b16 %v4797
        %v4830 = vunpack.c.l.b16 %v4798
        %v4831 = vunpack.c.l.b16 %v4799
        %v4832 = vunpack.c.l.b16 %v4800
        %v4833 = vunpack.c.l.b16 %v4801
        %v4834 = vunpack.c.l.b16 %v4802
        %v4835 = vunpack.c.l.b16 %v4803
        %v4836 = vunpack.c.l.b16 %v4804
        %v4837 = vunpack.c.l.b16 %v4805
        %v4838 = vunpack.c.l.b16 %v4806
        %v4839 = vunpack.c.l.b16 %v4807
        %v4840 = vunpack.c.l.b16 %v4808
        %v4841 = vpack.c.b16 %v4826, %v4825
        %v4842 = vpack.c.b16 %v4828, %v4827
        %v4843 = vpack.c.b16 %v4830, %v4829
        %v4844 = vpack.c.b16 %v4832, %v4831
        %v4845 = vpack.c.b16 %v4834, %v4833
        %v4846 = vpack.c.b16 %v4836, %v4835
        %v4847 = vpack.c.b16 %v4838, %v4837
        %v4848 = vpack.c.b16 %v4840, %v4839
        %4857 = vmatprep.subr.bf16.mxu0 0
        %4858 = vmatpush1.bf16.msra.mxu0 %v4848
        %4859 = vmatprep.subr.bf16.mxu0 0
        %4860 = vmatpush1.bf16.msra.mxu0 %v4847
        %4861 = vmatprep.subr.bf16.mxu0 0
        %4862 = vmatpush1.bf16.msra.mxu0 %v4846
        %4863 = vmatprep.subr.bf16.mxu0 0
        %4864 = vmatpush1.bf16.msra.mxu0 %v4845
        %4865 = vmatprep.subr.bf16.mxu0 0
        %4866 = vmatpush1.bf16.msra.mxu0 %v4844
        %4867 = vmatprep.subr.bf16.mxu0 0
        %4868 = vmatpush1.bf16.msra.mxu0 %v4843
        %4869 = vmatprep.subr.bf16.mxu0 0
        %4870 = vmatpush1.bf16.msra.mxu0 %v4842
        %4871 = vmatprep.subr.bf16.mxu0 0
        %4872 = vmatpush1.bf16.msra.mxu0 %v4841
        %4873 = vmatprep.subr.bf16.mxu0 0
        %4874 = vmatpush2.bf16.msra.mxu0 0
        %4875 = vmatprep.subr.bf16.mxu0 0
        %4876 = vmatpush2.bf16.msra.mxu0 0
        %4877 = vmatprep.subr.bf16.mxu0 0
        %4878 = vmatpush2.bf16.msra.mxu0 0
        %4879 = vmatprep.subr.bf16.mxu0 0
        %4880 = vmatpush2.bf16.msra.mxu0 0
        %4881 = vmatprep.subr.bf16.mxu0 0
        %4882 = vmatpush2.bf16.msra.mxu0 0
        %4883 = vmatprep.subr.bf16.mxu0 0
        %4884 = vmatpush2.bf16.msra.mxu0 0
        %4885 = vmatprep.subr.bf16.mxu0 0
        %4886 = vmatpush2.bf16.msra.mxu0 0
        %4887 = vmatprep.subr.bf16.mxu0 0
        %4888 = vmatpush2.bf16.msra.mxu0 0
        %4889 = vmatprep.mubr.bf16.mxu0 0
        %4890 = vmatmul.mubr.bf16.gmra.mxu0 %v4789
        %v4891 = vpop.f32.mrf.mxu0
        %v4892 = vadd.f32 0.0, %v4891
        %v4893 = vpop.f32.mrf.mxu0
        %v4894 = vpop.f32.mrf.mxu0
        %v4895 = vadd.f32 0.0, %v4894
        %v4896 = vpop.f32.mrf.mxu0
        %4897 = vmatprep.mubr.bf16.mxu0 0
        %4898 = vmatmul.mubr.bf16.gmra.mxu0 %v4790
        %v4899 = vpop.f32.mrf.mxu0
        %v4900 = vadd.f32 0.0, %v4899
        %v4901 = vpop.f32.mrf.mxu0
        %v4902 = vpop.f32.mrf.mxu0
        %v4903 = vadd.f32 0.0, %v4902
        %v4904 = vpop.f32.mrf.mxu0
        %4905 = vmatprep.mubr.bf16.mxu0 0
        %4906 = vmatmul.mubr.bf16.gmra.mxu0 %v4791
        %v4907 = vpop.f32.mrf.mxu0
        %v4908 = vadd.f32 0.0, %v4907
        %v4909 = vpop.f32.mrf.mxu0
        %v4910 = vpop.f32.mrf.mxu0
        %v4911 = vadd.f32 0.0, %v4910
        %v4912 = vpop.f32.mrf.mxu0
        %4913 = vmatprep.mubr.bf16.mxu0 0
        %4914 = vmatmul.mubr.bf16.gmra.mxu0 %v4792
        %v4915 = vpop.f32.mrf.mxu0
        %v4916 = vadd.f32 0.0, %v4915
        %v4917 = vpop.f32.mrf.mxu0
        %v4918 = vpop.f32.mrf.mxu0
        %v4919 = vadd.f32 0.0, %v4918
        %v4920 = vpop.f32.mrf.mxu0
        %4921 = vdwg.mxu0
        %v4922 = vadd.f32 %v4773, %v4892
        %v4923 = vadd.f32 %v4774, %v4895
        %v4924 = vadd.f32 %v4775, %v4900
        %v4925 = vadd.f32 %v4776, %v4903
        %v4926 = vadd.f32 %v4777, %v4908
        %v4927 = vadd.f32 %v4778, %v4911
        %v4928 = vadd.f32 %v4779, %v4916
        %v4929 = vadd.f32 %v4780, %v4919
        %v4930 = vld [vmem:[#allocation3 + $0x14] sm:$0xff]
        %v4931 = vld [vmem:[#allocation3 + $0x1c] sm:$0xff]
        %v4932 = vld [vmem:[#allocation3 + $0x24] sm:$0xff]
        %v4933 = vld [vmem:[#allocation3 + $0x2c] sm:$0xff]
        %v4934 = vld [vmem:[#allocation3 + $0x34] sm:$0xff]
        %v4935 = vld [vmem:[#allocation3 + $0x3c] sm:$0xff]
        %v4936 = vld [vmem:[#allocation3 + $0x44] sm:$0xff]
        %v4937 = vld [vmem:[#allocation3 + $0x4c] sm:$0x1f]
        %v4938 = vpack.c.bf16 %v4931, %v4930
        %v4939 = vpack.c.bf16 %v4933, %v4932
        %v4940 = vpack.c.bf16 %v4935, %v4934
        %v4941 = vpack.c.bf16 %v4937, %v4936
        %v4942 = vld [vmem:[%s3513] sm:$0xf]
        %v4943 = vld [vmem:[%s3513 + $0x4] sm:$0xf]
        %v4944 = vld [vmem:[%s3513 + $0x8] sm:$0xf]
        %v4945 = vld [vmem:[%s3513 + $0xc] sm:$0xf]
        %v4946 = vld [vmem:[%s3513 + $0x10] sm:$0xf]
        %v4947 = vld [vmem:[%s3513 + $0x14] sm:$0xf]
        %v4948 = vld [vmem:[%s3513 + $0x18] sm:$0xf]
        %v4949 = vld [vmem:[%s3513 + $0x1c] sm:$0xf]
        %v4950 = vld [vmem:[%s3513 + $0x20] sm:$0xf]
        %v4951 = vld [vmem:[%s3513 + $0x24] sm:$0xf]
        %v4952 = vld [vmem:[%s3513 + $0x28] sm:$0xf]
        %v4953 = vld [vmem:[%s3513 + $0x2c] sm:$0xf]
        %v4954 = vld [vmem:[%s3513 + $0x30] sm:$0xf]
        %v4955 = vld [vmem:[%s3513 + $0x34] sm:$0xf]
        %v4956 = vld [vmem:[%s3513 + $0x38] sm:$0xf]
        %v4957 = vld [vmem:[%s3513 + $0x3c] sm:$0xf]
        %v4974 = vunpack.c.l.b16 %v4942
        %v4975 = vunpack.c.l.b16 %v4943
        %v4976 = vunpack.c.l.b16 %v4944
        %v4977 = vunpack.c.l.b16 %v4945
        %v4978 = vunpack.c.l.b16 %v4946
        %v4979 = vunpack.c.l.b16 %v4947
        %v4980 = vunpack.c.l.b16 %v4948
        %v4981 = vunpack.c.l.b16 %v4949
        %v4982 = vunpack.c.l.b16 %v4950
        %v4983 = vunpack.c.l.b16 %v4951
        %v4984 = vunpack.c.l.b16 %v4952
        %v4985 = vunpack.c.l.b16 %v4953
        %v4986 = vunpack.c.l.b16 %v4954
        %v4987 = vunpack.c.l.b16 %v4955
        %v4988 = vunpack.c.l.b16 %v4956
        %v4989 = vunpack.c.l.b16 %v4957
        %v4990 = vpack.c.b16 %v4975, %v4974
        %v4991 = vpack.c.b16 %v4977, %v4976
        %v4992 = vpack.c.b16 %v4979, %v4978
        %v4993 = vpack.c.b16 %v4981, %v4980
        %v4994 = vpack.c.b16 %v4983, %v4982
        %v4995 = vpack.c.b16 %v4985, %v4984
        %v4996 = vpack.c.b16 %v4987, %v4986
        %v4997 = vpack.c.b16 %v4989, %v4988
        %5006 = vmatprep.subr.bf16.mxu0 0
        %5007 = vmatpush1.bf16.msra.mxu0 %v4997
        %5008 = vmatprep.subr.bf16.mxu0 0
        %5009 = vmatpush1.bf16.msra.mxu0 %v4996
        %5010 = vmatprep.subr.bf16.mxu0 0
        %5011 = vmatpush1.bf16.msra.mxu0 %v4995
        %5012 = vmatprep.subr.bf16.mxu0 0
        %5013 = vmatpush1.bf16.msra.mxu0 %v4994
        %5014 = vmatprep.subr.bf16.mxu0 0
        %5015 = vmatpush1.bf16.msra.mxu0 %v4993
        %5016 = vmatprep.subr.bf16.mxu0 0
        %5017 = vmatpush1.bf16.msra.mxu0 %v4992
        %5018 = vmatprep.subr.bf16.mxu0 0
        %5019 = vmatpush1.bf16.msra.mxu0 %v4991
        %5020 = vmatprep.subr.bf16.mxu0 0
        %5021 = vmatpush1.bf16.msra.mxu0 %v4990
        %5022 = vmatprep.subr.bf16.mxu0 0
        %5023 = vmatpush2.bf16.msra.mxu0 0
        %5024 = vmatprep.subr.bf16.mxu0 0
        %5025 = vmatpush2.bf16.msra.mxu0 0
        %5026 = vmatprep.subr.bf16.mxu0 0
        %5027 = vmatpush2.bf16.msra.mxu0 0
        %5028 = vmatprep.subr.bf16.mxu0 0
        %5029 = vmatpush2.bf16.msra.mxu0 0
        %5030 = vmatprep.subr.bf16.mxu0 0
        %5031 = vmatpush2.bf16.msra.mxu0 0
        %5032 = vmatprep.subr.bf16.mxu0 0
        %5033 = vmatpush2.bf16.msra.mxu0 0
        %5034 = vmatprep.subr.bf16.mxu0 0
        %5035 = vmatpush2.bf16.msra.mxu0 0
        %5036 = vmatprep.subr.bf16.mxu0 0
        %5037 = vmatpush2.bf16.msra.mxu0 0
        %5038 = vmatprep.mubr.bf16.mxu0 0
        %5039 = vmatmul.mubr.bf16.gmra.mxu0 %v4938
        %v5040 = vpop.f32.mrf.mxu0
        %v5041 = vadd.f32 0.0, %v5040
        %v5042 = vpop.f32.mrf.mxu0
        %v5043 = vpop.f32.mrf.mxu0
        %v5044 = vadd.f32 0.0, %v5043
        %v5045 = vpop.f32.mrf.mxu0
        %5046 = vmatprep.mubr.bf16.mxu0 0
        %5047 = vmatmul.mubr.bf16.gmra.mxu0 %v4939
        %v5048 = vpop.f32.mrf.mxu0
        %v5049 = vadd.f32 0.0, %v5048
        %v5050 = vpop.f32.mrf.mxu0
        %v5051 = vpop.f32.mrf.mxu0
        %v5052 = vadd.f32 0.0, %v5051
        %v5053 = vpop.f32.mrf.mxu0
        %5054 = vmatprep.mubr.bf16.mxu0 0
        %5055 = vmatmul.mubr.bf16.gmra.mxu0 %v4940
        %v5056 = vpop.f32.mrf.mxu0
        %v5057 = vadd.f32 0.0, %v5056
        %v5058 = vpop.f32.mrf.mxu0
        %v5059 = vpop.f32.mrf.mxu0
        %v5060 = vadd.f32 0.0, %v5059
        %v5061 = vpop.f32.mrf.mxu0
        %5062 = vmatprep.mubr.bf16.mxu0 0
        %5063 = vmatmul.mubr.bf16.gmra.mxu0 %v4941
        %v5064 = vpop.f32.mrf.mxu0
        %v5065 = vadd.f32 0.0, %v5064
        %v5066 = vpop.f32.mrf.mxu0
        %v5067 = vpop.f32.mrf.mxu0
        %v5068 = vadd.f32 0.0, %v5067
        %v5069 = vpop.f32.mrf.mxu0
        %5070 = vdwg.mxu0
        %v5071 = vadd.f32 %v4922, %v5041
        %v5072 = vadd.f32 %v4923, %v5044
        %v5073 = vadd.f32 %v4924, %v5049
        %v5074 = vadd.f32 %v4925, %v5052
        %v5075 = vadd.f32 %v4926, %v5057
        %v5076 = vadd.f32 %v4927, %v5060
        %v5077 = vadd.f32 %v4928, %v5065
        %v5078 = vadd.f32 %v4929, %v5068
        %v5079 = vmul.f32 %v5071, %v3655
        %v5080 = vmul.f32 %v5072, %v3655
        %v5081 = vmul.f32 %v5073, %v3655
        %v5082 = vmul.f32 %v5074, %v3655
        %v5083 = vmul.f32 %v5075, %v3655
        %v5084 = vmul.f32 %v5076, %v3655
        %v5085 = vmul.f32 %v5077, %v3655
        %v5086 = vmul.f32 %v5078, %v3655
        %v5087 = vadd.f32 %v5079, %v3669
        %v5088 = vadd.f32 %v5080, %v3669
        %v5089 = vadd.f32 %v5081, %v3669
        %v5090 = vadd.f32 %v5082, %v3669
        %v5091 = vadd.f32 %v5083, %v3669
        %v5092 = vadd.f32 %v5084, %v3669
        %v5093 = vadd.f32 %v5085, %v3669
        %v5094 = vadd.f32 %v5086, %v3669
        %v5095 = vld [vmem:[#allocation2 + $0xa] sm:$0xff]
        %v5096 = vld [vmem:[#allocation2 + $0x12] sm:$0xff]
        %v5097 = vld [vmem:[#allocation2 + $0x1a] sm:$0xff]
        %v5098 = vld [vmem:[#allocation2 + $0x22] sm:$0xff]
        %v5099 = vld [vmem:[#allocation2 + $0x2a] sm:$0xff]
        %v5100 = vld [vmem:[#allocation2 + $0x32] sm:$0xff]
        %v5101 = vld [vmem:[#allocation2 + $0x3a] sm:$0xff]
        %v5102 = vld [vmem:[#allocation2 + $0x42] sm:$0x1f]
        %v5103 = vpack.c.bf16 %v5096, %v5095
        %v5104 = vpack.c.bf16 %v5098, %v5097
        %v5105 = vpack.c.bf16 %v5100, %v5099
        %v5106 = vpack.c.bf16 %v5102, %v5101
        %v5107 = vld [vmem:[%s3] sm:$0xf]
        %v5108 = vld [vmem:[%s3 + $0x4] sm:$0xf]
        %v5109 = vld [vmem:[%s3 + $0x8] sm:$0xf]
        %v5110 = vld [vmem:[%s3 + $0xc] sm:$0xf]
        %v5111 = vld [vmem:[%s3 + $0x10] sm:$0xf]
        %v5112 = vld [vmem:[%s3 + $0x14] sm:$0xf]
        %v5113 = vld [vmem:[%s3 + $0x18] sm:$0xf]
        %v5114 = vld [vmem:[%s3 + $0x1c] sm:$0xf]
        %v5115 = vld [vmem:[%s3 + $0x20] sm:$0xf]
        %v5116 = vld [vmem:[%s3 + $0x24] sm:$0xf]
        %v5117 = vld [vmem:[%s3 + $0x28] sm:$0xf]
        %v5118 = vld [vmem:[%s3 + $0x2c] sm:$0xf]
        %v5119 = vld [vmem:[%s3 + $0x30] sm:$0xf]
        %v5120 = vld [vmem:[%s3 + $0x34] sm:$0xf]
        %v5121 = vld [vmem:[%s3 + $0x38] sm:$0xf]
        %v5122 = vld [vmem:[%s3 + $0x3c] sm:$0xf]
        %v5139 = vunpack.c.l.b16 %v5107
        %v5140 = vunpack.c.l.b16 %v5108
        %v5141 = vunpack.c.l.b16 %v5109
        %v5142 = vunpack.c.l.b16 %v5110
        %v5143 = vunpack.c.l.b16 %v5111
        %v5144 = vunpack.c.l.b16 %v5112
        %v5145 = vunpack.c.l.b16 %v5113
        %v5146 = vunpack.c.l.b16 %v5114
        %v5147 = vunpack.c.l.b16 %v5115
        %v5148 = vunpack.c.l.b16 %v5116
        %v5149 = vunpack.c.l.b16 %v5117
        %v5150 = vunpack.c.l.b16 %v5118
        %v5151 = vunpack.c.l.b16 %v5119
        %v5152 = vunpack.c.l.b16 %v5120
        %v5153 = vunpack.c.l.b16 %v5121
        %v5154 = vunpack.c.l.b16 %v5122
        %v5155 = vpack.c.b16 %v5140, %v5139
        %v5156 = vpack.c.b16 %v5142, %v5141
        %v5157 = vpack.c.b16 %v5144, %v5143
        %v5158 = vpack.c.b16 %v5146, %v5145
        %v5159 = vpack.c.b16 %v5148, %v5147
        %v5160 = vpack.c.b16 %v5150, %v5149
        %v5161 = vpack.c.b16 %v5152, %v5151
        %v5162 = vpack.c.b16 %v5154, %v5153
        %5171 = vmatprep.subr.bf16.mxu0 0
        %5172 = vmatpush1.bf16.msra.mxu0 %v5162
        %5173 = vmatprep.subr.bf16.mxu0 0
        %5174 = vmatpush1.bf16.msra.mxu0 %v5161
        %5175 = vmatprep.subr.bf16.mxu0 0
        %5176 = vmatpush1.bf16.msra.mxu0 %v5160
        %5177 = vmatprep.subr.bf16.mxu0 0
        %5178 = vmatpush1.bf16.msra.mxu0 %v5159
        %5179 = vmatprep.subr.bf16.mxu0 0
        %5180 = vmatpush1.bf16.msra.mxu0 %v5158
        %5181 = vmatprep.subr.bf16.mxu0 0
        %5182 = vmatpush1.bf16.msra.mxu0 %v5157
        %5183 = vmatprep.subr.bf16.mxu0 0
        %5184 = vmatpush1.bf16.msra.mxu0 %v5156
        %5185 = vmatprep.subr.bf16.mxu0 0
        %5186 = vmatpush1.bf16.msra.mxu0 %v5155
        %5187 = vmatprep.subr.bf16.mxu0 0
        %5188 = vmatpush2.bf16.msra.mxu0 0
        %5189 = vmatprep.subr.bf16.mxu0 0
        %5190 = vmatpush2.bf16.msra.mxu0 0
        %5191 = vmatprep.subr.bf16.mxu0 0
        %5192 = vmatpush2.bf16.msra.mxu0 0
        %5193 = vmatprep.subr.bf16.mxu0 0
        %5194 = vmatpush2.bf16.msra.mxu0 0
        %5195 = vmatprep.subr.bf16.mxu0 0
        %5196 = vmatpush2.bf16.msra.mxu0 0
        %5197 = vmatprep.subr.bf16.mxu0 0
        %5198 = vmatpush2.bf16.msra.mxu0 0
        %5199 = vmatprep.subr.bf16.mxu0 0
        %5200 = vmatpush2.bf16.msra.mxu0 0
        %5201 = vmatprep.subr.bf16.mxu0 0
        %5202 = vmatpush2.bf16.msra.mxu0 0
        %5203 = vmatprep.mubr.bf16.mxu0 0
        %5204 = vmatmul.mubr.bf16.gmra.mxu0 %v5103
        %v5205 = vpop.f32.mrf.mxu0
        %v5206 = vadd.f32 0.0, %v5205
        %v5207 = vpop.f32.mrf.mxu0
        %v5208 = vpop.f32.mrf.mxu0
        %v5209 = vadd.f32 0.0, %v5208
        %v5210 = vpop.f32.mrf.mxu0
        %5211 = vmatprep.mubr.bf16.mxu0 0
        %5212 = vmatmul.mubr.bf16.gmra.mxu0 %v5104
        %v5213 = vpop.f32.mrf.mxu0
        %v5214 = vadd.f32 0.0, %v5213
        %v5215 = vpop.f32.mrf.mxu0
        %v5216 = vpop.f32.mrf.mxu0
        %v5217 = vadd.f32 0.0, %v5216
        %v5218 = vpop.f32.mrf.mxu0
        %5219 = vmatprep.mubr.bf16.mxu0 0
        %5220 = vmatmul.mubr.bf16.gmra.mxu0 %v5105
        %v5221 = vpop.f32.mrf.mxu0
        %v5222 = vadd.f32 0.0, %v5221
        %v5223 = vpop.f32.mrf.mxu0
        %v5224 = vpop.f32.mrf.mxu0
        %v5225 = vadd.f32 0.0, %v5224
        %v5226 = vpop.f32.mrf.mxu0
        %5227 = vmatprep.mubr.bf16.mxu0 0
        %5228 = vmatmul.mubr.bf16.gmra.mxu0 %v5106
        %v5229 = vpop.f32.mrf.mxu0
        %v5230 = vadd.f32 0.0, %v5229
        %v5231 = vpop.f32.mrf.mxu0
        %v5232 = vpop.f32.mrf.mxu0
        %v5233 = vadd.f32 0.0, %v5232
        %v5234 = vpop.f32.mrf.mxu0
        %5235 = vdwg.mxu0
        %v5236 = vadd.f32 %v5087, %v5206
        %v5237 = vadd.f32 %v5088, %v5209
        %v5238 = vadd.f32 %v5089, %v5214
        %v5239 = vadd.f32 %v5090, %v5217
        %v5240 = vadd.f32 %v5091, %v5222
        %v5241 = vadd.f32 %v5092, %v5225
        %v5242 = vadd.f32 %v5093, %v5230
        %v5243 = vadd.f32 %v5094, %v5233
        %v5244 = vmax.f32 %v5236, 0.0
        %v5245 = vmax.f32 %v5237, 0.0
        %v5246 = vmax.f32 %v5238, 0.0
        %v5247 = vmax.f32 %v5239, 0.0
        %v5248 = vmax.f32 %v5240, 0.0
        %v5249 = vmax.f32 %v5241, 0.0
        %v5250 = vmax.f32 %v5242, 0.0
        %v5251 = vmax.f32 %v5243, 0.0
        %v5252 = vmul.f32 %v5244, %v3690
        %v5253 = vmul.f32 %v5245, %v3695
        %v5254 = vmul.f32 %v5246, %v3700
        %v5255 = vmul.f32 %v5247, %v3705
        %v5256 = vmul.f32 %v5248, %v3710
        %v5257 = vmul.f32 %v5249, %v3715
        %v5258 = vmul.f32 %v5250, %v3720
        %v5259 = vmul.f32 %v5251, %v3725
        %5260 = vst [vmem:[%s327] sm:$0xff] 0.0
        %5261 = vst [vmem:[%s327 + $0x8] sm:$0xff] 0.0
        %5262 = vst [vmem:[%s327 + $0x10] sm:$0xff] 0.0
        %5263 = vst [vmem:[%s327 + $0x18] sm:$0xff] 0.0
        %5264 = vst [vmem:[%s327 + $0x20] sm:$0xff] 0.0
        %5265 = vst [vmem:[%s327 + $0x28] sm:$0xff] 0.0
        %5266 = vst [vmem:[%s327 + $0x30] sm:$0xff] 0.0
        %5267 = vst [vmem:[%s327 + $0x38] sm:$0xff] 0.0
        %5268 = vst [vmem:[%s327 + $0x40] sm:$0xff] 0.0
        %5269 = vst [vmem:[%s327 + $0x48] sm:$0xff] 0.0
        %5270 = vst [vmem:[%s327 + $0x50] sm:$0x1] 0.0
        %5271 = vst [vmem:[%s327 + $0xa] sm:$0xff] %v5252
        %5272 = vst [vmem:[%s327 + $0x12] sm:$0xff] %v5253
        %5273 = vst [vmem:[%s327 + $0x1a] sm:$0xff] %v5254
        %5274 = vst [vmem:[%s327 + $0x22] sm:$0xff] %v5255
        %5275 = vst [vmem:[%s327 + $0x2a] sm:$0xff] %v5256
        %5276 = vst [vmem:[%s327 + $0x32] sm:$0xff] %v5257
        %5277 = vst [vmem:[%s327 + $0x3a] sm:$0xff] %v5258
        %5278 = vst [vmem:[%s327 + $0x42] sm:$0x1f] %v5259
        %p5279 = scmp.lt.s32.totalorder %s22, 1
        %s5280 = scalar_select %p5279, %s22, 1
        %s5281 = smul.addr %s5280, 11
        %s5282 = smul.addr %s5281, 8
        %s5283 = scalar_lea.vmem %s7, %s5282
        // Predicated region
        $region61: #{tpu_custom_call.1} parent=47 // pred_check
          %p5284 = pneg %p192
        $region62: #{tpu_custom_call.1} parent=47 // pred_check_branch
          %5286 = sbr.rel (%p5284) target = $region64
        $region63: #{tpu_custom_call.1} parent=47 // pred_region
          _
        $region64: #{tpu_custom_call.1} parent=47 // pred_fallthru
          _
      $region48: #{tpu_custom_call.1} parent=5 // pred_fallthru
        _
      %p5287 = scmp.le.s32.totalorder 2, %s17
      // Predicated region
      $region65: #{tpu_custom_call.1} parent=5 // pred_check
        %p5288 = pneg %p5287
      $region66: #{tpu_custom_call.1} parent=5 // pred_check_branch
        %5290 = sbr.rel (%p5288) target = $region68
      $region67: #{tpu_custom_call.1} parent=5 // pred_region
        %s5291 = ssub.s32 %s17, 2
        // Predicated region
        $region69: #{tpu_custom_call.1} parent=67 // pred_check
          %p5292 = pneg %p198
        $region70: #{tpu_custom_call.1} parent=67 // pred_check_branch
          %5294 = sbr.rel (%p5292) target = $region72
        $region71: #{tpu_custom_call.1} parent=67 // pred_region
          %p5295 = scmp.lt.s32.totalorder %s23, 1
          %s5296 = scalar_select %p5295, %s23, 1
          %s5297 = smul.addr %s5296, 11
          %s5298 = smul.addr %s5297, 8
          %s5299 = scalar_lea.vmem %s7, %s5298
        $region72: #{tpu_custom_call.1} parent=67 // pred_fallthru
          _
      $region68: #{tpu_custom_call.1} parent=5 // pred_fallthru
        _
    $region6: #{tpu_custom_call.1} parent=1 // loop_footer
      %s21 = sadd.s32 1, %s17
    $region7: #{tpu_custom_call.1} parent=1 // loop_footer_branch
      %16 = sbr.rel target = $region3
    $region8: #{tpu_custom_call.1} parent=1 // loop_exit
      _
    %5300 = vsyncpa [#allocation5], 1
    %s5301 = scalar_lea.sflag [#allocation5], 1
    %5302 = vsyncpa %s5301, 1
    %5303 = vsyncpa [#allocation7], 1

</llo_original>
